<compile_context>
chip_gen: v7x
topology: tpu7x:2x2x1
jax: 0.10.0
libtpu: 0.0.40
codegen_flags: <defaults>
</compile_context>

<pallas_src>
import functools

import jax
import jax.numpy as jnp
from jax.experimental import pallas as pl
from jax.experimental.pallas import tpu as pltpu


def _round_up(n, m):
    return ((n + m - 1) // m) * m


# --------------------------- fused forward kernel ---------------------------

def _fused_forward_kernel(x8_ref, w1_ref, b1_ref, w2_ref, b2_ref,
                          wf1_ref, bf1_ref, wf2_ref, bf2_ref,
                          out_ref, *, n_valid):
    i = pl.program_id(0)
    bt = x8_ref.shape[2]          # batch-tile rows (multiple of 8)

    # ---- conv1 (1->10, k=5) + 2x2 maxpool + bias + ReLU --------------------
    # x8_ref[r, m, b, w] = x[b, 4*m + r, w]; conv row window -> leading index,
    # conv col window + pooling column parity -> banded weights.  w1_ref[kh]
    # is (28, 256): lanes [0:128) = even-column band, [128:256) = odd band
    # (120 valid lanes each, layout j*10+co, zero-padded to 128).
    p1 = []   # p1[a]: (6, bt, 128); p1[a][m, b, j*10+c] = pooled map[b, c, 2m+a, j]
    for a in (0, 1):
        best = None
        for dh in (0, 1):                       # pool row offset
            acc = None
            for kh in range(5):
                slab = x8_ref[2 * a + dh + kh].reshape(6 * bt, 28)
                d = jnp.dot(slab, w1_ref[kh], preferred_element_type=jnp.float32)
                acc = d if acc is None else acc + d
            cur = jnp.maximum(acc[:, :128], acc[:, 128:])   # max over pool col
            best = cur if best is None else jnp.maximum(best, cur)
        p1.append(jnp.maximum(best + b1_ref[...], 0.0).reshape(6, bt, 128))

    # ---- conv2 (10->20, k=5) + 2x2 maxpool + bias + ReLU -------------------
    # TODO(synk): Dropout2d training-mode randomness not reproduced (eval/identity).
    # w2_ref[kh] is (128, 256): rows j*10+c (120 valid), lanes [0:128) even /
    # [128:256) odd column band (80 valid lanes each, layout v*20+o).
    best2 = None
    for eh in (0, 1):                           # pool row offset
        acc = None
        for kh in range(5):
            q = eh + kh
            slab = p1[q % 2][q // 2: q // 2 + 4].reshape(4 * bt, 128)
            d = jnp.dot(slab, w2_ref[kh], preferred_element_type=jnp.float32)
            acc = d if acc is None else acc + d
        cur = jnp.maximum(acc[:, :128], acc[:, 128:])       # max over pool col
        best2 = cur if best2 is None else jnp.maximum(best2, cur)
    p2 = jnp.maximum(best2 + b2_ref[...], 0.0)
    p2 = p2.reshape(4, bt, 128)   # p2[u, b, v*20+o] = pooled map[b, o, u, v]

    # ---- fc1 (320->50, padded to 128 lanes) + ReLU (NCHW flatten folded) ---
    h = jnp.dot(p2[0], wf1_ref[0], preferred_element_type=jnp.float32)
    for u in range(1, 4):
        h = h + jnp.dot(p2[u], wf1_ref[u], preferred_element_type=jnp.float32)
    h = jnp.maximum(h + bf1_ref[...], 0.0)
    # TODO(synk): F.dropout(training=True) omitted -- inference-mode identity.

    # ---- fc2 (50->10, padded to 128 lanes for a dense, unmasked store) -----
    logits = jnp.dot(h, wf2_ref[...], preferred_element_type=jnp.float32) + bf2_ref[...]

    row0 = pl.multiple_of(i * bt, 8)
    out_ref[pl.ds(row0, bt), :] = logits

    # ---- log_softmax over dim 0 (batch axis), finalized on the last step ---
    # The output block is VMEM-resident across the (sequential) batch-tile
    # grid, so all tiles' logits are available here.  Padded rows are masked.
    @pl.when(i == pl.num_programs(0) - 1)
    def _():
        lg = out_ref[...]
        valid = jax.lax.broadcasted_iota(jnp.int32, lg.shape, 0) < n_valid
        m = jnp.max(jnp.where(valid, lg, -jnp.inf), axis=0, keepdims=True)
        e = jnp.where(valid, jnp.exp(lg - m), 0.0)
        lse = m + jnp.log(jnp.sum(e, axis=0, keepdims=True))
        out_ref[...] = lg - lse


# --------------------------- host-side weight prep --------------------------

def _conv1_banded(w1):
    # band[kh, iw, j*10+co] = w1[co, 0, kh, iw - (2j+parity)] when 0 <= . < 5
    def band(parity):
        iw = jnp.arange(28)[:, None]
        j = jnp.arange(12)[None, :]
        kw = iw - (2 * j + parity)
        valid = (kw >= 0) & (kw < 5)
        kw_c = jnp.clip(kw, 0, 4)
        w = jnp.transpose(w1[:, 0], (1, 2, 0))        # (5,5,10)  [kh, kw, co]
        vals = w[:, kw_c, :]                          # (5,28,12,10)
        vals = jnp.where(valid[None, :, :, None], vals, 0.0)
        return jnp.pad(vals.reshape(5, 28, 120), ((0, 0), (0, 0), (0, 8)))
    return jnp.concatenate([band(0), band(1)], axis=-1)      # (5, 28, 256)


def _conv2_banded(w2):
    # band[kh, j*10+c, v*20+o] = w2[o, c, kh, j - (2v+parity)] when 0 <= . < 5
    def band(parity):
        j = jnp.arange(12)[:, None]
        v = jnp.arange(4)[None, :]
        kw = j - (2 * v + parity)
        valid = (kw >= 0) & (kw < 5)
        kw_c = jnp.clip(kw, 0, 4)
        w = jnp.transpose(w2, (2, 3, 1, 0))           # (5,5,10,20) [kh, kw, c, o]
        vals = w[:, kw_c]                             # (5,12,4,10,20)
        vals = jnp.where(valid[None, :, :, None, None], vals, 0.0)
        vals = jnp.transpose(vals, (0, 1, 3, 2, 4))   # (5,12,10,4,20)
        return jnp.pad(vals.reshape(5, 120, 80), ((0, 0), (0, 8), (0, 48)))
    return jnp.concatenate([band(0), band(1)], axis=-1)      # (5, 128, 256)


# --------------------------------- forward ----------------------------------

def forward(params, x):
    n = x.shape[0]
    bt = _round_up(min(n, 256), 8)                # batch tile (sublane aligned)
    npad = _round_up(n, bt)

    # Host-side prep (tiny, fused by XLA): row space-to-depth of the input and
    # repacking of the weights into banded / block form.  No im2col in HBM.
    x2 = x[:, 0, :, :]
    if npad > n:
        x2 = jnp.pad(x2, ((0, npad - n), (0, 0), (0, 0)))
    x8 = jnp.stack([x2[:, r::4, :][:, :6, :] for r in range(8)], axis=0)
    x8 = jnp.transpose(x8, (0, 2, 1, 3))          # (8, 6, npad, 28)

    w1 = _conv1_banded(params["conv1_w"])
    b1 = jnp.pad(jnp.tile(params["conv1_b"], 12), (0, 8)).reshape(1, 128)
    w2 = _conv2_banded(params["conv2_w"])
    b2 = jnp.pad(jnp.tile(params["conv2_b"], 4), (0, 48)).reshape(1, 128)
    wf1 = jnp.transpose(params["fc1_w"].reshape(50, 20, 4, 4),
                        (2, 3, 1, 0)).reshape(4, 80, 50)
    wf1 = jnp.pad(wf1, ((0, 0), (0, 48), (0, 78)))            # (4, 128, 128)
    bf1 = jnp.pad(params["fc1_b"].reshape(1, 50), ((0, 0), (0, 78)))
    wf2 = jnp.zeros((128, 128), jnp.float32).at[:50, :10].set(params["fc2_w"].T)
    bf2 = jnp.zeros((1, 128), jnp.float32).at[:, :10].set(params["fc2_b"][None, :])

    out = pl.pallas_call(
        functools.partial(_fused_forward_kernel, n_valid=n),
        out_shape=jax.ShapeDtypeStruct((npad, 128), jnp.float32),
        grid=(npad // bt,),
        in_specs=[
            pl.BlockSpec((8, 6, bt, 28), lambda i: (0, 0, i, 0)),
            pl.BlockSpec((5, 28, 256), lambda i: (0, 0, 0)),
            pl.BlockSpec((1, 128), lambda i: (0, 0)),
            pl.BlockSpec((5, 128, 256), lambda i: (0, 0, 0)),
            pl.BlockSpec((1, 128), lambda i: (0, 0)),
            pl.BlockSpec((4, 128, 128), lambda i: (0, 0, 0)),
            pl.BlockSpec((1, 128), lambda i: (0, 0)),
            pl.BlockSpec((128, 128), lambda i: (0, 0)),
            pl.BlockSpec((1, 128), lambda i: (0, 0)),
        ],
        out_specs=pl.BlockSpec((npad, 128), lambda i: (0, 0)),
        # Sequential: logits of all batch tiles accumulate in the resident
        # output block before the dim-0 softmax on the final step.
        compiler_params=pltpu.CompilerParams(
            dimension_semantics=("arbitrary",)),
    )(x8, w1, b1, w2, b2, wf1, bf1, wf2, bf2)

    return out[:n, :10]


# ------------------------------- parameters ---------------------------------

def init_params(key):
    def uniform(k, shape, fan_in):
        bound = 1.0 / jnp.sqrt(jnp.float32(fan_in))
        return jax.random.uniform(k, shape, jnp.float32, -bound, bound)

    ks = jax.random.split(key, 8)
    return {
        "conv1_w": uniform(ks[0], (10, 1, 5, 5), 1 * 5 * 5),
        "conv1_b": uniform(ks[1], (10,), 1 * 5 * 5),
        "conv2_w": uniform(ks[2], (20, 10, 5, 5), 10 * 5 * 5),
        "conv2_b": uniform(ks[3], (20,), 10 * 5 * 5),
        "fc1_w": uniform(ks[4], (50, 320), 320),
        "fc1_b": uniform(ks[5], (50,), 320),
        "fc2_w": uniform(ks[6], (10, 50), 50),
        "fc2_b": uniform(ks[7], (10,), 50),
    }


# ----------------------------------- main ------------------------------------

if __name__ == "__main__":
    key = jax.random.PRNGKey(0)
    pkey, xkey = jax.random.split(key)
    params = init_params(pkey)
    # Input must be (N, 1, 28, 28) for the 320-wide flatten of the reference.
    x = jax.random.normal(xkey, (2, 1, 28, 28), dtype=jnp.float32)

    out = jax.jit(forward)(params, x)
    out = jax.block_until_ready(out)
    assert out.shape == (2, 10)
    print("KERNEL_OK")
</pallas_src>

<mosaic_0001>
module attributes {stable_mosaic.version = 11 : i64} {
  func.func @_fused_forward_kernel(%arg0: i32, %arg1: memref<8x6x8x28xf32, #tpu.memory_space<vmem>>, %arg2: memref<5x28x256xf32, #tpu.memory_space<vmem>>, %arg3: memref<1x128xf32, #tpu.memory_space<vmem>>, %arg4: memref<5x128x256xf32, #tpu.memory_space<vmem>>, %arg5: memref<1x128xf32, #tpu.memory_space<vmem>>, %arg6: memref<4x128x128xf32, #tpu.memory_space<vmem>>, %arg7: memref<1x128xf32, #tpu.memory_space<vmem>>, %arg8: memref<128x128xf32, #tpu.memory_space<vmem>>, %arg9: memref<1x128xf32, #tpu.memory_space<vmem>>, %arg10: memref<8x128xf32, #tpu.memory_space<vmem>>) attributes {dimension_semantics = [#tpu.dimension_semantics<arbitrary>], iteration_bounds = array<i64: 1>, scalar_prefetch = 0 : i64, scratch_operands = 0 : i64, tpu.core_type = #tpu.core_type<tc>, window_params = [{transform_indices = @transform_0, window_bounds = array<i64: 8, 6, 8, 28>}, {pipeline_mode = #tpu.pipeline_mode<synchronous>, transform_indices = @transform_1, window_bounds = array<i64: 5, 28, 256>}, {pipeline_mode = #tpu.pipeline_mode<synchronous>, transform_indices = @transform_2, window_bounds = array<i64: 1, 128>}, {pipeline_mode = #tpu.pipeline_mode<synchronous>, transform_indices = @transform_3, window_bounds = array<i64: 5, 128, 256>}, {pipeline_mode = #tpu.pipeline_mode<synchronous>, transform_indices = @transform_4, window_bounds = array<i64: 1, 128>}, {pipeline_mode = #tpu.pipeline_mode<synchronous>, transform_indices = @transform_5, window_bounds = array<i64: 4, 128, 128>}, {pipeline_mode = #tpu.pipeline_mode<synchronous>, transform_indices = @transform_6, window_bounds = array<i64: 1, 128>}, {pipeline_mode = #tpu.pipeline_mode<synchronous>, transform_indices = @transform_7, window_bounds = array<i64: 128, 128>}, {pipeline_mode = #tpu.pipeline_mode<synchronous>, transform_indices = @transform_8, window_bounds = array<i64: 1, 128>}, {pipeline_mode = #tpu.pipeline_mode<synchronous>, transform_indices = @transform_9, window_bounds = array<i64: 8, 128>}]} {
    %c0 = arith.constant 0 : index
    %c0_0 = arith.constant 0 : index
    %c0_1 = arith.constant 0 : index
    %c0_2 = arith.constant 0 : index
    %0 = vector.load %arg1[%c0, %c0_0, %c0_1, %c0_2] : memref<8x6x8x28xf32, #tpu.memory_space<vmem>>, vector<1x6x8x28xf32>
    %1 = vector.shape_cast %0 : vector<1x6x8x28xf32> to vector<6x8x28xf32>
    %2 = vector.shape_cast %1 : vector<6x8x28xf32> to vector<48x28xf32>
    %c0_3 = arith.constant 0 : index
    %c0_4 = arith.constant 0 : index
    %c0_5 = arith.constant 0 : index
    %3 = vector.load %arg2[%c0_3, %c0_4, %c0_5] : memref<5x28x256xf32, #tpu.memory_space<vmem>>, vector<1x28x256xf32>
    %4 = vector.shape_cast %3 : vector<1x28x256xf32> to vector<28x256xf32>
    %cst = arith.constant dense<0.000000e+00> : vector<48x256xf32>
    %5 = tpu.matmul %2, %4, %cst {dimension_numbers = #tpu.dot_dimension_numbers<[1], [0], [0], [1], [0, 0, 1, 1], [], []>} : vector<48x28xf32>, vector<28x256xf32>, vector<48x256xf32> -> vector<48x256xf32>
    %c1 = arith.constant 1 : index
    %c0_6 = arith.constant 0 : index
    %c0_7 = arith.constant 0 : index
    %c0_8 = arith.constant 0 : index
    %6 = vector.load %arg1[%c1, %c0_6, %c0_7, %c0_8] : memref<8x6x8x28xf32, #tpu.memory_space<vmem>>, vector<1x6x8x28xf32>
    %7 = vector.shape_cast %6 : vector<1x6x8x28xf32> to vector<6x8x28xf32>
    %8 = vector.shape_cast %7 : vector<6x8x28xf32> to vector<48x28xf32>
    %c1_9 = arith.constant 1 : index
    %c0_10 = arith.constant 0 : index
    %c0_11 = arith.constant 0 : index
    %9 = vector.load %arg2[%c1_9, %c0_10, %c0_11] : memref<5x28x256xf32, #tpu.memory_space<vmem>>, vector<1x28x256xf32>
    %10 = vector.shape_cast %9 : vector<1x28x256xf32> to vector<28x256xf32>
    %cst_12 = arith.constant dense<0.000000e+00> : vector<48x256xf32>
    %11 = tpu.matmul %8, %10, %cst_12 {dimension_numbers = #tpu.dot_dimension_numbers<[1], [0], [0], [1], [0, 0, 1, 1], [], []>} : vector<48x28xf32>, vector<28x256xf32>, vector<48x256xf32> -> vector<48x256xf32>
    %12 = arith.addf %5, %11 : vector<48x256xf32>
    %c2 = arith.constant 2 : index
    %c0_13 = arith.constant 0 : index
    %c0_14 = arith.constant 0 : index
    %c0_15 = arith.constant 0 : index
    %13 = vector.load %arg1[%c2, %c0_13, %c0_14, %c0_15] : memref<8x6x8x28xf32, #tpu.memory_space<vmem>>, vector<1x6x8x28xf32>
    %14 = vector.shape_cast %13 : vector<1x6x8x28xf32> to vector<6x8x28xf32>
    %15 = vector.shape_cast %14 : vector<6x8x28xf32> to vector<48x28xf32>
    %c2_16 = arith.constant 2 : index
    %c0_17 = arith.constant 0 : index
    %c0_18 = arith.constant 0 : index
    %16 = vector.load %arg2[%c2_16, %c0_17, %c0_18] : memref<5x28x256xf32, #tpu.memory_space<vmem>>, vector<1x28x256xf32>
    %17 = vector.shape_cast %16 : vector<1x28x256xf32> to vector<28x256xf32>
    %cst_19 = arith.constant dense<0.000000e+00> : vector<48x256xf32>
    %18 = tpu.matmul %15, %17, %cst_19 {dimension_numbers = #tpu.dot_dimension_numbers<[1], [0], [0], [1], [0, 0, 1, 1], [], []>} : vector<48x28xf32>, vector<28x256xf32>, vector<48x256xf32> -> vector<48x256xf32>
    %19 = arith.addf %12, %18 : vector<48x256xf32>
    %c3 = arith.constant 3 : index
    %c0_20 = arith.constant 0 : index
    %c0_21 = arith.constant 0 : index
    %c0_22 = arith.constant 0 : index
    %20 = vector.load %arg1[%c3, %c0_20, %c0_21, %c0_22] : memref<8x6x8x28xf32, #tpu.memory_space<vmem>>, vector<1x6x8x28xf32>
    %21 = vector.shape_cast %20 : vector<1x6x8x28xf32> to vector<6x8x28xf32>
    %22 = vector.shape_cast %21 : vector<6x8x28xf32> to vector<48x28xf32>
    %c3_23 = arith.constant 3 : index
    %c0_24 = arith.constant 0 : index
    %c0_25 = arith.constant 0 : index
    %23 = vector.load %arg2[%c3_23, %c0_24, %c0_25] : memref<5x28x256xf32, #tpu.memory_space<vmem>>, vector<1x28x256xf32>
    %24 = vector.shape_cast %23 : vector<1x28x256xf32> to vector<28x256xf32>
    %cst_26 = arith.constant dense<0.000000e+00> : vector<48x256xf32>
    %25 = tpu.matmul %22, %24, %cst_26 {dimension_numbers = #tpu.dot_dimension_numbers<[1], [0], [0], [1], [0, 0, 1, 1], [], []>} : vector<48x28xf32>, vector<28x256xf32>, vector<48x256xf32> -> vector<48x256xf32>
    %26 = arith.addf %19, %25 : vector<48x256xf32>
    %c4 = arith.constant 4 : index
    %c0_27 = arith.constant 0 : index
    %c0_28 = arith.constant 0 : index
    %c0_29 = arith.constant 0 : index
    %27 = vector.load %arg1[%c4, %c0_27, %c0_28, %c0_29] : memref<8x6x8x28xf32, #tpu.memory_space<vmem>>, vector<1x6x8x28xf32>
    %28 = vector.shape_cast %27 : vector<1x6x8x28xf32> to vector<6x8x28xf32>
    %29 = vector.shape_cast %28 : vector<6x8x28xf32> to vector<48x28xf32>
    %c4_30 = arith.constant 4 : index
    %c0_31 = arith.constant 0 : index
    %c0_32 = arith.constant 0 : index
    %30 = vector.load %arg2[%c4_30, %c0_31, %c0_32] : memref<5x28x256xf32, #tpu.memory_space<vmem>>, vector<1x28x256xf32>
    %31 = vector.shape_cast %30 : vector<1x28x256xf32> to vector<28x256xf32>
    %cst_33 = arith.constant dense<0.000000e+00> : vector<48x256xf32>
    %32 = tpu.matmul %29, %31, %cst_33 {dimension_numbers = #tpu.dot_dimension_numbers<[1], [0], [0], [1], [0, 0, 1, 1], [], []>} : vector<48x28xf32>, vector<28x256xf32>, vector<48x256xf32> -> vector<48x256xf32>
    %33 = arith.addf %26, %32 : vector<48x256xf32>
    %34 = vector.extract_strided_slice %33 {offsets = [0, 0], sizes = [48, 128], strides = [1, 1]} : vector<48x256xf32> to vector<48x128xf32>
    %35 = vector.extract_strided_slice %33 {offsets = [0, 128], sizes = [48, 128], strides = [1, 1]} : vector<48x256xf32> to vector<48x128xf32>
    %36 = arith.maximumf %34, %35 : vector<48x128xf32>
    %c1_34 = arith.constant 1 : index
    %c0_35 = arith.constant 0 : index
    %c0_36 = arith.constant 0 : index
    %c0_37 = arith.constant 0 : index
    %37 = vector.load %arg1[%c1_34, %c0_35, %c0_36, %c0_37] : memref<8x6x8x28xf32, #tpu.memory_space<vmem>>, vector<1x6x8x28xf32>
    %38 = vector.shape_cast %37 : vector<1x6x8x28xf32> to vector<6x8x28xf32>
    %39 = vector.shape_cast %38 : vector<6x8x28xf32> to vector<48x28xf32>
    %c0_38 = arith.constant 0 : index
    %c0_39 = arith.constant 0 : index
    %c0_40 = arith.constant 0 : index
    %40 = vector.load %arg2[%c0_38, %c0_39, %c0_40] : memref<5x28x256xf32, #tpu.memory_space<vmem>>, vector<1x28x256xf32>
    %41 = vector.shape_cast %40 : vector<1x28x256xf32> to vector<28x256xf32>
    %cst_41 = arith.constant dense<0.000000e+00> : vector<48x256xf32>
    %42 = tpu.matmul %39, %41, %cst_41 {dimension_numbers = #tpu.dot_dimension_numbers<[1], [0], [0], [1], [0, 0, 1, 1], [], []>} : vector<48x28xf32>, vector<28x256xf32>, vector<48x256xf32> -> vector<48x256xf32>
    %c2_42 = arith.constant 2 : index
    %c0_43 = arith.constant 0 : index
    %c0_44 = arith.constant 0 : index
    %c0_45 = arith.constant 0 : index
    %43 = vector.load %arg1[%c2_42, %c0_43, %c0_44, %c0_45] : memref<8x6x8x28xf32, #tpu.memory_space<vmem>>, vector<1x6x8x28xf32>
    %44 = vector.shape_cast %43 : vector<1x6x8x28xf32> to vector<6x8x28xf32>
    %45 = vector.shape_cast %44 : vector<6x8x28xf32> to vector<48x28xf32>
    %c1_46 = arith.constant 1 : index
    %c0_47 = arith.constant 0 : index
    %c0_48 = arith.constant 0 : index
    %46 = vector.load %arg2[%c1_46, %c0_47, %c0_48] : memref<5x28x256xf32, #tpu.memory_space<vmem>>, vector<1x28x256xf32>
    %47 = vector.shape_cast %46 : vector<1x28x256xf32> to vector<28x256xf32>
    %cst_49 = arith.constant dense<0.000000e+00> : vector<48x256xf32>
    %48 = tpu.matmul %45, %47, %cst_49 {dimension_numbers = #tpu.dot_dimension_numbers<[1], [0], [0], [1], [0, 0, 1, 1], [], []>} : vector<48x28xf32>, vector<28x256xf32>, vector<48x256xf32> -> vector<48x256xf32>
    %49 = arith.addf %42, %48 : vector<48x256xf32>
    %c3_50 = arith.constant 3 : index
    %c0_51 = arith.constant 0 : index
    %c0_52 = arith.constant 0 : index
    %c0_53 = arith.constant 0 : index
    %50 = vector.load %arg1[%c3_50, %c0_51, %c0_52, %c0_53] : memref<8x6x8x28xf32, #tpu.memory_space<vmem>>, vector<1x6x8x28xf32>
    %51 = vector.shape_cast %50 : vector<1x6x8x28xf32> to vector<6x8x28xf32>
    %52 = vector.shape_cast %51 : vector<6x8x28xf32> to vector<48x28xf32>
    %c2_54 = arith.constant 2 : index
    %c0_55 = arith.constant 0 : index
    %c0_56 = arith.constant 0 : index
    %53 = vector.load %arg2[%c2_54, %c0_55, %c0_56] : memref<5x28x256xf32, #tpu.memory_space<vmem>>, vector<1x28x256xf32>
    %54 = vector.shape_cast %53 : vector<1x28x256xf32> to vector<28x256xf32>
    %cst_57 = arith.constant dense<0.000000e+00> : vector<48x256xf32>
    %55 = tpu.matmul %52, %54, %cst_57 {dimension_numbers = #tpu.dot_dimension_numbers<[1], [0], [0], [1], [0, 0, 1, 1], [], []>} : vector<48x28xf32>, vector<28x256xf32>, vector<48x256xf32> -> vector<48x256xf32>
    %56 = arith.addf %49, %55 : vector<48x256xf32>
    %c4_58 = arith.constant 4 : index
    %c0_59 = arith.constant 0 : index
    %c0_60 = arith.constant 0 : index
    %c0_61 = arith.constant 0 : index
    %57 = vector.load %arg1[%c4_58, %c0_59, %c0_60, %c0_61] : memref<8x6x8x28xf32, #tpu.memory_space<vmem>>, vector<1x6x8x28xf32>
    %58 = vector.shape_cast %57 : vector<1x6x8x28xf32> to vector<6x8x28xf32>
    %59 = vector.shape_cast %58 : vector<6x8x28xf32> to vector<48x28xf32>
    %c3_62 = arith.constant 3 : index
    %c0_63 = arith.constant 0 : index
    %c0_64 = arith.constant 0 : index
    %60 = vector.load %arg2[%c3_62, %c0_63, %c0_64] : memref<5x28x256xf32, #tpu.memory_space<vmem>>, vector<1x28x256xf32>
    %61 = vector.shape_cast %60 : vector<1x28x256xf32> to vector<28x256xf32>
    %cst_65 = arith.constant dense<0.000000e+00> : vector<48x256xf32>
    %62 = tpu.matmul %59, %61, %cst_65 {dimension_numbers = #tpu.dot_dimension_numbers<[1], [0], [0], [1], [0, 0, 1, 1], [], []>} : vector<48x28xf32>, vector<28x256xf32>, vector<48x256xf32> -> vector<48x256xf32>
    %63 = arith.addf %56, %62 : vector<48x256xf32>
    %c5 = arith.constant 5 : index
    %c0_66 = arith.constant 0 : index
    %c0_67 = arith.constant 0 : index
    %c0_68 = arith.constant 0 : index
    %64 = vector.load %arg1[%c5, %c0_66, %c0_67, %c0_68] : memref<8x6x8x28xf32, #tpu.memory_space<vmem>>, vector<1x6x8x28xf32>
    %65 = vector.shape_cast %64 : vector<1x6x8x28xf32> to vector<6x8x28xf32>
    %66 = vector.shape_cast %65 : vector<6x8x28xf32> to vector<48x28xf32>
    %c4_69 = arith.constant 4 : index
    %c0_70 = arith.constant 0 : index
    %c0_71 = arith.constant 0 : index
    %67 = vector.load %arg2[%c4_69, %c0_70, %c0_71] : memref<5x28x256xf32, #tpu.memory_space<vmem>>, vector<1x28x256xf32>
    %68 = vector.shape_cast %67 : vector<1x28x256xf32> to vector<28x256xf32>
    %cst_72 = arith.constant dense<0.000000e+00> : vector<48x256xf32>
    %69 = tpu.matmul %66, %68, %cst_72 {dimension_numbers = #tpu.dot_dimension_numbers<[1], [0], [0], [1], [0, 0, 1, 1], [], []>} : vector<48x28xf32>, vector<28x256xf32>, vector<48x256xf32> -> vector<48x256xf32>
    %70 = arith.addf %63, %69 : vector<48x256xf32>
    %71 = vector.extract_strided_slice %70 {offsets = [0, 0], sizes = [48, 128], strides = [1, 1]} : vector<48x256xf32> to vector<48x128xf32>
    %72 = vector.extract_strided_slice %70 {offsets = [0, 128], sizes = [48, 128], strides = [1, 1]} : vector<48x256xf32> to vector<48x128xf32>
    %73 = arith.maximumf %71, %72 : vector<48x128xf32>
    %74 = arith.maximumf %36, %73 : vector<48x128xf32>
    %c0_73 = arith.constant 0 : index
    %c0_74 = arith.constant 0 : index
    %75 = vector.load %arg3[%c0_73, %c0_74] : memref<1x128xf32, #tpu.memory_space<vmem>>, vector<1x128xf32>
    %76 = vector.broadcast %75 : vector<1x128xf32> to vector<48x128xf32>
    %77 = arith.addf %74, %76 : vector<48x128xf32>
    %cst_75 = arith.constant 0.000000e+00 : f32
    %78 = vector.broadcast %cst_75 : f32 to vector<48x128xf32>
    %79 = arith.maximumf %77, %78 : vector<48x128xf32>
    %80 = vector.shape_cast %79 : vector<48x128xf32> to vector<6x8x128xf32>
    %c2_76 = arith.constant 2 : index
    %c0_77 = arith.constant 0 : index
    %c0_78 = arith.constant 0 : index
    %c0_79 = arith.constant 0 : index
    %81 = vector.load %arg1[%c2_76, %c0_77, %c0_78, %c0_79] : memref<8x6x8x28xf32, #tpu.memory_space<vmem>>, vector<1x6x8x28xf32>
    %82 = vector.shape_cast %81 : vector<1x6x8x28xf32> to vector<6x8x28xf32>
    %83 = vector.shape_cast %82 : vector<6x8x28xf32> to vector<48x28xf32>
    %c0_80 = arith.constant 0 : index
    %c0_81 = arith.constant 0 : index
    %c0_82 = arith.constant 0 : index
    %84 = vector.load %arg2[%c0_80, %c0_81, %c0_82] : memref<5x28x256xf32, #tpu.memory_space<vmem>>, vector<1x28x256xf32>
    %85 = vector.shape_cast %84 : vector<1x28x256xf32> to vector<28x256xf32>
    %cst_83 = arith.constant dense<0.000000e+00> : vector<48x256xf32>
    %86 = tpu.matmul %83, %85, %cst_83 {dimension_numbers = #tpu.dot_dimension_numbers<[1], [0], [0], [1], [0, 0, 1, 1], [], []>} : vector<48x28xf32>, vector<28x256xf32>, vector<48x256xf32> -> vector<48x256xf32>
    %c3_84 = arith.constant 3 : index
    %c0_85 = arith.constant 0 : index
    %c0_86 = arith.constant 0 : index
    %c0_87 = arith.constant 0 : index
    %87 = vector.load %arg1[%c3_84, %c0_85, %c0_86, %c0_87] : memref<8x6x8x28xf32, #tpu.memory_space<vmem>>, vector<1x6x8x28xf32>
    %88 = vector.shape_cast %87 : vector<1x6x8x28xf32> to vector<6x8x28xf32>
    %89 = vector.shape_cast %88 : vector<6x8x28xf32> to vector<48x28xf32>
    %c1_88 = arith.constant 1 : index
    %c0_89 = arith.constant 0 : index
    %c0_90 = arith.constant 0 : index
    %90 = vector.load %arg2[%c1_88, %c0_89, %c0_90] : memref<5x28x256xf32, #tpu.memory_space<vmem>>, vector<1x28x256xf32>
    %91 = vector.shape_cast %90 : vector<1x28x256xf32> to vector<28x256xf32>
    %cst_91 = arith.constant dense<0.000000e+00> : vector<48x256xf32>
    %92 = tpu.matmul %89, %91, %cst_91 {dimension_numbers = #tpu.dot_dimension_numbers<[1], [0], [0], [1], [0, 0, 1, 1], [], []>} : vector<48x28xf32>, vector<28x256xf32>, vector<48x256xf32> -> vector<48x256xf32>
    %93 = arith.addf %86, %92 : vector<48x256xf32>
    %c4_92 = arith.constant 4 : index
    %c0_93 = arith.constant 0 : index
    %c0_94 = arith.constant 0 : index
    %c0_95 = arith.constant 0 : index
    %94 = vector.load %arg1[%c4_92, %c0_93, %c0_94, %c0_95] : memref<8x6x8x28xf32, #tpu.memory_space<vmem>>, vector<1x6x8x28xf32>
    %95 = vector.shape_cast %94 : vector<1x6x8x28xf32> to vector<6x8x28xf32>
    %96 = vector.shape_cast %95 : vector<6x8x28xf32> to vector<48x28xf32>
    %c2_96 = arith.constant 2 : index
    %c0_97 = arith.constant 0 : index
    %c0_98 = arith.constant 0 : index
    %97 = vector.load %arg2[%c2_96, %c0_97, %c0_98] : memref<5x28x256xf32, #tpu.memory_space<vmem>>, vector<1x28x256xf32>
    %98 = vector.shape_cast %97 : vector<1x28x256xf32> to vector<28x256xf32>
    %cst_99 = arith.constant dense<0.000000e+00> : vector<48x256xf32>
    %99 = tpu.matmul %96, %98, %cst_99 {dimension_numbers = #tpu.dot_dimension_numbers<[1], [0], [0], [1], [0, 0, 1, 1], [], []>} : vector<48x28xf32>, vector<28x256xf32>, vector<48x256xf32> -> vector<48x256xf32>
    %100 = arith.addf %93, %99 : vector<48x256xf32>
    %c5_100 = arith.constant 5 : index
    %c0_101 = arith.constant 0 : index
    %c0_102 = arith.constant 0 : index
    %c0_103 = arith.constant 0 : index
    %101 = vector.load %arg1[%c5_100, %c0_101, %c0_102, %c0_103] : memref<8x6x8x28xf32, #tpu.memory_space<vmem>>, vector<1x6x8x28xf32>
    %102 = vector.shape_cast %101 : vector<1x6x8x28xf32> to vector<6x8x28xf32>
    %103 = vector.shape_cast %102 : vector<6x8x28xf32> to vector<48x28xf32>
    %c3_104 = arith.constant 3 : index
    %c0_105 = arith.constant 0 : index
    %c0_106 = arith.constant 0 : index
    %104 = vector.load %arg2[%c3_104, %c0_105, %c0_106] : memref<5x28x256xf32, #tpu.memory_space<vmem>>, vector<1x28x256xf32>
    %105 = vector.shape_cast %104 : vector<1x28x256xf32> to vector<28x256xf32>
    %cst_107 = arith.constant dense<0.000000e+00> : vector<48x256xf32>
    %106 = tpu.matmul %103, %105, %cst_107 {dimension_numbers = #tpu.dot_dimension_numbers<[1], [0], [0], [1], [0, 0, 1, 1], [], []>} : vector<48x28xf32>, vector<28x256xf32>, vector<48x256xf32> -> vector<48x256xf32>
    %107 = arith.addf %100, %106 : vector<48x256xf32>
    %c6 = arith.constant 6 : index
    %c0_108 = arith.constant 0 : index
    %c0_109 = arith.constant 0 : index
    %c0_110 = arith.constant 0 : index
    %108 = vector.load %arg1[%c6, %c0_108, %c0_109, %c0_110] : memref<8x6x8x28xf32, #tpu.memory_space<vmem>>, vector<1x6x8x28xf32>
    %109 = vector.shape_cast %108 : vector<1x6x8x28xf32> to vector<6x8x28xf32>
    %110 = vector.shape_cast %109 : vector<6x8x28xf32> to vector<48x28xf32>
    %c4_111 = arith.constant 4 : index
    %c0_112 = arith.constant 0 : index
    %c0_113 = arith.constant 0 : index
    %111 = vector.load %arg2[%c4_111, %c0_112, %c0_113] : memref<5x28x256xf32, #tpu.memory_space<vmem>>, vector<1x28x256xf32>
    %112 = vector.shape_cast %111 : vector<1x28x256xf32> to vector<28x256xf32>
    %cst_114 = arith.constant dense<0.000000e+00> : vector<48x256xf32>
    %113 = tpu.matmul %110, %112, %cst_114 {dimension_numbers = #tpu.dot_dimension_numbers<[1], [0], [0], [1], [0, 0, 1, 1], [], []>} : vector<48x28xf32>, vector<28x256xf32>, vector<48x256xf32> -> vector<48x256xf32>
    %114 = arith.addf %107, %113 : vector<48x256xf32>
    %115 = vector.extract_strided_slice %114 {offsets = [0, 0], sizes = [48, 128], strides = [1, 1]} : vector<48x256xf32> to vector<48x128xf32>
    %116 = vector.extract_strided_slice %114 {offsets = [0, 128], sizes = [48, 128], strides = [1, 1]} : vector<48x256xf32> to vector<48x128xf32>
    %117 = arith.maximumf %115, %116 : vector<48x128xf32>
    %c3_115 = arith.constant 3 : index
    %c0_116 = arith.constant 0 : index
    %c0_117 = arith.constant 0 : index
    %c0_118 = arith.constant 0 : index
    %118 = vector.load %arg1[%c3_115, %c0_116, %c0_117, %c0_118] : memref<8x6x8x28xf32, #tpu.memory_space<vmem>>, vector<1x6x8x28xf32>
    %119 = vector.shape_cast %118 : vector<1x6x8x28xf32> to vector<6x8x28xf32>
    %120 = vector.shape_cast %119 : vector<6x8x28xf32> to vector<48x28xf32>
    %c0_119 = arith.constant 0 : index
    %c0_120 = arith.constant 0 : index
    %c0_121 = arith.constant 0 : index
    %121 = vector.load %arg2[%c0_119, %c0_120, %c0_121] : memref<5x28x256xf32, #tpu.memory_space<vmem>>, vector<1x28x256xf32>
    %122 = vector.shape_cast %121 : vector<1x28x256xf32> to vector<28x256xf32>
    %cst_122 = arith.constant dense<0.000000e+00> : vector<48x256xf32>
    %123 = tpu.matmul %120, %122, %cst_122 {dimension_numbers = #tpu.dot_dimension_numbers<[1], [0], [0], [1], [0, 0, 1, 1], [], []>} : vector<48x28xf32>, vector<28x256xf32>, vector<48x256xf32> -> vector<48x256xf32>
    %c4_123 = arith.constant 4 : index
    %c0_124 = arith.constant 0 : index
    %c0_125 = arith.constant 0 : index
    %c0_126 = arith.constant 0 : index
    %124 = vector.load %arg1[%c4_123, %c0_124, %c0_125, %c0_126] : memref<8x6x8x28xf32, #tpu.memory_space<vmem>>, vector<1x6x8x28xf32>
    %125 = vector.shape_cast %124 : vector<1x6x8x28xf32> to vector<6x8x28xf32>
    %126 = vector.shape_cast %125 : vector<6x8x28xf32> to vector<48x28xf32>
    %c1_127 = arith.constant 1 : index
    %c0_128 = arith.constant 0 : index
    %c0_129 = arith.constant 0 : index
    %127 = vector.load %arg2[%c1_127, %c0_128, %c0_129] : memref<5x28x256xf32, #tpu.memory_space<vmem>>, vector<1x28x256xf32>
    %128 = vector.shape_cast %127 : vector<1x28x256xf32> to vector<28x256xf32>
    %cst_130 = arith.constant dense<0.000000e+00> : vector<48x256xf32>
    %129 = tpu.matmul %126, %128, %cst_130 {dimension_numbers = #tpu.dot_dimension_numbers<[1], [0], [0], [1], [0, 0, 1, 1], [], []>} : vector<48x28xf32>, vector<28x256xf32>, vector<48x256xf32> -> vector<48x256xf32>
    %130 = arith.addf %123, %129 : vector<48x256xf32>
    %c5_131 = arith.constant 5 : index
    %c0_132 = arith.constant 0 : index
    %c0_133 = arith.constant 0 : index
    %c0_134 = arith.constant 0 : index
    %131 = vector.load %arg1[%c5_131, %c0_132, %c0_133, %c0_134] : memref<8x6x8x28xf32, #tpu.memory_space<vmem>>, vector<1x6x8x28xf32>
    %132 = vector.shape_cast %131 : vector<1x6x8x28xf32> to vector<6x8x28xf32>
    %133 = vector.shape_cast %132 : vector<6x8x28xf32> to vector<48x28xf32>
    %c2_135 = arith.constant 2 : index
    %c0_136 = arith.constant 0 : index
    %c0_137 = arith.constant 0 : index
    %134 = vector.load %arg2[%c2_135, %c0_136, %c0_137] : memref<5x28x256xf32, #tpu.memory_space<vmem>>, vector<1x28x256xf32>
    %135 = vector.shape_cast %134 : vector<1x28x256xf32> to vector<28x256xf32>
    %cst_138 = arith.constant dense<0.000000e+00> : vector<48x256xf32>
    %136 = tpu.matmul %133, %135, %cst_138 {dimension_numbers = #tpu.dot_dimension_numbers<[1], [0], [0], [1], [0, 0, 1, 1], [], []>} : vector<48x28xf32>, vector<28x256xf32>, vector<48x256xf32> -> vector<48x256xf32>
    %137 = arith.addf %130, %136 : vector<48x256xf32>
    %c6_139 = arith.constant 6 : index
    %c0_140 = arith.constant 0 : index
    %c0_141 = arith.constant 0 : index
    %c0_142 = arith.constant 0 : index
    %138 = vector.load %arg1[%c6_139, %c0_140, %c0_141, %c0_142] : memref<8x6x8x28xf32, #tpu.memory_space<vmem>>, vector<1x6x8x28xf32>
    %139 = vector.shape_cast %138 : vector<1x6x8x28xf32> to vector<6x8x28xf32>
    %140 = vector.shape_cast %139 : vector<6x8x28xf32> to vector<48x28xf32>
    %c3_143 = arith.constant 3 : index
    %c0_144 = arith.constant 0 : index
    %c0_145 = arith.constant 0 : index
    %141 = vector.load %arg2[%c3_143, %c0_144, %c0_145] : memref<5x28x256xf32, #tpu.memory_space<vmem>>, vector<1x28x256xf32>
    %142 = vector.shape_cast %141 : vector<1x28x256xf32> to vector<28x256xf32>
    %cst_146 = arith.constant dense<0.000000e+00> : vector<48x256xf32>
    %143 = tpu.matmul %140, %142, %cst_146 {dimension_numbers = #tpu.dot_dimension_numbers<[1], [0], [0], [1], [0, 0, 1, 1], [], []>} : vector<48x28xf32>, vector<28x256xf32>, vector<48x256xf32> -> vector<48x256xf32>
    %144 = arith.addf %137, %143 : vector<48x256xf32>
    %c7 = arith.constant 7 : index
    %c0_147 = arith.constant 0 : index
    %c0_148 = arith.constant 0 : index
    %c0_149 = arith.constant 0 : index
    %145 = vector.load %arg1[%c7, %c0_147, %c0_148, %c0_149] : memref<8x6x8x28xf32, #tpu.memory_space<vmem>>, vector<1x6x8x28xf32>
    %146 = vector.shape_cast %145 : vector<1x6x8x28xf32> to vector<6x8x28xf32>
    %147 = vector.shape_cast %146 : vector<6x8x28xf32> to vector<48x28xf32>
    %c4_150 = arith.constant 4 : index
    %c0_151 = arith.constant 0 : index
    %c0_152 = arith.constant 0 : index
    %148 = vector.load %arg2[%c4_150, %c0_151, %c0_152] : memref<5x28x256xf32, #tpu.memory_space<vmem>>, vector<1x28x256xf32>
    %149 = vector.shape_cast %148 : vector<1x28x256xf32> to vector<28x256xf32>
    %cst_153 = arith.constant dense<0.000000e+00> : vector<48x256xf32>
    %150 = tpu.matmul %147, %149, %cst_153 {dimension_numbers = #tpu.dot_dimension_numbers<[1], [0], [0], [1], [0, 0, 1, 1], [], []>} : vector<48x28xf32>, vector<28x256xf32>, vector<48x256xf32> -> vector<48x256xf32>
    %151 = arith.addf %144, %150 : vector<48x256xf32>
    %152 = vector.extract_strided_slice %151 {offsets = [0, 0], sizes = [48, 128], strides = [1, 1]} : vector<48x256xf32> to vector<48x128xf32>
    %153 = vector.extract_strided_slice %151 {offsets = [0, 128], sizes = [48, 128], strides = [1, 1]} : vector<48x256xf32> to vector<48x128xf32>
    %154 = arith.maximumf %152, %153 : vector<48x128xf32>
    %155 = arith.maximumf %117, %154 : vector<48x128xf32>
    %c0_154 = arith.constant 0 : index
    %c0_155 = arith.constant 0 : index
    %156 = vector.load %arg3[%c0_154, %c0_155] : memref<1x128xf32, #tpu.memory_space<vmem>>, vector<1x128xf32>
    %157 = vector.broadcast %156 : vector<1x128xf32> to vector<48x128xf32>
    %158 = arith.addf %155, %157 : vector<48x128xf32>
    %cst_156 = arith.constant 0.000000e+00 : f32
    %159 = vector.broadcast %cst_156 : f32 to vector<48x128xf32>
    %160 = arith.maximumf %158, %159 : vector<48x128xf32>
    %161 = vector.shape_cast %160 : vector<48x128xf32> to vector<6x8x128xf32>
    %162 = vector.extract_strided_slice %80 {offsets = [0, 0, 0], sizes = [4, 8, 128], strides = [1, 1, 1]} : vector<6x8x128xf32> to vector<4x8x128xf32>
    %163 = vector.shape_cast %162 : vector<4x8x128xf32> to vector<32x128xf32>
    %c0_157 = arith.constant 0 : index
    %c0_158 = arith.constant 0 : index
    %c0_159 = arith.constant 0 : index
    %164 = vector.load %arg4[%c0_157, %c0_158, %c0_159] : memref<5x128x256xf32, #tpu.memory_space<vmem>>, vector<1x128x256xf32>
    %165 = vector.shape_cast %164 : vector<1x128x256xf32> to vector<128x256xf32>
    %cst_160 = arith.constant dense<0.000000e+00> : vector<32x256xf32>
    %166 = tpu.matmul %163, %165, %cst_160 {dimension_numbers = #tpu.dot_dimension_numbers<[1], [0], [0], [1], [0, 0, 1, 1], [], []>} : vector<32x128xf32>, vector<128x256xf32>, vector<32x256xf32> -> vector<32x256xf32>
    %167 = vector.extract_strided_slice %161 {offsets = [0, 0, 0], sizes = [4, 8, 128], strides = [1, 1, 1]} : vector<6x8x128xf32> to vector<4x8x128xf32>
    %168 = vector.shape_cast %167 : vector<4x8x128xf32> to vector<32x128xf32>
    %c1_161 = arith.constant 1 : index
    %c0_162 = arith.constant 0 : index
    %c0_163 = arith.constant 0 : index
    %169 = vector.load %arg4[%c1_161, %c0_162, %c0_163] : memref<5x128x256xf32, #tpu.memory_space<vmem>>, vector<1x128x256xf32>
    %170 = vector.shape_cast %169 : vector<1x128x256xf32> to vector<128x256xf32>
    %cst_164 = arith.constant dense<0.000000e+00> : vector<32x256xf32>
    %171 = tpu.matmul %168, %170, %cst_164 {dimension_numbers = #tpu.dot_dimension_numbers<[1], [0], [0], [1], [0, 0, 1, 1], [], []>} : vector<32x128xf32>, vector<128x256xf32>, vector<32x256xf32> -> vector<32x256xf32>
    %172 = arith.addf %166, %171 : vector<32x256xf32>
    %173 = vector.extract_strided_slice %80 {offsets = [1, 0, 0], sizes = [4, 8, 128], strides = [1, 1, 1]} : vector<6x8x128xf32> to vector<4x8x128xf32>
    %174 = vector.shape_cast %173 : vector<4x8x128xf32> to vector<32x128xf32>
    %c2_165 = arith.constant 2 : index
    %c0_166 = arith.constant 0 : index
    %c0_167 = arith.constant 0 : index
    %175 = vector.load %arg4[%c2_165, %c0_166, %c0_167] : memref<5x128x256xf32, #tpu.memory_space<vmem>>, vector<1x128x256xf32>
    %176 = vector.shape_cast %175 : vector<1x128x256xf32> to vector<128x256xf32>
    %cst_168 = arith.constant dense<0.000000e+00> : vector<32x256xf32>
    %177 = tpu.matmul %174, %176, %cst_168 {dimension_numbers = #tpu.dot_dimension_numbers<[1], [0], [0], [1], [0, 0, 1, 1], [], []>} : vector<32x128xf32>, vector<128x256xf32>, vector<32x256xf32> -> vector<32x256xf32>
    %178 = arith.addf %172, %177 : vector<32x256xf32>
    %179 = vector.extract_strided_slice %161 {offsets = [1, 0, 0], sizes = [4, 8, 128], strides = [1, 1, 1]} : vector<6x8x128xf32> to vector<4x8x128xf32>
    %180 = vector.shape_cast %179 : vector<4x8x128xf32> to vector<32x128xf32>
    %c3_169 = arith.constant 3 : index
    %c0_170 = arith.constant 0 : index
    %c0_171 = arith.constant 0 : index
    %181 = vector.load %arg4[%c3_169, %c0_170, %c0_171] : memref<5x128x256xf32, #tpu.memory_space<vmem>>, vector<1x128x256xf32>
    %182 = vector.shape_cast %181 : vector<1x128x256xf32> to vector<128x256xf32>
    %cst_172 = arith.constant dense<0.000000e+00> : vector<32x256xf32>
    %183 = tpu.matmul %180, %182, %cst_172 {dimension_numbers = #tpu.dot_dimension_numbers<[1], [0], [0], [1], [0, 0, 1, 1], [], []>} : vector<32x128xf32>, vector<128x256xf32>, vector<32x256xf32> -> vector<32x256xf32>
    %184 = arith.addf %178, %183 : vector<32x256xf32>
    %185 = vector.extract_strided_slice %80 {offsets = [2, 0, 0], sizes = [4, 8, 128], strides = [1, 1, 1]} : vector<6x8x128xf32> to vector<4x8x128xf32>
    %186 = vector.shape_cast %185 : vector<4x8x128xf32> to vector<32x128xf32>
    %c4_173 = arith.constant 4 : index
    %c0_174 = arith.constant 0 : index
    %c0_175 = arith.constant 0 : index
    %187 = vector.load %arg4[%c4_173, %c0_174, %c0_175] : memref<5x128x256xf32, #tpu.memory_space<vmem>>, vector<1x128x256xf32>
    %188 = vector.shape_cast %187 : vector<1x128x256xf32> to vector<128x256xf32>
    %cst_176 = arith.constant dense<0.000000e+00> : vector<32x256xf32>
    %189 = tpu.matmul %186, %188, %cst_176 {dimension_numbers = #tpu.dot_dimension_numbers<[1], [0], [0], [1], [0, 0, 1, 1], [], []>} : vector<32x128xf32>, vector<128x256xf32>, vector<32x256xf32> -> vector<32x256xf32>
    %190 = arith.addf %184, %189 : vector<32x256xf32>
    %191 = vector.extract_strided_slice %190 {offsets = [0, 0], sizes = [32, 128], strides = [1, 1]} : vector<32x256xf32> to vector<32x128xf32>
    %192 = vector.extract_strided_slice %190 {offsets = [0, 128], sizes = [32, 128], strides = [1, 1]} : vector<32x256xf32> to vector<32x128xf32>
    %193 = arith.maximumf %191, %192 : vector<32x128xf32>
    %194 = vector.extract_strided_slice %161 {offsets = [0, 0, 0], sizes = [4, 8, 128], strides = [1, 1, 1]} : vector<6x8x128xf32> to vector<4x8x128xf32>
    %195 = vector.shape_cast %194 : vector<4x8x128xf32> to vector<32x128xf32>
    %c0_177 = arith.constant 0 : index
    %c0_178 = arith.constant 0 : index
    %c0_179 = arith.constant 0 : index
    %196 = vector.load %arg4[%c0_177, %c0_178, %c0_179] : memref<5x128x256xf32, #tpu.memory_space<vmem>>, vector<1x128x256xf32>
    %197 = vector.shape_cast %196 : vector<1x128x256xf32> to vector<128x256xf32>
    %cst_180 = arith.constant dense<0.000000e+00> : vector<32x256xf32>
    %198 = tpu.matmul %195, %197, %cst_180 {dimension_numbers = #tpu.dot_dimension_numbers<[1], [0], [0], [1], [0, 0, 1, 1], [], []>} : vector<32x128xf32>, vector<128x256xf32>, vector<32x256xf32> -> vector<32x256xf32>
    %199 = vector.extract_strided_slice %80 {offsets = [1, 0, 0], sizes = [4, 8, 128], strides = [1, 1, 1]} : vector<6x8x128xf32> to vector<4x8x128xf32>
    %200 = vector.shape_cast %199 : vector<4x8x128xf32> to vector<32x128xf32>
    %c1_181 = arith.constant 1 : index
    %c0_182 = arith.constant 0 : index
    %c0_183 = arith.constant 0 : index
    %201 = vector.load %arg4[%c1_181, %c0_182, %c0_183] : memref<5x128x256xf32, #tpu.memory_space<vmem>>, vector<1x128x256xf32>
    %202 = vector.shape_cast %201 : vector<1x128x256xf32> to vector<128x256xf32>
    %cst_184 = arith.constant dense<0.000000e+00> : vector<32x256xf32>
    %203 = tpu.matmul %200, %202, %cst_184 {dimension_numbers = #tpu.dot_dimension_numbers<[1], [0], [0], [1], [0, 0, 1, 1], [], []>} : vector<32x128xf32>, vector<128x256xf32>, vector<32x256xf32> -> vector<32x256xf32>
    %204 = arith.addf %198, %203 : vector<32x256xf32>
    %205 = vector.extract_strided_slice %161 {offsets = [1, 0, 0], sizes = [4, 8, 128], strides = [1, 1, 1]} : vector<6x8x128xf32> to vector<4x8x128xf32>
    %206 = vector.shape_cast %205 : vector<4x8x128xf32> to vector<32x128xf32>
    %c2_185 = arith.constant 2 : index
    %c0_186 = arith.constant 0 : index
    %c0_187 = arith.constant 0 : index
    %207 = vector.load %arg4[%c2_185, %c0_186, %c0_187] : memref<5x128x256xf32, #tpu.memory_space<vmem>>, vector<1x128x256xf32>
    %208 = vector.shape_cast %207 : vector<1x128x256xf32> to vector<128x256xf32>
    %cst_188 = arith.constant dense<0.000000e+00> : vector<32x256xf32>
    %209 = tpu.matmul %206, %208, %cst_188 {dimension_numbers = #tpu.dot_dimension_numbers<[1], [0], [0], [1], [0, 0, 1, 1], [], []>} : vector<32x128xf32>, vector<128x256xf32>, vector<32x256xf32> -> vector<32x256xf32>
    %210 = arith.addf %204, %209 : vector<32x256xf32>
    %211 = vector.extract_strided_slice %80 {offsets = [2, 0, 0], sizes = [4, 8, 128], strides = [1, 1, 1]} : vector<6x8x128xf32> to vector<4x8x128xf32>
    %212 = vector.shape_cast %211 : vector<4x8x128xf32> to vector<32x128xf32>
    %c3_189 = arith.constant 3 : index
    %c0_190 = arith.constant 0 : index
    %c0_191 = arith.constant 0 : index
    %213 = vector.load %arg4[%c3_189, %c0_190, %c0_191] : memref<5x128x256xf32, #tpu.memory_space<vmem>>, vector<1x128x256xf32>
    %214 = vector.shape_cast %213 : vector<1x128x256xf32> to vector<128x256xf32>
    %cst_192 = arith.constant dense<0.000000e+00> : vector<32x256xf32>
    %215 = tpu.matmul %212, %214, %cst_192 {dimension_numbers = #tpu.dot_dimension_numbers<[1], [0], [0], [1], [0, 0, 1, 1], [], []>} : vector<32x128xf32>, vector<128x256xf32>, vector<32x256xf32> -> vector<32x256xf32>
    %216 = arith.addf %210, %215 : vector<32x256xf32>
    %217 = vector.extract_strided_slice %161 {offsets = [2, 0, 0], sizes = [4, 8, 128], strides = [1, 1, 1]} : vector<6x8x128xf32> to vector<4x8x128xf32>
    %218 = vector.shape_cast %217 : vector<4x8x128xf32> to vector<32x128xf32>
    %c4_193 = arith.constant 4 : index
    %c0_194 = arith.constant 0 : index
    %c0_195 = arith.constant 0 : index
    %219 = vector.load %arg4[%c4_193, %c0_194, %c0_195] : memref<5x128x256xf32, #tpu.memory_space<vmem>>, vector<1x128x256xf32>
    %220 = vector.shape_cast %219 : vector<1x128x256xf32> to vector<128x256xf32>
    %cst_196 = arith.constant dense<0.000000e+00> : vector<32x256xf32>
    %221 = tpu.matmul %218, %220, %cst_196 {dimension_numbers = #tpu.dot_dimension_numbers<[1], [0], [0], [1], [0, 0, 1, 1], [], []>} : vector<32x128xf32>, vector<128x256xf32>, vector<32x256xf32> -> vector<32x256xf32>
    %222 = arith.addf %216, %221 : vector<32x256xf32>
    %223 = vector.extract_strided_slice %222 {offsets = [0, 0], sizes = [32, 128], strides = [1, 1]} : vector<32x256xf32> to vector<32x128xf32>
    %224 = vector.extract_strided_slice %222 {offsets = [0, 128], sizes = [32, 128], strides = [1, 1]} : vector<32x256xf32> to vector<32x128xf32>
    %225 = arith.maximumf %223, %224 : vector<32x128xf32>
    %226 = arith.maximumf %193, %225 : vector<32x128xf32>
    %c0_197 = arith.constant 0 : index
    %c0_198 = arith.constant 0 : index
    %227 = vector.load %arg5[%c0_197, %c0_198] : memref<1x128xf32, #tpu.memory_space<vmem>>, vector<1x128xf32>
    %228 = vector.broadcast %227 : vector<1x128xf32> to vector<32x128xf32>
    %229 = arith.addf %226, %228 : vector<32x128xf32>
    %cst_199 = arith.constant 0.000000e+00 : f32
    %230 = vector.broadcast %cst_199 : f32 to vector<32x128xf32>
    %231 = arith.maximumf %229, %230 : vector<32x128xf32>
    %232 = vector.shape_cast %231 : vector<32x128xf32> to vector<4x8x128xf32>
    %233 = vector.extract_strided_slice %232 {offsets = [0, 0, 0], sizes = [1, 8, 128], strides = [1, 1, 1]} : vector<4x8x128xf32> to vector<1x8x128xf32>
    %234 = vector.shape_cast %233 : vector<1x8x128xf32> to vector<8x128xf32>
    %c0_200 = arith.constant 0 : index
    %c0_201 = arith.constant 0 : index
    %c0_202 = arith.constant 0 : index
    %235 = vector.load %arg6[%c0_200, %c0_201, %c0_202] : memref<4x128x128xf32, #tpu.memory_space<vmem>>, vector<1x128x128xf32>
    %236 = vector.shape_cast %235 : vector<1x128x128xf32> to vector<128x128xf32>
    %cst_203 = arith.constant dense<0.000000e+00> : vector<8x128xf32>
    %237 = tpu.matmul %234, %236, %cst_203 {dimension_numbers = #tpu.dot_dimension_numbers<[1], [0], [0], [1], [0, 0, 1, 1], [], []>} : vector<8x128xf32>, vector<128x128xf32>, vector<8x128xf32> -> vector<8x128xf32>
    %238 = vector.extract_strided_slice %232 {offsets = [1, 0, 0], sizes = [1, 8, 128], strides = [1, 1, 1]} : vector<4x8x128xf32> to vector<1x8x128xf32>
    %239 = vector.shape_cast %238 : vector<1x8x128xf32> to vector<8x128xf32>
    %c1_204 = arith.constant 1 : index
    %c0_205 = arith.constant 0 : index
    %c0_206 = arith.constant 0 : index
    %240 = vector.load %arg6[%c1_204, %c0_205, %c0_206] : memref<4x128x128xf32, #tpu.memory_space<vmem>>, vector<1x128x128xf32>
    %241 = vector.shape_cast %240 : vector<1x128x128xf32> to vector<128x128xf32>
    %cst_207 = arith.constant dense<0.000000e+00> : vector<8x128xf32>
    %242 = tpu.matmul %239, %241, %cst_207 {dimension_numbers = #tpu.dot_dimension_numbers<[1], [0], [0], [1], [0, 0, 1, 1], [], []>} : vector<8x128xf32>, vector<128x128xf32>, vector<8x128xf32> -> vector<8x128xf32>
    %243 = arith.addf %237, %242 : vector<8x128xf32>
    %244 = vector.extract_strided_slice %232 {offsets = [2, 0, 0], sizes = [1, 8, 128], strides = [1, 1, 1]} : vector<4x8x128xf32> to vector<1x8x128xf32>
    %245 = vector.shape_cast %244 : vector<1x8x128xf32> to vector<8x128xf32>
    %c2_208 = arith.constant 2 : index
    %c0_209 = arith.constant 0 : index
    %c0_210 = arith.constant 0 : index
    %246 = vector.load %arg6[%c2_208, %c0_209, %c0_210] : memref<4x128x128xf32, #tpu.memory_space<vmem>>, vector<1x128x128xf32>
    %247 = vector.shape_cast %246 : vector<1x128x128xf32> to vector<128x128xf32>
    %cst_211 = arith.constant dense<0.000000e+00> : vector<8x128xf32>
    %248 = tpu.matmul %245, %247, %cst_211 {dimension_numbers = #tpu.dot_dimension_numbers<[1], [0], [0], [1], [0, 0, 1, 1], [], []>} : vector<8x128xf32>, vector<128x128xf32>, vector<8x128xf32> -> vector<8x128xf32>
    %249 = arith.addf %243, %248 : vector<8x128xf32>
    %250 = vector.extract_strided_slice %232 {offsets = [3, 0, 0], sizes = [1, 8, 128], strides = [1, 1, 1]} : vector<4x8x128xf32> to vector<1x8x128xf32>
    %251 = vector.shape_cast %250 : vector<1x8x128xf32> to vector<8x128xf32>
    %c3_212 = arith.constant 3 : index
    %c0_213 = arith.constant 0 : index
    %c0_214 = arith.constant 0 : index
    %252 = vector.load %arg6[%c3_212, %c0_213, %c0_214] : memref<4x128x128xf32, #tpu.memory_space<vmem>>, vector<1x128x128xf32>
    %253 = vector.shape_cast %252 : vector<1x128x128xf32> to vector<128x128xf32>
    %cst_215 = arith.constant dense<0.000000e+00> : vector<8x128xf32>
    %254 = tpu.matmul %251, %253, %cst_215 {dimension_numbers = #tpu.dot_dimension_numbers<[1], [0], [0], [1], [0, 0, 1, 1], [], []>} : vector<8x128xf32>, vector<128x128xf32>, vector<8x128xf32> -> vector<8x128xf32>
    %255 = arith.addf %249, %254 : vector<8x128xf32>
    %c0_216 = arith.constant 0 : index
    %c0_217 = arith.constant 0 : index
    %256 = vector.load %arg7[%c0_216, %c0_217] : memref<1x128xf32, #tpu.memory_space<vmem>>, vector<1x128xf32>
    %257 = vector.broadcast %256 : vector<1x128xf32> to vector<8x128xf32>
    %258 = arith.addf %255, %257 : vector<8x128xf32>
    %cst_218 = arith.constant 0.000000e+00 : f32
    %259 = vector.broadcast %cst_218 : f32 to vector<8x128xf32>
    %260 = arith.maximumf %258, %259 : vector<8x128xf32>
    %c0_219 = arith.constant 0 : index
    %c0_220 = arith.constant 0 : index
    %261 = vector.load %arg8[%c0_219, %c0_220] : memref<128x128xf32, #tpu.memory_space<vmem>>, vector<128x128xf32>
    %cst_221 = arith.constant dense<0.000000e+00> : vector<8x128xf32>
    %262 = tpu.matmul %260, %261, %cst_221 {dimension_numbers = #tpu.dot_dimension_numbers<[1], [0], [0], [1], [0, 0, 1, 1], [], []>} : vector<8x128xf32>, vector<128x128xf32>, vector<8x128xf32> -> vector<8x128xf32>
    %c0_222 = arith.constant 0 : index
    %c0_223 = arith.constant 0 : index
    %263 = vector.load %arg9[%c0_222, %c0_223] : memref<1x128xf32, #tpu.memory_space<vmem>>, vector<1x128xf32>
    %264 = vector.broadcast %263 : vector<1x128xf32> to vector<8x128xf32>
    %265 = arith.addf %262, %264 : vector<8x128xf32>
    %c8_i32 = arith.constant 8 : i32
    %266 = arith.muli %arg0, %c8_i32 : i32
    %267 = tpu.assume_multiple %266, 8 : i32
    %268 = arith.index_cast %267 : i32 to index
    %c0_224 = arith.constant 0 : index
    %269 = vector.load %arg10[%268, %c0_224] : memref<8x128xf32, #tpu.memory_space<vmem>>, vector<8x128xf32>
    tpu.vector_store %arg10[%268, %c0_224], %265 {strides = array<i32>} : memref<8x128xf32, #tpu.memory_space<vmem>>, vector<8x128xf32>,
    %c0_i32 = arith.constant 0 : i32
    %270 = arith.cmpi eq, %arg0, %c0_i32 : i32
    %271 = arith.extui %270 : i1 to i32
    %c0_i32_225 = arith.constant 0 : i32
    %272 = arith.cmpi ne, %271, %c0_i32_225 : i32
    scf.if %272 {
      %c0_226 = arith.constant 0 : index
      %c0_227 = arith.constant 0 : index
      %273 = vector.load %arg10[%c0_226, %c0_227] : memref<8x128xf32, #tpu.memory_space<vmem>>, vector<8x128xf32>
      %274 = tpu.iota {dimensions = array<i32: 0>} : vector<8x128xi32>
      %c2_i32 = arith.constant 2 : i32
      %275 = vector.broadcast %c2_i32 : i32 to vector<8x128xi32>
      %276 = arith.cmpi slt, %274, %275 : vector<8x128xi32>
      %cst_228 = arith.constant 0xFF800000 : f32
      %277 = vector.broadcast %cst_228 : f32 to vector<8x128xf32>
      %278 = arith.select %276, %273, %277 : vector<8x128xi1>, vector<8x128xf32>
      %cst_229 = arith.constant dense<0xFF800000> : vector<128xf32>
      %279 = vector.multi_reduction <maximumf>, %278, %cst_229 [0] : vector<8x128xf32> to vector<128xf32>
      %280 = vector.shape_cast %279 : vector<128xf32> to vector<1x128xf32>
      %281 = vector.broadcast %280 : vector<1x128xf32> to vector<8x128xf32>
      %282 = arith.subf %273, %281 : vector<8x128xf32>
      %283 = math.exp %282 : vector<8x128xf32>
      %cst_230 = arith.constant 0.000000e+00 : f32
      %284 = vector.broadcast %cst_230 : f32 to vector<8x128xf32>
      %285 = arith.select %276, %283, %284 : vector<8x128xi1>, vector<8x128xf32>
      %cst_231 = arith.constant dense<0.000000e+00> : vector<128xf32>
      %286 = vector.multi_reduction <add>, %285, %cst_231 [0] : vector<8x128xf32> to vector<128xf32>
      %287 = vector.shape_cast %286 : vector<128xf32> to vector<1x128xf32>
      %288 = math.log %287 : vector<1x128xf32>
      %289 = arith.addf %280, %288 : vector<1x128xf32>
      %290 = vector.broadcast %289 : vector<1x128xf32> to vector<8x128xf32>
      %291 = arith.subf %273, %290 : vector<8x128xf32>
      %c0_232 = arith.constant 0 : index
      %c0_233 = arith.constant 0 : index
      %292 = vector.load %arg10[%c0_232, %c0_233] : memref<8x128xf32, #tpu.memory_space<vmem>>, vector<8x128xf32>
      tpu.vector_store %arg10[%c0_232, %c0_233], %291 {strides = array<i32>} : memref<8x128xf32, #tpu.memory_space<vmem>>, vector<8x128xf32>,
    } else {
    }
    return
  }
  func.func @transform_0(%arg0: i32) -> (i32, i32, i32, i32) {
    %c0_i32 = arith.constant 0 : i32
    %c0_i32_0 = arith.constant 0 : i32
    %c0_i32_1 = arith.constant 0 : i32
    %c0_i32_2 = arith.constant 0 : i32
    return %c0_i32, %c0_i32_0, %arg0, %c0_i32_1 : i32, i32, i32, i32
  }
  func.func @transform_1(%arg0: i32) -> (i32, i32, i32) {
    %c0_i32 = arith.constant 0 : i32
    %c0_i32_0 = arith.constant 0 : i32
    %c0_i32_1 = arith.constant 0 : i32
    %c0_i32_2 = arith.constant 0 : i32
    return %c0_i32, %c0_i32_0, %c0_i32_1 : i32, i32, i32
  }
  func.func @transform_2(%arg0: i32) -> (i32, i32) {
    %c0_i32 = arith.constant 0 : i32
    %c0_i32_0 = arith.constant 0 : i32
    %c0_i32_1 = arith.constant 0 : i32
    return %c0_i32, %c0_i32_0 : i32, i32
  }
  func.func @transform_3(%arg0: i32) -> (i32, i32, i32) {
    %c0_i32 = arith.constant 0 : i32
    %c0_i32_0 = arith.constant 0 : i32
    %c0_i32_1 = arith.constant 0 : i32
    %c0_i32_2 = arith.constant 0 : i32
    return %c0_i32, %c0_i32_0, %c0_i32_1 : i32, i32, i32
  }
  func.func @transform_4(%arg0: i32) -> (i32, i32) {
    %c0_i32 = arith.constant 0 : i32
    %c0_i32_0 = arith.constant 0 : i32
    %c0_i32_1 = arith.constant 0 : i32
    return %c0_i32, %c0_i32_0 : i32, i32
  }
  func.func @transform_5(%arg0: i32) -> (i32, i32, i32) {
    %c0_i32 = arith.constant 0 : i32
    %c0_i32_0 = arith.constant 0 : i32
    %c0_i32_1 = arith.constant 0 : i32
    %c0_i32_2 = arith.constant 0 : i32
    return %c0_i32, %c0_i32_0, %c0_i32_1 : i32, i32, i32
  }
  func.func @transform_6(%arg0: i32) -> (i32, i32) {
    %c0_i32 = arith.constant 0 : i32
    %c0_i32_0 = arith.constant 0 : i32
    %c0_i32_1 = arith.constant 0 : i32
    return %c0_i32, %c0_i32_0 : i32, i32
  }
  func.func @transform_7(%arg0: i32) -> (i32, i32) {
    %c0_i32 = arith.constant 0 : i32
    %c0_i32_0 = arith.constant 0 : i32
    %c0_i32_1 = arith.constant 0 : i32
    return %c0_i32, %c0_i32_0 : i32, i32
  }
  func.func @transform_8(%arg0: i32) -> (i32, i32) {
    %c0_i32 = arith.constant 0 : i32
    %c0_i32_0 = arith.constant 0 : i32
    %c0_i32_1 = arith.constant 0 : i32
    return %c0_i32, %c0_i32_0 : i32, i32
  }
  func.func @transform_9(%arg0: i32) -> (i32, i32) {
    %c0_i32 = arith.constant 0 : i32
    %c0_i32_0 = arith.constant 0 : i32
    %c0_i32_1 = arith.constant 0 : i32
    return %c0_i32, %c0_i32_0 : i32, i32
  }
}

</mosaic_0001>

<llo_original>
// kernel: tile.13
$region0: #{tile.13}
  #allocation0 [shape = 's32[1]{0}', space=sflag, size = 0x4, scoped, tag = 'scoped memory for tile.13']
  %s0 = inlined_call_operand.vmem [shape: f32[10], index: 0, kind: input, shape index: {}]
  %s1 = inlined_call_operand.vmem [shape: f32[12,10], index: 1, kind: output, shape index: {}]
  // Predicated region
  $region2: #{tile.13} parent=0 // pred_check
    _
  $region3: #{tile.13} parent=0 // pred_check_branch
    %3 = sbr.rel (0) target = $region5
  $region4: #{tile.13} parent=0 // pred_region
    _
  $region5: #{tile.13} parent=0 // pred_fallthru
    _
  %v4 = vld [vmem:[%s0] ss:$0 sm:$0xff]
  %5 = vst [vmem:[%s1] sm:$0xff] %v4
  %s6 = scalar_lea.vmem %s1, 8
  %7 = vst [vmem:[%s6] sm:$0xff] %v4

// kernel: tile.14
$region0: #{tile.14}
  %s0 = inlined_call_operand.vmem [shape: f32[12,10], index: 0, kind: input, shape index: {}]
  %s1 = inlined_call_operand.vmem [shape: f32[120], index: 1, kind: output, shape index: {}]
  $region1: #{tile.14} parent=0
    #allocation0 [shape = 'u8[4096]{0}', space=vmem, size = 0x1000, scoped, tag = 'scoped mem for output reshape']
    %v2 = vld [vmem:[%s0] sm:$0x1]
    %vm3 = vcmask 80896
    %4 = vst.msk [vmem:[#allocation0] sm:$0x1] %vm3, %v2
    %s5 = scalar_lea.vmem %s0, 11
    %v6 = vld [vmem:[%s5] sm:$0x1]
    %7 = vrot.lane.b32.xlu0 %v6, 110
    %v8 = vpop.permute.xlu0 %7
    %vm9 = vcmask 982896
    %10 = vst.msk [vmem:[#allocation0] sm:$0x1] %vm9, %v8
    %s11 = scalar_lea.vmem %s0, 10
    %v12 = vld [vmem:[%s11] sm:$0x1]
    %13 = vrot.lane.b32.xlu0 %v12, 100
    %v14 = vpop.permute.xlu0 %13
    %vm15 = vcmask 900896
    %16 = vst.msk [vmem:[#allocation0] sm:$0x1] %vm15, %v14
    %s17 = scalar_lea.vmem %s0, 9
    %v18 = vld [vmem:[%s17] sm:$0x1]
    %19 = vrot.lane.b32.xlu0 %v18, 90
    %v20 = vpop.permute.xlu0 %19
    %vm21 = vcmask 818896
    %22 = vst.msk [vmem:[#allocation0] sm:$0x1] %vm21, %v20
    %s23 = scalar_lea.vmem %s0, 8
    %v24 = vld [vmem:[%s23] sm:$0x1]
    %25 = vrot.lane.b32.xlu0 %v24, 80
    %v26 = vpop.permute.xlu0 %25
    %vm27 = vcmask 736896
    %28 = vst.msk [vmem:[#allocation0] sm:$0x1] %vm27, %v26
    %s29 = scalar_lea.vmem %s0, 7
    %v30 = vld [vmem:[%s29] sm:$0x1]
    %31 = vrot.lane.b32.xlu0 %v30, 70
    %v32 = vpop.permute.xlu0 %31
    %vm33 = vcmask 654896
    %34 = vst.msk [vmem:[#allocation0] sm:$0x1] %vm33, %v32
    %s35 = scalar_lea.vmem %s0, 6
    %v36 = vld [vmem:[%s35] sm:$0x1]
    %37 = vrot.lane.b32.xlu0 %v36, 60
    %v38 = vpop.permute.xlu0 %37
    %vm39 = vcmask 572896
    %40 = vst.msk [vmem:[#allocation0] sm:$0x1] %vm39, %v38
    %s41 = scalar_lea.vmem %s0, 5
    %v42 = vld [vmem:[%s41] sm:$0x1]
    %43 = vrot.lane.b32.xlu0 %v42, 50
    %v44 = vpop.permute.xlu0 %43
    %vm45 = vcmask 490896
    %46 = vst.msk [vmem:[#allocation0] sm:$0x1] %vm45, %v44
    %s47 = scalar_lea.vmem %s0, 4
    %v48 = vld [vmem:[%s47] sm:$0x1]
    %49 = vrot.lane.b32.xlu0 %v48, 40
    %v50 = vpop.permute.xlu0 %49
    %vm51 = vcmask 408896
    %52 = vst.msk [vmem:[#allocation0] sm:$0x1] %vm51, %v50
    %s53 = scalar_lea.vmem %s0, 3
    %v54 = vld [vmem:[%s53] sm:$0x1]
    %55 = vrot.lane.b32.xlu0 %v54, 30
    %v56 = vpop.permute.xlu0 %55
    %vm57 = vcmask 326896
    %58 = vst.msk [vmem:[#allocation0] sm:$0x1] %vm57, %v56
    %s59 = scalar_lea.vmem %s0, 2
    %v60 = vld [vmem:[%s59] sm:$0x1]
    %61 = vrot.lane.b32.xlu0 %v60, 20
    %v62 = vpop.permute.xlu0 %61
    %vm63 = vcmask 244896
    %64 = vst.msk [vmem:[#allocation0] sm:$0x1] %vm63, %v62
    %s65 = scalar_lea.vmem %s0, 1
    %v66 = vld [vmem:[%s65] sm:$0x1]
    %67 = vrot.lane.b32.xlu0 %v66, 10
    %v68 = vpop.permute.xlu0 %67
    %vm69 = vcmask 162896
    %70 = vst.msk [vmem:[#allocation0] sm:$0x1] %vm69, %v68
    %s72 = sshllo.u32 0, 1
    %v74 = vld [vmem:[#allocation0] sm:%s72]
    %s75 = sshllo.u32 0, 1
    %76 = vst [vmem:[%s1] sm:%s75] %v74

// kernel: tile.18
$region0: #{tile.18}
  #allocation0 [shape = 's32[1]{0}', space=sflag, size = 0x4, scoped, tag = 'scoped memory for tile.18']
  %s0 = inlined_call_operand.vmem [shape: f32[20], index: 0, kind: input, shape index: {}]
  %s1 = inlined_call_operand.vmem [shape: f32[4,20], index: 1, kind: output, shape index: {}]
  // Predicated region
  $region2: #{tile.18} parent=0 // pred_check
    _
  $region3: #{tile.18} parent=0 // pred_check_branch
    %3 = sbr.rel (0) target = $region5
  $region4: #{tile.18} parent=0 // pred_region
    _
  $region5: #{tile.18} parent=0 // pred_fallthru
    _
  %v4 = vld [vmem:[%s0] ss:$0 sm:$0xff]
  %5 = vst [vmem:[%s1] sm:$0xf] %v4

// kernel: tile.19
$region0: #{tile.19}
  %s0 = inlined_call_operand.vmem [shape: f32[4,20], index: 0, kind: input, shape index: {}]
  %s1 = inlined_call_operand.vmem [shape: f32[80], index: 1, kind: output, shape index: {}]
  $region1: #{tile.19} parent=0
    #allocation0 [shape = 'u8[4096]{0}', space=vmem, size = 0x1000, scoped, tag = 'scoped mem for output reshape']
    #allocation1 [shape = 'u8[4096]{0}', space=vmem, size = 0x1000, scoped, tag = 'scoped mem for input reshape']
    %s3 = sshllo.u32 0, 4
    %v4 = vld [vmem:[%s0] sm:%s3]
    %5 = vst [vmem:[#allocation1] sm:%s3] %v4
    %v6 = vld [vmem:[#allocation1] sm:$0x1]
    %vm7 = vcmask 162816
    %8 = vst.msk [vmem:[#allocation0] sm:$0x1] %vm7, %v6
    %s9 = scalar_lea.vmem [#allocation1], 3
    %v10 = vld [vmem:[%s9] sm:$0x1]
    %11 = vrot.lane.b32.xlu0 %v10, 60
    %v12 = vpop.permute.xlu0 %11
    %vm13 = vcmask 654816
    %14 = vst.msk [vmem:[#allocation0] sm:$0x1] %vm13, %v12
    %s15 = scalar_lea.vmem [#allocation1], 2
    %v16 = vld [vmem:[%s15] sm:$0x1]
    %17 = vrot.lane.b32.xlu0 %v16, 40
    %v18 = vpop.permute.xlu0 %17
    %vm19 = vcmask 490816
    %20 = vst.msk [vmem:[#allocation0] sm:$0x1] %vm19, %v18
    %s21 = scalar_lea.vmem [#allocation1], 1
    %v22 = vld [vmem:[%s21] sm:$0x1]
    %23 = vrot.lane.b32.xlu0 %v22, 20
    %v24 = vpop.permute.xlu0 %23
    %vm25 = vcmask 326816
    %26 = vst.msk [vmem:[#allocation0] sm:$0x1] %vm25, %v24
    %s28 = sshllo.u32 0, 1
    %v30 = vld [vmem:[#allocation0] sm:%s28]
    %s31 = sshllo.u32 0, 1
    %32 = vst [vmem:[%s1] sm:%s31] %v30

// kernel: forward.1
$region0: #{forward.1}
  #allocation0 [shape = 'u32[]', space=smem, size = 0x4, offset = 0x4, fixed_abs, tag = 'smem constant byte address 0x4 - core index']
  #allocation1 [shape = 'u32[144,128]{1,0:T(1,128)}', space=vmem, size = 0x12000, scoped, tag = 'internal scratch']
  %s0 = inlined_call_operand.vmem [shape: f32[8,6,8,28], index: 0, kind: input, shape index: {}]
  %s1 = inlined_call_operand.vmem [shape: f32[5,28,256], index: 1, kind: input, shape index: {}]
  %s2 = inlined_call_operand.vmem [shape: f32[1,128], index: 2, kind: input, shape index: {}]
  %s3 = inlined_call_operand.vmem [shape: f32[5,128,256], index: 3, kind: input, shape index: {}]
  %s4 = inlined_call_operand.vmem [shape: f32[1,128], index: 4, kind: input, shape index: {}]
  %s5 = inlined_call_operand.vmem [shape: f32[4,128,128], index: 5, kind: input, shape index: {}]
  %s6 = inlined_call_operand.vmem [shape: f32[1,128], index: 6, kind: input, shape index: {}]
  %s7 = inlined_call_operand.vmem [shape: f32[128,128], index: 7, kind: input, shape index: {}]
  %s8 = inlined_call_operand.vmem [shape: f32[1,128], index: 8, kind: input, shape index: {}]
  %s9 = inlined_call_operand.vmem [shape: f32[8,128], index: 9, kind: output, shape index: {}]
  %s10 = sld [smem:[#allocation0]]
  $region50: #{forward.1} parent=0
    _
  %s12 = ssub.s32 1, %s10
  %s13 = scalar_select 0, %s12, %s10
  // Predicated region
  $region2: #{forward.1} parent=0 // pred_check
    _
  $region3: #{forward.1} parent=0 // pred_check_branch
    %15 = sbr.rel (0) target = $region5
  $region4: #{forward.1} parent=0 // pred_region
    _
  $region5: #{forward.1} parent=0 // pred_fallthru
    _
  // Predicated region
  $region6: #{forward.1} parent=0 // pred_check
    _
  $region7: #{forward.1} parent=0 // pred_check_branch
    %17 = sbr.rel (0) target = $region9
  $region8: #{forward.1} parent=0 // pred_region
    _
  $region9: #{forward.1} parent=0 // pred_fallthru
    _
  // Predicated region
  $region10: #{forward.1} parent=0 // pred_check
    _
  $region11: #{forward.1} parent=0 // pred_check_branch
    %19 = sbr.rel (0) target = $region13
  $region12: #{forward.1} parent=0 // pred_region
    _
  $region13: #{forward.1} parent=0 // pred_fallthru
    _
  // Predicated region
  $region14: #{forward.1} parent=0 // pred_check
    _
  $region15: #{forward.1} parent=0 // pred_check_branch
    %21 = sbr.rel (0) target = $region17
  $region16: #{forward.1} parent=0 // pred_region
    _
  $region17: #{forward.1} parent=0 // pred_fallthru
    _
  // Predicated region
  $region18: #{forward.1} parent=0 // pred_check
    _
  $region19: #{forward.1} parent=0 // pred_check_branch
    %23 = sbr.rel (0) target = $region21
  $region20: #{forward.1} parent=0 // pred_region
    _
  $region21: #{forward.1} parent=0 // pred_fallthru
    _
  // Predicated region
  $region22: #{forward.1} parent=0 // pred_check
    _
  $region23: #{forward.1} parent=0 // pred_check_branch
    %25 = sbr.rel (0) target = $region25
  $region24: #{forward.1} parent=0 // pred_region
    _
  $region25: #{forward.1} parent=0 // pred_fallthru
    _
  // Predicated region
  $region26: #{forward.1} parent=0 // pred_check
    _
  $region27: #{forward.1} parent=0 // pred_check_branch
    %27 = sbr.rel (0) target = $region29
  $region28: #{forward.1} parent=0 // pred_region
    _
  $region29: #{forward.1} parent=0 // pred_fallthru
    _
  // Predicated region
  $region30: #{forward.1} parent=0 // pred_check
    _
  $region31: #{forward.1} parent=0 // pred_check_branch
    %29 = sbr.rel (0) target = $region33
  $region32: #{forward.1} parent=0 // pred_region
    _
  $region33: #{forward.1} parent=0 // pred_fallthru
    _
  // Predicated region
  $region34: #{forward.1} parent=0 // pred_check
    _
  $region35: #{forward.1} parent=0 // pred_check_branch
    %31 = sbr.rel (0) target = $region37
  $region36: #{forward.1} parent=0 // pred_region
    _
  $region37: #{forward.1} parent=0 // pred_fallthru
    _
  %v32 = vld [vmem:[%s0] sm:$0xff]
  %v33 = vld [vmem:[%s0 + $0x8] sm:$0xff]
  %v34 = vld [vmem:[%s0 + $0x10] sm:$0xff]
  %v35 = vld [vmem:[%s0 + $0x18] sm:$0xff]
  %v36 = vld [vmem:[%s0 + $0x20] sm:$0xff]
  %v37 = vld [vmem:[%s0 + $0x28] sm:$0xff]
  %v38 = vld [vmem:[%s1] sm:$0xff]
  %v39 = vld [vmem:[%s1 + $0x8] sm:$0xff]
  %v40 = vld [vmem:[%s1 + $0x10] sm:$0xff]
  %v41 = vld [vmem:[%s1 + $0x18] sm:$0xff]
  %v42 = vld [vmem:[%s1 + $0x20] sm:$0xff]
  %v43 = vld [vmem:[%s1 + $0x28] sm:$0xff]
  %v44 = vld [vmem:[%s1 + $0x30] sm:$0xf]
  %v45 = vld [vmem:[%s1 + $0x38] sm:$0xf]
  %s46 = scalar_lea.vmem %s0, 48
  %v47 = vld [vmem:[%s46] sm:$0xff]
  %v48 = vld [vmem:[%s46 + $0x8] sm:$0xff]
  %v49 = vld [vmem:[%s46 + $0x10] sm:$0xff]
  %v50 = vld [vmem:[%s46 + $0x18] sm:$0xff]
  %v51 = vld [vmem:[%s46 + $0x20] sm:$0xff]
  %v52 = vld [vmem:[%s46 + $0x28] sm:$0xff]
  %s53 = scalar_lea.vmem %s1, 64
  %v54 = vld [vmem:[%s53] sm:$0xff]
  %v55 = vld [vmem:[%s53 + $0x8] sm:$0xff]
  %v56 = vld [vmem:[%s53 + $0x10] sm:$0xff]
  %v57 = vld [vmem:[%s53 + $0x18] sm:$0xff]
  %v58 = vld [vmem:[%s53 + $0x20] sm:$0xff]
  %v59 = vld [vmem:[%s53 + $0x28] sm:$0xff]
  %v60 = vld [vmem:[%s53 + $0x30] sm:$0xf]
  %v61 = vld [vmem:[%s53 + $0x38] sm:$0xf]
  %vm62 = vcmask 228352
  %v64 = vsel %vm62, %v47, 0
  %v67 = vsel %vm62, %v48, 0
  %v70 = vsel %vm62, %v49, 0
  %v73 = vsel %vm62, %v50, 0
  %v76 = vsel %vm62, %v51, 0
  %v79 = vsel %vm62, %v52, 0
  %vm81 = vcmask 1043456
  %v83 = vsel %vm81, %v60, 0
  %v86 = vsel %vm81, %v61, 0
  %88 = vmatprep.subr.mxu0 %v55
  %89 = vmatpush1.msra.mxu0 %v54
  %90 = vmatprep.subr.mxu0 %v57
  %91 = vmatpush1.msra.mxu0 %v56
  %92 = vmatprep.subr.mxu0 %v59
  %93 = vmatpush1.msra.mxu0 %v58
  %94 = vmatprep.subr.mxu0 %v86
  %95 = vmatpush1.msra.mxu0 %v83
  %96 = vmatprep.subr.mxu0 0.0
  %97 = vmatpush1.msra.mxu0 0.0
  %98 = vmatprep.subr.mxu0 0.0
  %99 = vmatpush1.msra.mxu0 0.0
  %100 = vmatprep.subr.mxu0 0.0
  %101 = vmatpush1.msra.mxu0 0.0
  %102 = vmatprep.subr.mxu0 0.0
  %103 = vmatpush1.msra.mxu0 0.0
  %104 = vmatprep.subr.mxu0 0.0
  %105 = vmatpush1.msra.mxu0 0.0
  %106 = vmatprep.subr.mxu0 0.0
  %107 = vmatpush1.msra.mxu0 0.0
  %108 = vmatprep.subr.mxu0 0.0
  %109 = vmatpush1.msra.mxu0 0.0
  %110 = vmatprep.subr.mxu0 0.0
  %111 = vmatpush1.msra.mxu0 0.0
  %112 = vmatprep.subr.mxu0 0.0
  %113 = vmatpush1.msra.mxu0 0.0
  %114 = vmatprep.subr.mxu0 0.0
  %115 = vmatpush1.msra.mxu0 0.0
  %116 = vmatprep.subr.mxu0 0.0
  %117 = vmatpush1.msra.mxu0 0.0
  %118 = vmatprep.subr.mxu0 0.0
  %119 = vmatpush1.msra.mxu0 0.0
  %120 = vmatprep.subr.mxu0 0.0
  %121 = vmatpush1.msra.mxu0 0.0
  %122 = vmatprep.subr.mxu0 0.0
  %123 = vmatpush1.msra.mxu0 0.0
  %124 = vmatprep.subr.mxu0 0.0
  %125 = vmatpush1.msra.mxu0 0.0
  %126 = vmatprep.subr.mxu0 0.0
  %127 = vmatpush1.msra.mxu0 0.0
  %128 = vmatprep.subr.mxu0 0.0
  %129 = vmatpush1.msra.mxu0 0.0
  %130 = vmatprep.subr.mxu0 0.0
  %131 = vmatpush1.msra.mxu0 0.0
  %132 = vmatprep.subr.mxu0 0.0
  %133 = vmatpush1.msra.mxu0 0.0
  %134 = vmatprep.subr.mxu0 0.0
  %135 = vmatpush1.msra.mxu0 0.0
  %136 = vmatprep.subr.mxu0 0.0
  %137 = vmatpush1.msra.mxu0 0.0
  %138 = vmatprep.subr.mxu0 0.0
  %139 = vmatpush1.msra.mxu0 0.0
  %140 = vmatprep.subr.mxu0 0.0
  %141 = vmatpush1.msra.mxu0 0.0
  %142 = vmatprep.subr.mxu0 0.0
  %143 = vmatpush1.msra.mxu0 0.0
  %144 = vmatprep.subr.mxu0 0.0
  %145 = vmatpush1.msra.mxu0 0.0
  %146 = vmatprep.subr.mxu0 0.0
  %147 = vmatpush1.msra.mxu0 0.0
  %148 = vmatprep.subr.mxu0 0.0
  %149 = vmatpush1.msra.mxu0 0.0
  %150 = vmatprep.subr.mxu0 0.0
  %151 = vmatpush1.msra.mxu0 0.0
  %152 = vmatprep.mubr.f32.mxu0 0.0
  %153 = vmatmul.mubr.f32.gmra.mrb[0].mxu0 %v64
  %v154 = vpop.f32.mrb[0].mxu0
  %v155 = vadd.f32 0.0, %v154
  %v156 = vpop.f32.mrb[0].mxu0
  %v157 = vadd.f32 0.0, %v156
  %158 = vmatprep.mubr.f32.mxu0 0.0
  %159 = vmatmul.mubr.f32.gmra.mrb[0].mxu0 %v67
  %v160 = vpop.f32.mrb[0].mxu0
  %v161 = vadd.f32 0.0, %v160
  %v162 = vpop.f32.mrb[0].mxu0
  %v163 = vadd.f32 0.0, %v162
  %164 = vmatprep.mubr.f32.mxu0 0.0
  %165 = vmatmul.mubr.f32.gmra.mrb[0].mxu0 %v70
  %v166 = vpop.f32.mrb[0].mxu0
  %v167 = vadd.f32 0.0, %v166
  %v168 = vpop.f32.mrb[0].mxu0
  %v169 = vadd.f32 0.0, %v168
  %170 = vmatprep.mubr.f32.mxu0 0.0
  %171 = vmatmul.mubr.f32.gmra.mrb[0].mxu0 %v73
  %v172 = vpop.f32.mrb[0].mxu0
  %v173 = vadd.f32 0.0, %v172
  %v174 = vpop.f32.mrb[0].mxu0
  %v175 = vadd.f32 0.0, %v174
  %176 = vmatprep.mubr.f32.mxu0 0.0
  %177 = vmatmul.mubr.f32.gmra.mrb[0].mxu0 %v76
  %v178 = vpop.f32.mrb[0].mxu0
  %v179 = vadd.f32 0.0, %v178
  %v180 = vpop.f32.mrb[0].mxu0
  %v181 = vadd.f32 0.0, %v180
  %182 = vmatprep.mubr.f32.mxu0 0.0
  %183 = vmatmul.mubr.f32.gmra.mrb[0].mxu0 %v79
  %v184 = vpop.f32.mrb[0].mxu0
  %v185 = vadd.f32 0.0, %v184
  %v186 = vpop.f32.mrb[0].mxu0
  %v187 = vadd.f32 0.0, %v186
  %188 = vdwg.mxu0
  %v190 = vsel %vm62, %v32, 0
  %v193 = vsel %vm62, %v33, 0
  %v196 = vsel %vm62, %v34, 0
  %v199 = vsel %vm62, %v35, 0
  %v202 = vsel %vm62, %v36, 0
  %v205 = vsel %vm62, %v37, 0
  %v208 = vsel %vm81, %v44, 0
  %v211 = vsel %vm81, %v45, 0
  %213 = vmatprep.subr.mxu0 %v39
  %214 = vmatpush1.msra.mxu0 %v38
  %215 = vmatprep.subr.mxu0 %v41
  %216 = vmatpush1.msra.mxu0 %v40
  %217 = vmatprep.subr.mxu0 %v43
  %218 = vmatpush1.msra.mxu0 %v42
  %219 = vmatprep.subr.mxu0 %v211
  %220 = vmatpush1.msra.mxu0 %v208
  %221 = vmatprep.subr.mxu0 0.0
  %222 = vmatpush1.msra.mxu0 0.0
  %223 = vmatprep.subr.mxu0 0.0
  %224 = vmatpush1.msra.mxu0 0.0
  %225 = vmatprep.subr.mxu0 0.0
  %226 = vmatpush1.msra.mxu0 0.0
  %227 = vmatprep.subr.mxu0 0.0
  %228 = vmatpush1.msra.mxu0 0.0
  %229 = vmatprep.subr.mxu0 0.0
  %230 = vmatpush1.msra.mxu0 0.0
  %231 = vmatprep.subr.mxu0 0.0
  %232 = vmatpush1.msra.mxu0 0.0
  %233 = vmatprep.subr.mxu0 0.0
  %234 = vmatpush1.msra.mxu0 0.0
  %235 = vmatprep.subr.mxu0 0.0
  %236 = vmatpush1.msra.mxu0 0.0
  %237 = vmatprep.subr.mxu0 0.0
  %238 = vmatpush1.msra.mxu0 0.0
  %239 = vmatprep.subr.mxu0 0.0
  %240 = vmatpush1.msra.mxu0 0.0
  %241 = vmatprep.subr.mxu0 0.0
  %242 = vmatpush1.msra.mxu0 0.0
  %243 = vmatprep.subr.mxu0 0.0
  %244 = vmatpush1.msra.mxu0 0.0
  %245 = vmatprep.subr.mxu0 0.0
  %246 = vmatpush1.msra.mxu0 0.0
  %247 = vmatprep.subr.mxu0 0.0
  %248 = vmatpush1.msra.mxu0 0.0
  %249 = vmatprep.subr.mxu0 0.0
  %250 = vmatpush1.msra.mxu0 0.0
  %251 = vmatprep.subr.mxu0 0.0
  %252 = vmatpush1.msra.mxu0 0.0
  %253 = vmatprep.subr.mxu0 0.0
  %254 = vmatpush1.msra.mxu0 0.0
  %255 = vmatprep.subr.mxu0 0.0
  %256 = vmatpush1.msra.mxu0 0.0
  %257 = vmatprep.subr.mxu0 0.0
  %258 = vmatpush1.msra.mxu0 0.0
  %259 = vmatprep.subr.mxu0 0.0
  %260 = vmatpush1.msra.mxu0 0.0
  %261 = vmatprep.subr.mxu0 0.0
  %262 = vmatpush1.msra.mxu0 0.0
  %263 = vmatprep.subr.mxu0 0.0
  %264 = vmatpush1.msra.mxu0 0.0
  %265 = vmatprep.subr.mxu0 0.0
  %266 = vmatpush1.msra.mxu0 0.0
  %267 = vmatprep.subr.mxu0 0.0
  %268 = vmatpush1.msra.mxu0 0.0
  %269 = vmatprep.subr.mxu0 0.0
  %270 = vmatpush1.msra.mxu0 0.0
  %271 = vmatprep.subr.mxu0 0.0
  %272 = vmatpush1.msra.mxu0 0.0
  %273 = vmatprep.subr.mxu0 0.0
  %274 = vmatpush1.msra.mxu0 0.0
  %275 = vmatprep.subr.mxu0 0.0
  %276 = vmatpush1.msra.mxu0 0.0
  %277 = vmatprep.mubr.f32.mxu0 0.0
  %278 = vmatmul.mubr.f32.gmra.mrb[0].mxu0 %v190
  %v279 = vpop.f32.mrb[0].mxu0
  %v280 = vadd.f32 %v155, %v279
  %v281 = vpop.f32.mrb[0].mxu0
  %v282 = vadd.f32 %v157, %v281
  %283 = vmatprep.mubr.f32.mxu0 0.0
  %284 = vmatmul.mubr.f32.gmra.mrb[0].mxu0 %v193
  %v285 = vpop.f32.mrb[0].mxu0
  %v286 = vadd.f32 %v161, %v285
  %v287 = vpop.f32.mrb[0].mxu0
  %v288 = vadd.f32 %v163, %v287
  %289 = vmatprep.mubr.f32.mxu0 0.0
  %290 = vmatmul.mubr.f32.gmra.mrb[0].mxu0 %v196
  %v291 = vpop.f32.mrb[0].mxu0
  %v292 = vadd.f32 %v167, %v291
  %v293 = vpop.f32.mrb[0].mxu0
  %v294 = vadd.f32 %v169, %v293
  %295 = vmatprep.mubr.f32.mxu0 0.0
  %296 = vmatmul.mubr.f32.gmra.mrb[0].mxu0 %v199
  %v297 = vpop.f32.mrb[0].mxu0
  %v298 = vadd.f32 %v173, %v297
  %v299 = vpop.f32.mrb[0].mxu0
  %v300 = vadd.f32 %v175, %v299
  %301 = vmatprep.mubr.f32.mxu0 0.0
  %302 = vmatmul.mubr.f32.gmra.mrb[0].mxu0 %v202
  %v303 = vpop.f32.mrb[0].mxu0
  %v304 = vadd.f32 %v179, %v303
  %v305 = vpop.f32.mrb[0].mxu0
  %v306 = vadd.f32 %v181, %v305
  %307 = vmatprep.mubr.f32.mxu0 0.0
  %308 = vmatmul.mubr.f32.gmra.mrb[0].mxu0 %v205
  %v309 = vpop.f32.mrb[0].mxu0
  %v310 = vadd.f32 %v185, %v309
  %v311 = vpop.f32.mrb[0].mxu0
  %v312 = vadd.f32 %v187, %v311
  %313 = vdwg.mxu0
  %s314 = scalar_lea.vmem %s0, 96
  %v315 = vld [vmem:[%s314] sm:$0xff]
  %v316 = vld [vmem:[%s314 + $0x8] sm:$0xff]
  %v317 = vld [vmem:[%s314 + $0x10] sm:$0xff]
  %v318 = vld [vmem:[%s314 + $0x18] sm:$0xff]
  %v319 = vld [vmem:[%s314 + $0x20] sm:$0xff]
  %v320 = vld [vmem:[%s314 + $0x28] sm:$0xff]
  %s321 = scalar_lea.vmem %s1, 128
  %v322 = vld [vmem:[%s321] sm:$0xff]
  %v323 = vld [vmem:[%s321 + $0x8] sm:$0xff]
  %v324 = vld [vmem:[%s321 + $0x10] sm:$0xff]
  %v325 = vld [vmem:[%s321 + $0x18] sm:$0xff]
  %v326 = vld [vmem:[%s321 + $0x20] sm:$0xff]
  %v327 = vld [vmem:[%s321 + $0x28] sm:$0xff]
  %v328 = vld [vmem:[%s321 + $0x30] sm:$0xf]
  %v329 = vld [vmem:[%s321 + $0x38] sm:$0xf]
  %v331 = vsel %vm62, %v315, 0
  %v334 = vsel %vm62, %v316, 0
  %v337 = vsel %vm62, %v317, 0
  %v340 = vsel %vm62, %v318, 0
  %v343 = vsel %vm62, %v319, 0
  %v346 = vsel %vm62, %v320, 0
  %v349 = vsel %vm81, %v328, 0
  %v352 = vsel %vm81, %v329, 0
  %354 = vmatprep.subr.mxu0 %v323
  %355 = vmatpush1.msra.mxu0 %v322
  %356 = vmatprep.subr.mxu0 %v325
  %357 = vmatpush1.msra.mxu0 %v324
  %358 = vmatprep.subr.mxu0 %v327
  %359 = vmatpush1.msra.mxu0 %v326
  %360 = vmatprep.subr.mxu0 %v352
  %361 = vmatpush1.msra.mxu0 %v349
  %362 = vmatprep.subr.mxu0 0.0
  %363 = vmatpush1.msra.mxu0 0.0
  %364 = vmatprep.subr.mxu0 0.0
  %365 = vmatpush1.msra.mxu0 0.0
  %366 = vmatprep.subr.mxu0 0.0
  %367 = vmatpush1.msra.mxu0 0.0
  %368 = vmatprep.subr.mxu0 0.0
  %369 = vmatpush1.msra.mxu0 0.0
  %370 = vmatprep.subr.mxu0 0.0
  %371 = vmatpush1.msra.mxu0 0.0
  %372 = vmatprep.subr.mxu0 0.0
  %373 = vmatpush1.msra.mxu0 0.0
  %374 = vmatprep.subr.mxu0 0.0
  %375 = vmatpush1.msra.mxu0 0.0
  %376 = vmatprep.subr.mxu0 0.0
  %377 = vmatpush1.msra.mxu0 0.0
  %378 = vmatprep.subr.mxu0 0.0
  %379 = vmatpush1.msra.mxu0 0.0
  %380 = vmatprep.subr.mxu0 0.0
  %381 = vmatpush1.msra.mxu0 0.0
  %382 = vmatprep.subr.mxu0 0.0
  %383 = vmatpush1.msra.mxu0 0.0
  %384 = vmatprep.subr.mxu0 0.0
  %385 = vmatpush1.msra.mxu0 0.0
  %386 = vmatprep.subr.mxu0 0.0
  %387 = vmatpush1.msra.mxu0 0.0
  %388 = vmatprep.subr.mxu0 0.0
  %389 = vmatpush1.msra.mxu0 0.0
  %390 = vmatprep.subr.mxu0 0.0
  %391 = vmatpush1.msra.mxu0 0.0
  %392 = vmatprep.subr.mxu0 0.0
  %393 = vmatpush1.msra.mxu0 0.0
  %394 = vmatprep.subr.mxu0 0.0
  %395 = vmatpush1.msra.mxu0 0.0
  %396 = vmatprep.subr.mxu0 0.0
  %397 = vmatpush1.msra.mxu0 0.0
  %398 = vmatprep.subr.mxu0 0.0
  %399 = vmatpush1.msra.mxu0 0.0
  %400 = vmatprep.subr.mxu0 0.0
  %401 = vmatpush1.msra.mxu0 0.0
  %402 = vmatprep.subr.mxu0 0.0
  %403 = vmatpush1.msra.mxu0 0.0
  %404 = vmatprep.subr.mxu0 0.0
  %405 = vmatpush1.msra.mxu0 0.0
  %406 = vmatprep.subr.mxu0 0.0
  %407 = vmatpush1.msra.mxu0 0.0
  %408 = vmatprep.subr.mxu0 0.0
  %409 = vmatpush1.msra.mxu0 0.0
  %410 = vmatprep.subr.mxu0 0.0
  %411 = vmatpush1.msra.mxu0 0.0
  %412 = vmatprep.subr.mxu0 0.0
  %413 = vmatpush1.msra.mxu0 0.0
  %414 = vmatprep.subr.mxu0 0.0
  %415 = vmatpush1.msra.mxu0 0.0
  %416 = vmatprep.subr.mxu0 0.0
  %417 = vmatpush1.msra.mxu0 0.0
  %418 = vmatprep.mubr.f32.mxu0 0.0
  %419 = vmatmul.mubr.f32.gmra.mrb[0].mxu0 %v331
  %v420 = vpop.f32.mrb[0].mxu0
  %v421 = vadd.f32 0.0, %v420
  %v422 = vpop.f32.mrb[0].mxu0
  %v423 = vadd.f32 0.0, %v422
  %424 = vmatprep.mubr.f32.mxu0 0.0
  %425 = vmatmul.mubr.f32.gmra.mrb[0].mxu0 %v334
  %v426 = vpop.f32.mrb[0].mxu0
  %v427 = vadd.f32 0.0, %v426
  %v428 = vpop.f32.mrb[0].mxu0
  %v429 = vadd.f32 0.0, %v428
  %430 = vmatprep.mubr.f32.mxu0 0.0
  %431 = vmatmul.mubr.f32.gmra.mrb[0].mxu0 %v337
  %v432 = vpop.f32.mrb[0].mxu0
  %v433 = vadd.f32 0.0, %v432
  %v434 = vpop.f32.mrb[0].mxu0
  %v435 = vadd.f32 0.0, %v434
  %436 = vmatprep.mubr.f32.mxu0 0.0
  %437 = vmatmul.mubr.f32.gmra.mrb[0].mxu0 %v340
  %v438 = vpop.f32.mrb[0].mxu0
  %v439 = vadd.f32 0.0, %v438
  %v440 = vpop.f32.mrb[0].mxu0
  %v441 = vadd.f32 0.0, %v440
  %442 = vmatprep.mubr.f32.mxu0 0.0
  %443 = vmatmul.mubr.f32.gmra.mrb[0].mxu0 %v343
  %v444 = vpop.f32.mrb[0].mxu0
  %v445 = vadd.f32 0.0, %v444
  %v446 = vpop.f32.mrb[0].mxu0
  %v447 = vadd.f32 0.0, %v446
  %448 = vmatprep.mubr.f32.mxu0 0.0
  %449 = vmatmul.mubr.f32.gmra.mrb[0].mxu0 %v346
  %v450 = vpop.f32.mrb[0].mxu0
  %v451 = vadd.f32 0.0, %v450
  %v452 = vpop.f32.mrb[0].mxu0
  %v453 = vadd.f32 0.0, %v452
  %454 = vdwg.mxu0
  %v455 = vadd.f32 %v280, %v421
  %v456 = vadd.f32 %v282, %v423
  %v457 = vadd.f32 %v286, %v427
  %v458 = vadd.f32 %v288, %v429
  %v459 = vadd.f32 %v292, %v433
  %v460 = vadd.f32 %v294, %v435
  %v461 = vadd.f32 %v298, %v439
  %v462 = vadd.f32 %v300, %v441
  %v463 = vadd.f32 %v304, %v445
  %v464 = vadd.f32 %v306, %v447
  %v465 = vadd.f32 %v310, %v451
  %v466 = vadd.f32 %v312, %v453
  %s467 = scalar_lea.vmem %s0, 144
  %v468 = vld [vmem:[%s467] sm:$0xff]
  %v469 = vld [vmem:[%s467 + $0x8] sm:$0xff]
  %v470 = vld [vmem:[%s467 + $0x10] sm:$0xff]
  %v471 = vld [vmem:[%s467 + $0x18] sm:$0xff]
  %v472 = vld [vmem:[%s467 + $0x20] sm:$0xff]
  %v473 = vld [vmem:[%s467 + $0x28] sm:$0xff]
  %s474 = scalar_lea.vmem %s1, 192
  %v475 = vld [vmem:[%s474] sm:$0xff]
  %v476 = vld [vmem:[%s474 + $0x8] sm:$0xff]
  %v477 = vld [vmem:[%s474 + $0x10] sm:$0xff]
  %v478 = vld [vmem:[%s474 + $0x18] sm:$0xff]
  %v479 = vld [vmem:[%s474 + $0x20] sm:$0xff]
  %v480 = vld [vmem:[%s474 + $0x28] sm:$0xff]
  %v481 = vld [vmem:[%s474 + $0x30] sm:$0xf]
  %v482 = vld [vmem:[%s474 + $0x38] sm:$0xf]
  %v484 = vsel %vm62, %v468, 0
  %v487 = vsel %vm62, %v469, 0
  %v490 = vsel %vm62, %v470, 0
  %v493 = vsel %vm62, %v471, 0
  %v496 = vsel %vm62, %v472, 0
  %v499 = vsel %vm62, %v473, 0
  %v502 = vsel %vm81, %v481, 0
  %v505 = vsel %vm81, %v482, 0
  %507 = vmatprep.subr.mxu0 %v476
  %508 = vmatpush1.msra.mxu0 %v475
  %509 = vmatprep.subr.mxu0 %v478
  %510 = vmatpush1.msra.mxu0 %v477
  %511 = vmatprep.subr.mxu0 %v480
  %512 = vmatpush1.msra.mxu0 %v479
  %513 = vmatprep.subr.mxu0 %v505
  %514 = vmatpush1.msra.mxu0 %v502
  %515 = vmatprep.subr.mxu0 0.0
  %516 = vmatpush1.msra.mxu0 0.0
  %517 = vmatprep.subr.mxu0 0.0
  %518 = vmatpush1.msra.mxu0 0.0
  %519 = vmatprep.subr.mxu0 0.0
  %520 = vmatpush1.msra.mxu0 0.0
  %521 = vmatprep.subr.mxu0 0.0
  %522 = vmatpush1.msra.mxu0 0.0
  %523 = vmatprep.subr.mxu0 0.0
  %524 = vmatpush1.msra.mxu0 0.0
  %525 = vmatprep.subr.mxu0 0.0
  %526 = vmatpush1.msra.mxu0 0.0
  %527 = vmatprep.subr.mxu0 0.0
  %528 = vmatpush1.msra.mxu0 0.0
  %529 = vmatprep.subr.mxu0 0.0
  %530 = vmatpush1.msra.mxu0 0.0
  %531 = vmatprep.subr.mxu0 0.0
  %532 = vmatpush1.msra.mxu0 0.0
  %533 = vmatprep.subr.mxu0 0.0
  %534 = vmatpush1.msra.mxu0 0.0
  %535 = vmatprep.subr.mxu0 0.0
  %536 = vmatpush1.msra.mxu0 0.0
  %537 = vmatprep.subr.mxu0 0.0
  %538 = vmatpush1.msra.mxu0 0.0
  %539 = vmatprep.subr.mxu0 0.0
  %540 = vmatpush1.msra.mxu0 0.0
  %541 = vmatprep.subr.mxu0 0.0
  %542 = vmatpush1.msra.mxu0 0.0
  %543 = vmatprep.subr.mxu0 0.0
  %544 = vmatpush1.msra.mxu0 0.0
  %545 = vmatprep.subr.mxu0 0.0
  %546 = vmatpush1.msra.mxu0 0.0
  %547 = vmatprep.subr.mxu0 0.0
  %548 = vmatpush1.msra.mxu0 0.0
  %549 = vmatprep.subr.mxu0 0.0
  %550 = vmatpush1.msra.mxu0 0.0
  %551 = vmatprep.subr.mxu0 0.0
  %552 = vmatpush1.msra.mxu0 0.0
  %553 = vmatprep.subr.mxu0 0.0
  %554 = vmatpush1.msra.mxu0 0.0
  %555 = vmatprep.subr.mxu0 0.0
  %556 = vmatpush1.msra.mxu0 0.0
  %557 = vmatprep.subr.mxu0 0.0
  %558 = vmatpush1.msra.mxu0 0.0
  %559 = vmatprep.subr.mxu0 0.0
  %560 = vmatpush1.msra.mxu0 0.0
  %561 = vmatprep.subr.mxu0 0.0
  %562 = vmatpush1.msra.mxu0 0.0
  %563 = vmatprep.subr.mxu0 0.0
  %564 = vmatpush1.msra.mxu0 0.0
  %565 = vmatprep.subr.mxu0 0.0
  %566 = vmatpush1.msra.mxu0 0.0
  %567 = vmatprep.subr.mxu0 0.0
  %568 = vmatpush1.msra.mxu0 0.0
  %569 = vmatprep.subr.mxu0 0.0
  %570 = vmatpush1.msra.mxu0 0.0
  %571 = vmatprep.mubr.f32.mxu0 0.0
  %572 = vmatmul.mubr.f32.gmra.mrb[0].mxu0 %v484
  %v573 = vpop.f32.mrb[0].mxu0
  %v574 = vadd.f32 0.0, %v573
  %v575 = vpop.f32.mrb[0].mxu0
  %v576 = vadd.f32 0.0, %v575
  %577 = vmatprep.mubr.f32.mxu0 0.0
  %578 = vmatmul.mubr.f32.gmra.mrb[0].mxu0 %v487
  %v579 = vpop.f32.mrb[0].mxu0
  %v580 = vadd.f32 0.0, %v579
  %v581 = vpop.f32.mrb[0].mxu0
  %v582 = vadd.f32 0.0, %v581
  %583 = vmatprep.mubr.f32.mxu0 0.0
  %584 = vmatmul.mubr.f32.gmra.mrb[0].mxu0 %v490
  %v585 = vpop.f32.mrb[0].mxu0
  %v586 = vadd.f32 0.0, %v585
  %v587 = vpop.f32.mrb[0].mxu0
  %v588 = vadd.f32 0.0, %v587
  %589 = vmatprep.mubr.f32.mxu0 0.0
  %590 = vmatmul.mubr.f32.gmra.mrb[0].mxu0 %v493
  %v591 = vpop.f32.mrb[0].mxu0
  %v592 = vadd.f32 0.0, %v591
  %v593 = vpop.f32.mrb[0].mxu0
  %v594 = vadd.f32 0.0, %v593
  %595 = vmatprep.mubr.f32.mxu0 0.0
  %596 = vmatmul.mubr.f32.gmra.mrb[0].mxu0 %v496
  %v597 = vpop.f32.mrb[0].mxu0
  %v598 = vadd.f32 0.0, %v597
  %v599 = vpop.f32.mrb[0].mxu0
  %v600 = vadd.f32 0.0, %v599
  %601 = vmatprep.mubr.f32.mxu0 0.0
  %602 = vmatmul.mubr.f32.gmra.mrb[0].mxu0 %v499
  %v603 = vpop.f32.mrb[0].mxu0
  %v604 = vadd.f32 0.0, %v603
  %v605 = vpop.f32.mrb[0].mxu0
  %v606 = vadd.f32 0.0, %v605
  %607 = vdwg.mxu0
  %v608 = vadd.f32 %v455, %v574
  %v609 = vadd.f32 %v456, %v576
  %v610 = vadd.f32 %v457, %v580
  %v611 = vadd.f32 %v458, %v582
  %v612 = vadd.f32 %v459, %v586
  %v613 = vadd.f32 %v460, %v588
  %v614 = vadd.f32 %v461, %v592
  %v615 = vadd.f32 %v462, %v594
  %v616 = vadd.f32 %v463, %v598
  %v617 = vadd.f32 %v464, %v600
  %v618 = vadd.f32 %v465, %v604
  %v619 = vadd.f32 %v466, %v606
  %s620 = scalar_lea.vmem %s0, 192
  %v621 = vld [vmem:[%s620] sm:$0xff]
  %v622 = vld [vmem:[%s620 + $0x8] sm:$0xff]
  %v623 = vld [vmem:[%s620 + $0x10] sm:$0xff]
  %v624 = vld [vmem:[%s620 + $0x18] sm:$0xff]
  %v625 = vld [vmem:[%s620 + $0x20] sm:$0xff]
  %v626 = vld [vmem:[%s620 + $0x28] sm:$0xff]
  %s627 = scalar_lea.vmem %s1, 256
  %v628 = vld [vmem:[%s627] sm:$0xff]
  %v629 = vld [vmem:[%s627 + $0x8] sm:$0xff]
  %v630 = vld [vmem:[%s627 + $0x10] sm:$0xff]
  %v631 = vld [vmem:[%s627 + $0x18] sm:$0xff]
  %v632 = vld [vmem:[%s627 + $0x20] sm:$0xff]
  %v633 = vld [vmem:[%s627 + $0x28] sm:$0xff]
  %v634 = vld [vmem:[%s627 + $0x30] sm:$0xf]
  %v635 = vld [vmem:[%s627 + $0x38] sm:$0xf]
  %v637 = vsel %vm62, %v621, 0
  %v640 = vsel %vm62, %v622, 0
  %v643 = vsel %vm62, %v623, 0
  %v646 = vsel %vm62, %v624, 0
  %v649 = vsel %vm62, %v625, 0
  %v652 = vsel %vm62, %v626, 0
  %v655 = vsel %vm81, %v634, 0
  %v658 = vsel %vm81, %v635, 0
  %660 = vmatprep.subr.mxu0 %v629
  %661 = vmatpush1.msra.mxu0 %v628
  %662 = vmatprep.subr.mxu0 %v631
  %663 = vmatpush1.msra.mxu0 %v630
  %664 = vmatprep.subr.mxu0 %v633
  %665 = vmatpush1.msra.mxu0 %v632
  %666 = vmatprep.subr.mxu0 %v658
  %667 = vmatpush1.msra.mxu0 %v655
  %668 = vmatprep.subr.mxu0 0.0
  %669 = vmatpush1.msra.mxu0 0.0
  %670 = vmatprep.subr.mxu0 0.0
  %671 = vmatpush1.msra.mxu0 0.0
  %672 = vmatprep.subr.mxu0 0.0
  %673 = vmatpush1.msra.mxu0 0.0
  %674 = vmatprep.subr.mxu0 0.0
  %675 = vmatpush1.msra.mxu0 0.0
  %676 = vmatprep.subr.mxu0 0.0
  %677 = vmatpush1.msra.mxu0 0.0
  %678 = vmatprep.subr.mxu0 0.0
  %679 = vmatpush1.msra.mxu0 0.0
  %680 = vmatprep.subr.mxu0 0.0
  %681 = vmatpush1.msra.mxu0 0.0
  %682 = vmatprep.subr.mxu0 0.0
  %683 = vmatpush1.msra.mxu0 0.0
  %684 = vmatprep.subr.mxu0 0.0
  %685 = vmatpush1.msra.mxu0 0.0
  %686 = vmatprep.subr.mxu0 0.0
  %687 = vmatpush1.msra.mxu0 0.0
  %688 = vmatprep.subr.mxu0 0.0
  %689 = vmatpush1.msra.mxu0 0.0
  %690 = vmatprep.subr.mxu0 0.0
  %691 = vmatpush1.msra.mxu0 0.0
  %692 = vmatprep.subr.mxu0 0.0
  %693 = vmatpush1.msra.mxu0 0.0
  %694 = vmatprep.subr.mxu0 0.0
  %695 = vmatpush1.msra.mxu0 0.0
  %696 = vmatprep.subr.mxu0 0.0
  %697 = vmatpush1.msra.mxu0 0.0
  %698 = vmatprep.subr.mxu0 0.0
  %699 = vmatpush1.msra.mxu0 0.0
  %700 = vmatprep.subr.mxu0 0.0
  %701 = vmatpush1.msra.mxu0 0.0
  %702 = vmatprep.subr.mxu0 0.0
  %703 = vmatpush1.msra.mxu0 0.0
  %704 = vmatprep.subr.mxu0 0.0
  %705 = vmatpush1.msra.mxu0 0.0
  %706 = vmatprep.subr.mxu0 0.0
  %707 = vmatpush1.msra.mxu0 0.0
  %708 = vmatprep.subr.mxu0 0.0
  %709 = vmatpush1.msra.mxu0 0.0
  %710 = vmatprep.subr.mxu0 0.0
  %711 = vmatpush1.msra.mxu0 0.0
  %712 = vmatprep.subr.mxu0 0.0
  %713 = vmatpush1.msra.mxu0 0.0
  %714 = vmatprep.subr.mxu0 0.0
  %715 = vmatpush1.msra.mxu0 0.0
  %716 = vmatprep.subr.mxu0 0.0
  %717 = vmatpush1.msra.mxu0 0.0
  %718 = vmatprep.subr.mxu0 0.0
  %719 = vmatpush1.msra.mxu0 0.0
  %720 = vmatprep.subr.mxu0 0.0
  %721 = vmatpush1.msra.mxu0 0.0
  %722 = vmatprep.subr.mxu0 0.0
  %723 = vmatpush1.msra.mxu0 0.0
  %724 = vmatprep.mubr.f32.mxu0 0.0
  %725 = vmatmul.mubr.f32.gmra.mrb[0].mxu0 %v637
  %v726 = vpop.f32.mrb[0].mxu0
  %v727 = vadd.f32 0.0, %v726
  %v728 = vpop.f32.mrb[0].mxu0
  %v729 = vadd.f32 0.0, %v728
  %730 = vmatprep.mubr.f32.mxu0 0.0
  %731 = vmatmul.mubr.f32.gmra.mrb[0].mxu0 %v640
  %v732 = vpop.f32.mrb[0].mxu0
  %v733 = vadd.f32 0.0, %v732
  %v734 = vpop.f32.mrb[0].mxu0
  %v735 = vadd.f32 0.0, %v734
  %736 = vmatprep.mubr.f32.mxu0 0.0
  %737 = vmatmul.mubr.f32.gmra.mrb[0].mxu0 %v643
  %v738 = vpop.f32.mrb[0].mxu0
  %v739 = vadd.f32 0.0, %v738
  %v740 = vpop.f32.mrb[0].mxu0
  %v741 = vadd.f32 0.0, %v740
  %742 = vmatprep.mubr.f32.mxu0 0.0
  %743 = vmatmul.mubr.f32.gmra.mrb[0].mxu0 %v646
  %v744 = vpop.f32.mrb[0].mxu0
  %v745 = vadd.f32 0.0, %v744
  %v746 = vpop.f32.mrb[0].mxu0
  %v747 = vadd.f32 0.0, %v746
  %748 = vmatprep.mubr.f32.mxu0 0.0
  %749 = vmatmul.mubr.f32.gmra.mrb[0].mxu0 %v649
  %v750 = vpop.f32.mrb[0].mxu0
  %v751 = vadd.f32 0.0, %v750
  %v752 = vpop.f32.mrb[0].mxu0
  %v753 = vadd.f32 0.0, %v752
  %754 = vmatprep.mubr.f32.mxu0 0.0
  %755 = vmatmul.mubr.f32.gmra.mrb[0].mxu0 %v652
  %v756 = vpop.f32.mrb[0].mxu0
  %v757 = vadd.f32 0.0, %v756
  %v758 = vpop.f32.mrb[0].mxu0
  %v759 = vadd.f32 0.0, %v758
  %760 = vdwg.mxu0
  %v761 = vadd.f32 %v608, %v727
  %v762 = vadd.f32 %v609, %v729
  %v763 = vadd.f32 %v610, %v733
  %v764 = vadd.f32 %v611, %v735
  %v765 = vadd.f32 %v612, %v739
  %v766 = vadd.f32 %v613, %v741
  %v767 = vadd.f32 %v614, %v745
  %v768 = vadd.f32 %v615, %v747
  %v769 = vadd.f32 %v616, %v751
  %v770 = vadd.f32 %v617, %v753
  %v771 = vadd.f32 %v618, %v757
  %v772 = vadd.f32 %v619, %v759
  %v773 = vmax.f32 %v761, %v762
  %v774 = vmax.f32 %v763, %v764
  %v775 = vmax.f32 %v765, %v766
  %v776 = vmax.f32 %v767, %v768
  %v777 = vmax.f32 %v769, %v770
  %v778 = vmax.f32 %v771, %v772
  %779 = vmatprep.subr.mxu0 %v55
  %780 = vmatpush1.msra.mxu0 %v54
  %781 = vmatprep.subr.mxu0 %v57
  %782 = vmatpush1.msra.mxu0 %v56
  %783 = vmatprep.subr.mxu0 %v59
  %784 = vmatpush1.msra.mxu0 %v58
  %785 = vmatprep.subr.mxu0 %v86
  %786 = vmatpush1.msra.mxu0 %v83
  %787 = vmatprep.subr.mxu0 0.0
  %788 = vmatpush1.msra.mxu0 0.0
  %789 = vmatprep.subr.mxu0 0.0
  %790 = vmatpush1.msra.mxu0 0.0
  %791 = vmatprep.subr.mxu0 0.0
  %792 = vmatpush1.msra.mxu0 0.0
  %793 = vmatprep.subr.mxu0 0.0
  %794 = vmatpush1.msra.mxu0 0.0
  %795 = vmatprep.subr.mxu0 0.0
  %796 = vmatpush1.msra.mxu0 0.0
  %797 = vmatprep.subr.mxu0 0.0
  %798 = vmatpush1.msra.mxu0 0.0
  %799 = vmatprep.subr.mxu0 0.0
  %800 = vmatpush1.msra.mxu0 0.0
  %801 = vmatprep.subr.mxu0 0.0
  %802 = vmatpush1.msra.mxu0 0.0
  %803 = vmatprep.subr.mxu0 0.0
  %804 = vmatpush1.msra.mxu0 0.0
  %805 = vmatprep.subr.mxu0 0.0
  %806 = vmatpush1.msra.mxu0 0.0
  %807 = vmatprep.subr.mxu0 0.0
  %808 = vmatpush1.msra.mxu0 0.0
  %809 = vmatprep.subr.mxu0 0.0
  %810 = vmatpush1.msra.mxu0 0.0
  %811 = vmatprep.subr.mxu0 0.0
  %812 = vmatpush1.msra.mxu0 0.0
  %813 = vmatprep.subr.mxu0 0.0
  %814 = vmatpush1.msra.mxu0 0.0
  %815 = vmatprep.subr.mxu0 0.0
  %816 = vmatpush1.msra.mxu0 0.0
  %817 = vmatprep.subr.mxu0 0.0
  %818 = vmatpush1.msra.mxu0 0.0
  %819 = vmatprep.subr.mxu0 0.0
  %820 = vmatpush1.msra.mxu0 0.0
  %821 = vmatprep.subr.mxu0 0.0
  %822 = vmatpush1.msra.mxu0 0.0
  %823 = vmatprep.subr.mxu0 0.0
  %824 = vmatpush1.msra.mxu0 0.0
  %825 = vmatprep.subr.mxu0 0.0
  %826 = vmatpush1.msra.mxu0 0.0
  %827 = vmatprep.subr.mxu0 0.0
  %828 = vmatpush1.msra.mxu0 0.0
  %829 = vmatprep.subr.mxu0 0.0
  %830 = vmatpush1.msra.mxu0 0.0
  %831 = vmatprep.subr.mxu0 0.0
  %832 = vmatpush1.msra.mxu0 0.0
  %833 = vmatprep.subr.mxu0 0.0
  %834 = vmatpush1.msra.mxu0 0.0
  %835 = vmatprep.subr.mxu0 0.0
  %836 = vmatpush1.msra.mxu0 0.0
  %837 = vmatprep.subr.mxu0 0.0
  %838 = vmatpush1.msra.mxu0 0.0
  %839 = vmatprep.subr.mxu0 0.0
  %840 = vmatpush1.msra.mxu0 0.0
  %841 = vmatprep.subr.mxu0 0.0
  %842 = vmatpush1.msra.mxu0 0.0
  %843 = vmatprep.mubr.f32.mxu0 0.0
  %844 = vmatmul.mubr.f32.gmra.mrb[0].mxu0 %v331
  %v845 = vpop.f32.mrb[0].mxu0
  %v846 = vadd.f32 0.0, %v845
  %v847 = vpop.f32.mrb[0].mxu0
  %v848 = vadd.f32 0.0, %v847
  %849 = vmatprep.mubr.f32.mxu0 0.0
  %850 = vmatmul.mubr.f32.gmra.mrb[0].mxu0 %v334
  %v851 = vpop.f32.mrb[0].mxu0
  %v852 = vadd.f32 0.0, %v851
  %v853 = vpop.f32.mrb[0].mxu0
  %v854 = vadd.f32 0.0, %v853
  %855 = vmatprep.mubr.f32.mxu0 0.0
  %856 = vmatmul.mubr.f32.gmra.mrb[0].mxu0 %v337
  %v857 = vpop.f32.mrb[0].mxu0
  %v858 = vadd.f32 0.0, %v857
  %v859 = vpop.f32.mrb[0].mxu0
  %v860 = vadd.f32 0.0, %v859
  %861 = vmatprep.mubr.f32.mxu0 0.0
  %862 = vmatmul.mubr.f32.gmra.mrb[0].mxu0 %v340
  %v863 = vpop.f32.mrb[0].mxu0
  %v864 = vadd.f32 0.0, %v863
  %v865 = vpop.f32.mrb[0].mxu0
  %v866 = vadd.f32 0.0, %v865
  %867 = vmatprep.mubr.f32.mxu0 0.0
  %868 = vmatmul.mubr.f32.gmra.mrb[0].mxu0 %v343
  %v869 = vpop.f32.mrb[0].mxu0
  %v870 = vadd.f32 0.0, %v869
  %v871 = vpop.f32.mrb[0].mxu0
  %v872 = vadd.f32 0.0, %v871
  %873 = vmatprep.mubr.f32.mxu0 0.0
  %874 = vmatmul.mubr.f32.gmra.mrb[0].mxu0 %v346
  %v875 = vpop.f32.mrb[0].mxu0
  %v876 = vadd.f32 0.0, %v875
  %v877 = vpop.f32.mrb[0].mxu0
  %v878 = vadd.f32 0.0, %v877
  %879 = vdwg.mxu0
  %880 = vmatprep.subr.mxu0 %v39
  %881 = vmatpush1.msra.mxu0 %v38
  %882 = vmatprep.subr.mxu0 %v41
  %883 = vmatpush1.msra.mxu0 %v40
  %884 = vmatprep.subr.mxu0 %v43
  %885 = vmatpush1.msra.mxu0 %v42
  %886 = vmatprep.subr.mxu0 %v211
  %887 = vmatpush1.msra.mxu0 %v208
  %888 = vmatprep.subr.mxu0 0.0
  %889 = vmatpush1.msra.mxu0 0.0
  %890 = vmatprep.subr.mxu0 0.0
  %891 = vmatpush1.msra.mxu0 0.0
  %892 = vmatprep.subr.mxu0 0.0
  %893 = vmatpush1.msra.mxu0 0.0
  %894 = vmatprep.subr.mxu0 0.0
  %895 = vmatpush1.msra.mxu0 0.0
  %896 = vmatprep.subr.mxu0 0.0
  %897 = vmatpush1.msra.mxu0 0.0
  %898 = vmatprep.subr.mxu0 0.0
  %899 = vmatpush1.msra.mxu0 0.0
  %900 = vmatprep.subr.mxu0 0.0
  %901 = vmatpush1.msra.mxu0 0.0
  %902 = vmatprep.subr.mxu0 0.0
  %903 = vmatpush1.msra.mxu0 0.0
  %904 = vmatprep.subr.mxu0 0.0
  %905 = vmatpush1.msra.mxu0 0.0
  %906 = vmatprep.subr.mxu0 0.0
  %907 = vmatpush1.msra.mxu0 0.0
  %908 = vmatprep.subr.mxu0 0.0
  %909 = vmatpush1.msra.mxu0 0.0
  %910 = vmatprep.subr.mxu0 0.0
  %911 = vmatpush1.msra.mxu0 0.0
  %912 = vmatprep.subr.mxu0 0.0
  %913 = vmatpush1.msra.mxu0 0.0
  %914 = vmatprep.subr.mxu0 0.0
  %915 = vmatpush1.msra.mxu0 0.0
  %916 = vmatprep.subr.mxu0 0.0
  %917 = vmatpush1.msra.mxu0 0.0
  %918 = vmatprep.subr.mxu0 0.0
  %919 = vmatpush1.msra.mxu0 0.0
  %920 = vmatprep.subr.mxu0 0.0
  %921 = vmatpush1.msra.mxu0 0.0
  %922 = vmatprep.subr.mxu0 0.0
  %923 = vmatpush1.msra.mxu0 0.0
  %924 = vmatprep.subr.mxu0 0.0
  %925 = vmatpush1.msra.mxu0 0.0
  %926 = vmatprep.subr.mxu0 0.0
  %927 = vmatpush1.msra.mxu0 0.0
  %928 = vmatprep.subr.mxu0 0.0
  %929 = vmatpush1.msra.mxu0 0.0
  %930 = vmatprep.subr.mxu0 0.0
  %931 = vmatpush1.msra.mxu0 0.0
  %932 = vmatprep.subr.mxu0 0.0
  %933 = vmatpush1.msra.mxu0 0.0
  %934 = vmatprep.subr.mxu0 0.0
  %935 = vmatpush1.msra.mxu0 0.0
  %936 = vmatprep.subr.mxu0 0.0
  %937 = vmatpush1.msra.mxu0 0.0
  %938 = vmatprep.subr.mxu0 0.0
  %939 = vmatpush1.msra.mxu0 0.0
  %940 = vmatprep.subr.mxu0 0.0
  %941 = vmatpush1.msra.mxu0 0.0
  %942 = vmatprep.subr.mxu0 0.0
  %943 = vmatpush1.msra.mxu0 0.0
  %944 = vmatprep.mubr.f32.mxu0 0.0
  %945 = vmatmul.mubr.f32.gmra.mrb[0].mxu0 %v64
  %v946 = vpop.f32.mrb[0].mxu0
  %v947 = vadd.f32 %v846, %v946
  %v948 = vpop.f32.mrb[0].mxu0
  %v949 = vadd.f32 %v848, %v948
  %950 = vmatprep.mubr.f32.mxu0 0.0
  %951 = vmatmul.mubr.f32.gmra.mrb[0].mxu0 %v67
  %v952 = vpop.f32.mrb[0].mxu0
  %v953 = vadd.f32 %v852, %v952
  %v954 = vpop.f32.mrb[0].mxu0
  %v955 = vadd.f32 %v854, %v954
  %956 = vmatprep.mubr.f32.mxu0 0.0
  %957 = vmatmul.mubr.f32.gmra.mrb[0].mxu0 %v70
  %v958 = vpop.f32.mrb[0].mxu0
  %v959 = vadd.f32 %v858, %v958
  %v960 = vpop.f32.mrb[0].mxu0
  %v961 = vadd.f32 %v860, %v960
  %962 = vmatprep.mubr.f32.mxu0 0.0
  %963 = vmatmul.mubr.f32.gmra.mrb[0].mxu0 %v73
  %v964 = vpop.f32.mrb[0].mxu0
  %v965 = vadd.f32 %v864, %v964
  %v966 = vpop.f32.mrb[0].mxu0
  %v967 = vadd.f32 %v866, %v966
  %968 = vmatprep.mubr.f32.mxu0 0.0
  %969 = vmatmul.mubr.f32.gmra.mrb[0].mxu0 %v76
  %v970 = vpop.f32.mrb[0].mxu0
  %v971 = vadd.f32 %v870, %v970
  %v972 = vpop.f32.mrb[0].mxu0
  %v973 = vadd.f32 %v872, %v972
  %974 = vmatprep.mubr.f32.mxu0 0.0
  %975 = vmatmul.mubr.f32.gmra.mrb[0].mxu0 %v79
  %v976 = vpop.f32.mrb[0].mxu0
  %v977 = vadd.f32 %v876, %v976
  %v978 = vpop.f32.mrb[0].mxu0
  %v979 = vadd.f32 %v878, %v978
  %980 = vdwg.mxu0
  %981 = vmatprep.subr.mxu0 %v323
  %982 = vmatpush1.msra.mxu0 %v322
  %983 = vmatprep.subr.mxu0 %v325
  %984 = vmatpush1.msra.mxu0 %v324
  %985 = vmatprep.subr.mxu0 %v327
  %986 = vmatpush1.msra.mxu0 %v326
  %987 = vmatprep.subr.mxu0 %v352
  %988 = vmatpush1.msra.mxu0 %v349
  %989 = vmatprep.subr.mxu0 0.0
  %990 = vmatpush1.msra.mxu0 0.0
  %991 = vmatprep.subr.mxu0 0.0
  %992 = vmatpush1.msra.mxu0 0.0
  %993 = vmatprep.subr.mxu0 0.0
  %994 = vmatpush1.msra.mxu0 0.0
  %995 = vmatprep.subr.mxu0 0.0
  %996 = vmatpush1.msra.mxu0 0.0
  %997 = vmatprep.subr.mxu0 0.0
  %998 = vmatpush1.msra.mxu0 0.0
  %999 = vmatprep.subr.mxu0 0.0
  %1000 = vmatpush1.msra.mxu0 0.0
  %1001 = vmatprep.subr.mxu0 0.0
  %1002 = vmatpush1.msra.mxu0 0.0
  %1003 = vmatprep.subr.mxu0 0.0
  %1004 = vmatpush1.msra.mxu0 0.0
  %1005 = vmatprep.subr.mxu0 0.0
  %1006 = vmatpush1.msra.mxu0 0.0
  %1007 = vmatprep.subr.mxu0 0.0
  %1008 = vmatpush1.msra.mxu0 0.0
  %1009 = vmatprep.subr.mxu0 0.0
  %1010 = vmatpush1.msra.mxu0 0.0
  %1011 = vmatprep.subr.mxu0 0.0
  %1012 = vmatpush1.msra.mxu0 0.0
  %1013 = vmatprep.subr.mxu0 0.0
  %1014 = vmatpush1.msra.mxu0 0.0
  %1015 = vmatprep.subr.mxu0 0.0
  %1016 = vmatpush1.msra.mxu0 0.0
  %1017 = vmatprep.subr.mxu0 0.0
  %1018 = vmatpush1.msra.mxu0 0.0
  %1019 = vmatprep.subr.mxu0 0.0
  %1020 = vmatpush1.msra.mxu0 0.0
  %1021 = vmatprep.subr.mxu0 0.0
  %1022 = vmatpush1.msra.mxu0 0.0
  %1023 = vmatprep.subr.mxu0 0.0
  %1024 = vmatpush1.msra.mxu0 0.0
  %1025 = vmatprep.subr.mxu0 0.0
  %1026 = vmatpush1.msra.mxu0 0.0
  %1027 = vmatprep.subr.mxu0 0.0
  %1028 = vmatpush1.msra.mxu0 0.0
  %1029 = vmatprep.subr.mxu0 0.0
  %1030 = vmatpush1.msra.mxu0 0.0
  %1031 = vmatprep.subr.mxu0 0.0
  %1032 = vmatpush1.msra.mxu0 0.0
  %1033 = vmatprep.subr.mxu0 0.0
  %1034 = vmatpush1.msra.mxu0 0.0
  %1035 = vmatprep.subr.mxu0 0.0
  %1036 = vmatpush1.msra.mxu0 0.0
  %1037 = vmatprep.subr.mxu0 0.0
  %1038 = vmatpush1.msra.mxu0 0.0
  %1039 = vmatprep.subr.mxu0 0.0
  %1040 = vmatpush1.msra.mxu0 0.0
  %1041 = vmatprep.subr.mxu0 0.0
  %1042 = vmatpush1.msra.mxu0 0.0
  %1043 = vmatprep.subr.mxu0 0.0
  %1044 = vmatpush1.msra.mxu0 0.0
  %1045 = vmatprep.mubr.f32.mxu0 0.0
  %1046 = vmatmul.mubr.f32.gmra.mrb[0].mxu0 %v484
  %v1047 = vpop.f32.mrb[0].mxu0
  %v1048 = vadd.f32 0.0, %v1047
  %v1049 = vpop.f32.mrb[0].mxu0
  %v1050 = vadd.f32 0.0, %v1049
  %1051 = vmatprep.mubr.f32.mxu0 0.0
  %1052 = vmatmul.mubr.f32.gmra.mrb[0].mxu0 %v487
  %v1053 = vpop.f32.mrb[0].mxu0
  %v1054 = vadd.f32 0.0, %v1053
  %v1055 = vpop.f32.mrb[0].mxu0
  %v1056 = vadd.f32 0.0, %v1055
  %1057 = vmatprep.mubr.f32.mxu0 0.0
  %1058 = vmatmul.mubr.f32.gmra.mrb[0].mxu0 %v490
  %v1059 = vpop.f32.mrb[0].mxu0
  %v1060 = vadd.f32 0.0, %v1059
  %v1061 = vpop.f32.mrb[0].mxu0
  %v1062 = vadd.f32 0.0, %v1061
  %1063 = vmatprep.mubr.f32.mxu0 0.0
  %1064 = vmatmul.mubr.f32.gmra.mrb[0].mxu0 %v493
  %v1065 = vpop.f32.mrb[0].mxu0
  %v1066 = vadd.f32 0.0, %v1065
  %v1067 = vpop.f32.mrb[0].mxu0
  %v1068 = vadd.f32 0.0, %v1067
  %1069 = vmatprep.mubr.f32.mxu0 0.0
  %1070 = vmatmul.mubr.f32.gmra.mrb[0].mxu0 %v496
  %v1071 = vpop.f32.mrb[0].mxu0
  %v1072 = vadd.f32 0.0, %v1071
  %v1073 = vpop.f32.mrb[0].mxu0
  %v1074 = vadd.f32 0.0, %v1073
  %1075 = vmatprep.mubr.f32.mxu0 0.0
  %1076 = vmatmul.mubr.f32.gmra.mrb[0].mxu0 %v499
  %v1077 = vpop.f32.mrb[0].mxu0
  %v1078 = vadd.f32 0.0, %v1077
  %v1079 = vpop.f32.mrb[0].mxu0
  %v1080 = vadd.f32 0.0, %v1079
  %1081 = vdwg.mxu0
  %v1082 = vadd.f32 %v947, %v1048
  %v1083 = vadd.f32 %v949, %v1050
  %v1084 = vadd.f32 %v953, %v1054
  %v1085 = vadd.f32 %v955, %v1056
  %v1086 = vadd.f32 %v959, %v1060
  %v1087 = vadd.f32 %v961, %v1062
  %v1088 = vadd.f32 %v965, %v1066
  %v1089 = vadd.f32 %v967, %v1068
  %v1090 = vadd.f32 %v971, %v1072
  %v1091 = vadd.f32 %v973, %v1074
  %v1092 = vadd.f32 %v977, %v1078
  %v1093 = vadd.f32 %v979, %v1080
  %1094 = vmatprep.subr.mxu0 %v476
  %1095 = vmatpush1.msra.mxu0 %v475
  %1096 = vmatprep.subr.mxu0 %v478
  %1097 = vmatpush1.msra.mxu0 %v477
  %1098 = vmatprep.subr.mxu0 %v480
  %1099 = vmatpush1.msra.mxu0 %v479
  %1100 = vmatprep.subr.mxu0 %v505
  %1101 = vmatpush1.msra.mxu0 %v502
  %1102 = vmatprep.subr.mxu0 0.0
  %1103 = vmatpush1.msra.mxu0 0.0
  %1104 = vmatprep.subr.mxu0 0.0
  %1105 = vmatpush1.msra.mxu0 0.0
  %1106 = vmatprep.subr.mxu0 0.0
  %1107 = vmatpush1.msra.mxu0 0.0
  %1108 = vmatprep.subr.mxu0 0.0
  %1109 = vmatpush1.msra.mxu0 0.0
  %1110 = vmatprep.subr.mxu0 0.0
  %1111 = vmatpush1.msra.mxu0 0.0
  %1112 = vmatprep.subr.mxu0 0.0
  %1113 = vmatpush1.msra.mxu0 0.0
  %1114 = vmatprep.subr.mxu0 0.0
  %1115 = vmatpush1.msra.mxu0 0.0
  %1116 = vmatprep.subr.mxu0 0.0
  %1117 = vmatpush1.msra.mxu0 0.0
  %1118 = vmatprep.subr.mxu0 0.0
  %1119 = vmatpush1.msra.mxu0 0.0
  %1120 = vmatprep.subr.mxu0 0.0
  %1121 = vmatpush1.msra.mxu0 0.0
  %1122 = vmatprep.subr.mxu0 0.0
  %1123 = vmatpush1.msra.mxu0 0.0
  %1124 = vmatprep.subr.mxu0 0.0
  %1125 = vmatpush1.msra.mxu0 0.0
  %1126 = vmatprep.subr.mxu0 0.0
  %1127 = vmatpush1.msra.mxu0 0.0
  %1128 = vmatprep.subr.mxu0 0.0
  %1129 = vmatpush1.msra.mxu0 0.0
  %1130 = vmatprep.subr.mxu0 0.0
  %1131 = vmatpush1.msra.mxu0 0.0
  %1132 = vmatprep.subr.mxu0 0.0
  %1133 = vmatpush1.msra.mxu0 0.0
  %1134 = vmatprep.subr.mxu0 0.0
  %1135 = vmatpush1.msra.mxu0 0.0
  %1136 = vmatprep.subr.mxu0 0.0
  %1137 = vmatpush1.msra.mxu0 0.0
  %1138 = vmatprep.subr.mxu0 0.0
  %1139 = vmatpush1.msra.mxu0 0.0
  %1140 = vmatprep.subr.mxu0 0.0
  %1141 = vmatpush1.msra.mxu0 0.0
  %1142 = vmatprep.subr.mxu0 0.0
  %1143 = vmatpush1.msra.mxu0 0.0
  %1144 = vmatprep.subr.mxu0 0.0
  %1145 = vmatpush1.msra.mxu0 0.0
  %1146 = vmatprep.subr.mxu0 0.0
  %1147 = vmatpush1.msra.mxu0 0.0
  %1148 = vmatprep.subr.mxu0 0.0
  %1149 = vmatpush1.msra.mxu0 0.0
  %1150 = vmatprep.subr.mxu0 0.0
  %1151 = vmatpush1.msra.mxu0 0.0
  %1152 = vmatprep.subr.mxu0 0.0
  %1153 = vmatpush1.msra.mxu0 0.0
  %1154 = vmatprep.subr.mxu0 0.0
  %1155 = vmatpush1.msra.mxu0 0.0
  %1156 = vmatprep.subr.mxu0 0.0
  %1157 = vmatpush1.msra.mxu0 0.0
  %1158 = vmatprep.mubr.f32.mxu0 0.0
  %1159 = vmatmul.mubr.f32.gmra.mrb[0].mxu0 %v637
  %v1160 = vpop.f32.mrb[0].mxu0
  %v1161 = vadd.f32 0.0, %v1160
  %v1162 = vpop.f32.mrb[0].mxu0
  %v1163 = vadd.f32 0.0, %v1162
  %1164 = vmatprep.mubr.f32.mxu0 0.0
  %1165 = vmatmul.mubr.f32.gmra.mrb[0].mxu0 %v640
  %v1166 = vpop.f32.mrb[0].mxu0
  %v1167 = vadd.f32 0.0, %v1166
  %v1168 = vpop.f32.mrb[0].mxu0
  %v1169 = vadd.f32 0.0, %v1168
  %1170 = vmatprep.mubr.f32.mxu0 0.0
  %1171 = vmatmul.mubr.f32.gmra.mrb[0].mxu0 %v643
  %v1172 = vpop.f32.mrb[0].mxu0
  %v1173 = vadd.f32 0.0, %v1172
  %v1174 = vpop.f32.mrb[0].mxu0
  %v1175 = vadd.f32 0.0, %v1174
  %1176 = vmatprep.mubr.f32.mxu0 0.0
  %1177 = vmatmul.mubr.f32.gmra.mrb[0].mxu0 %v646
  %v1178 = vpop.f32.mrb[0].mxu0
  %v1179 = vadd.f32 0.0, %v1178
  %v1180 = vpop.f32.mrb[0].mxu0
  %v1181 = vadd.f32 0.0, %v1180
  %1182 = vmatprep.mubr.f32.mxu0 0.0
  %1183 = vmatmul.mubr.f32.gmra.mrb[0].mxu0 %v649
  %v1184 = vpop.f32.mrb[0].mxu0
  %v1185 = vadd.f32 0.0, %v1184
  %v1186 = vpop.f32.mrb[0].mxu0
  %v1187 = vadd.f32 0.0, %v1186
  %1188 = vmatprep.mubr.f32.mxu0 0.0
  %1189 = vmatmul.mubr.f32.gmra.mrb[0].mxu0 %v652
  %v1190 = vpop.f32.mrb[0].mxu0
  %v1191 = vadd.f32 0.0, %v1190
  %v1192 = vpop.f32.mrb[0].mxu0
  %v1193 = vadd.f32 0.0, %v1192
  %1194 = vdwg.mxu0
  %v1195 = vadd.f32 %v1082, %v1161
  %v1196 = vadd.f32 %v1083, %v1163
  %v1197 = vadd.f32 %v1084, %v1167
  %v1198 = vadd.f32 %v1085, %v1169
  %v1199 = vadd.f32 %v1086, %v1173
  %v1200 = vadd.f32 %v1087, %v1175
  %v1201 = vadd.f32 %v1088, %v1179
  %v1202 = vadd.f32 %v1089, %v1181
  %v1203 = vadd.f32 %v1090, %v1185
  %v1204 = vadd.f32 %v1091, %v1187
  %v1205 = vadd.f32 %v1092, %v1191
  %v1206 = vadd.f32 %v1093, %v1193
  %s1207 = scalar_lea.vmem %s0, 240
  %v1208 = vld [vmem:[%s1207] sm:$0xff]
  %v1209 = vld [vmem:[%s1207 + $0x8] sm:$0xff]
  %v1210 = vld [vmem:[%s1207 + $0x10] sm:$0xff]
  %v1211 = vld [vmem:[%s1207 + $0x18] sm:$0xff]
  %v1212 = vld [vmem:[%s1207 + $0x20] sm:$0xff]
  %v1213 = vld [vmem:[%s1207 + $0x28] sm:$0xff]
  %v1215 = vsel %vm62, %v1208, 0
  %v1218 = vsel %vm62, %v1209, 0
  %v1221 = vsel %vm62, %v1210, 0
  %v1224 = vsel %vm62, %v1211, 0
  %v1227 = vsel %vm62, %v1212, 0
  %v1230 = vsel %vm62, %v1213, 0
  %1232 = vmatprep.subr.mxu0 %v629
  %1233 = vmatpush1.msra.mxu0 %v628
  %1234 = vmatprep.subr.mxu0 %v631
  %1235 = vmatpush1.msra.mxu0 %v630
  %1236 = vmatprep.subr.mxu0 %v633
  %1237 = vmatpush1.msra.mxu0 %v632
  %1238 = vmatprep.subr.mxu0 %v658
  %1239 = vmatpush1.msra.mxu0 %v655
  %1240 = vmatprep.subr.mxu0 0.0
  %1241 = vmatpush1.msra.mxu0 0.0
  %1242 = vmatprep.subr.mxu0 0.0
  %1243 = vmatpush1.msra.mxu0 0.0
  %1244 = vmatprep.subr.mxu0 0.0
  %1245 = vmatpush1.msra.mxu0 0.0
  %1246 = vmatprep.subr.mxu0 0.0
  %1247 = vmatpush1.msra.mxu0 0.0
  %1248 = vmatprep.subr.mxu0 0.0
  %1249 = vmatpush1.msra.mxu0 0.0
  %1250 = vmatprep.subr.mxu0 0.0
  %1251 = vmatpush1.msra.mxu0 0.0
  %1252 = vmatprep.subr.mxu0 0.0
  %1253 = vmatpush1.msra.mxu0 0.0
  %1254 = vmatprep.subr.mxu0 0.0
  %1255 = vmatpush1.msra.mxu0 0.0
  %1256 = vmatprep.subr.mxu0 0.0
  %1257 = vmatpush1.msra.mxu0 0.0
  %1258 = vmatprep.subr.mxu0 0.0
  %1259 = vmatpush1.msra.mxu0 0.0
  %1260 = vmatprep.subr.mxu0 0.0
  %1261 = vmatpush1.msra.mxu0 0.0
  %1262 = vmatprep.subr.mxu0 0.0
  %1263 = vmatpush1.msra.mxu0 0.0
  %1264 = vmatprep.subr.mxu0 0.0
  %1265 = vmatpush1.msra.mxu0 0.0
  %1266 = vmatprep.subr.mxu0 0.0
  %1267 = vmatpush1.msra.mxu0 0.0
  %1268 = vmatprep.subr.mxu0 0.0
  %1269 = vmatpush1.msra.mxu0 0.0
  %1270 = vmatprep.subr.mxu0 0.0
  %1271 = vmatpush1.msra.mxu0 0.0
  %1272 = vmatprep.subr.mxu0 0.0
  %1273 = vmatpush1.msra.mxu0 0.0
  %1274 = vmatprep.subr.mxu0 0.0
  %1275 = vmatpush1.msra.mxu0 0.0
  %1276 = vmatprep.subr.mxu0 0.0
  %1277 = vmatpush1.msra.mxu0 0.0
  %1278 = vmatprep.subr.mxu0 0.0
  %1279 = vmatpush1.msra.mxu0 0.0
  %1280 = vmatprep.subr.mxu0 0.0
  %1281 = vmatpush1.msra.mxu0 0.0
  %1282 = vmatprep.subr.mxu0 0.0
  %1283 = vmatpush1.msra.mxu0 0.0
  %1284 = vmatprep.subr.mxu0 0.0
  %1285 = vmatpush1.msra.mxu0 0.0
  %1286 = vmatprep.subr.mxu0 0.0
  %1287 = vmatpush1.msra.mxu0 0.0
  %1288 = vmatprep.subr.mxu0 0.0
  %1289 = vmatpush1.msra.mxu0 0.0
  %1290 = vmatprep.subr.mxu0 0.0
  %1291 = vmatpush1.msra.mxu0 0.0
  %1292 = vmatprep.subr.mxu0 0.0
  %1293 = vmatpush1.msra.mxu0 0.0
  %1294 = vmatprep.subr.mxu0 0.0
  %1295 = vmatpush1.msra.mxu0 0.0
  %1296 = vmatprep.mubr.f32.mxu0 0.0
  %1297 = vmatmul.mubr.f32.gmra.mrb[0].mxu0 %v1215
  %v1298 = vpop.f32.mrb[0].mxu0
  %v1299 = vadd.f32 0.0, %v1298
  %v1300 = vpop.f32.mrb[0].mxu0
  %v1301 = vadd.f32 0.0, %v1300
  %1302 = vmatprep.mubr.f32.mxu0 0.0
  %1303 = vmatmul.mubr.f32.gmra.mrb[0].mxu0 %v1218
  %v1304 = vpop.f32.mrb[0].mxu0
  %v1305 = vadd.f32 0.0, %v1304
  %v1306 = vpop.f32.mrb[0].mxu0
  %v1307 = vadd.f32 0.0, %v1306
  %1308 = vmatprep.mubr.f32.mxu0 0.0
  %1309 = vmatmul.mubr.f32.gmra.mrb[0].mxu0 %v1221
  %v1310 = vpop.f32.mrb[0].mxu0
  %v1311 = vadd.f32 0.0, %v1310
  %v1312 = vpop.f32.mrb[0].mxu0
  %v1313 = vadd.f32 0.0, %v1312
  %1314 = vmatprep.mubr.f32.mxu0 0.0
  %1315 = vmatmul.mubr.f32.gmra.mrb[0].mxu0 %v1224
  %v1316 = vpop.f32.mrb[0].mxu0
  %v1317 = vadd.f32 0.0, %v1316
  %v1318 = vpop.f32.mrb[0].mxu0
  %v1319 = vadd.f32 0.0, %v1318
  %1320 = vmatprep.mubr.f32.mxu0 0.0
  %1321 = vmatmul.mubr.f32.gmra.mrb[0].mxu0 %v1227
  %v1322 = vpop.f32.mrb[0].mxu0
  %v1323 = vadd.f32 0.0, %v1322
  %v1324 = vpop.f32.mrb[0].mxu0
  %v1325 = vadd.f32 0.0, %v1324
  %1326 = vmatprep.mubr.f32.mxu0 0.0
  %1327 = vmatmul.mubr.f32.gmra.mrb[0].mxu0 %v1230
  %v1328 = vpop.f32.mrb[0].mxu0
  %v1329 = vadd.f32 0.0, %v1328
  %v1330 = vpop.f32.mrb[0].mxu0
  %v1331 = vadd.f32 0.0, %v1330
  %1332 = vdwg.mxu0
  %v1333 = vadd.f32 %v1195, %v1299
  %v1334 = vadd.f32 %v1196, %v1301
  %v1335 = vadd.f32 %v1197, %v1305
  %v1336 = vadd.f32 %v1198, %v1307
  %v1337 = vadd.f32 %v1199, %v1311
  %v1338 = vadd.f32 %v1200, %v1313
  %v1339 = vadd.f32 %v1201, %v1317
  %v1340 = vadd.f32 %v1202, %v1319
  %v1341 = vadd.f32 %v1203, %v1323
  %v1342 = vadd.f32 %v1204, %v1325
  %v1343 = vadd.f32 %v1205, %v1329
  %v1344 = vadd.f32 %v1206, %v1331
  %v1345 = vmax.f32 %v1333, %v1334
  %v1346 = vmax.f32 %v1335, %v1336
  %v1347 = vmax.f32 %v1337, %v1338
  %v1348 = vmax.f32 %v1339, %v1340
  %v1349 = vmax.f32 %v1341, %v1342
  %v1350 = vmax.f32 %v1343, %v1344
  %v1351 = vmax.f32 %v773, %v1345
  %v1352 = vmax.f32 %v774, %v1346
  %v1353 = vmax.f32 %v775, %v1347
  %v1354 = vmax.f32 %v776, %v1348
  %v1355 = vmax.f32 %v777, %v1349
  %v1356 = vmax.f32 %v778, %v1350
  %v1357 = vld [vmem:[%s2] sm:$0x1]
  %v1359 = vlaneseq
  %v1360 = vshrl.u32 %v1359, 7
  %v1361 = vsub.s32 0, %v1360
  %v1362 = vrot.slane %v1357, %v1361
  %v1364 = vadd.f32 %v1351, %v1362
  %v1365 = vadd.f32 %v1352, %v1362
  %v1366 = vadd.f32 %v1353, %v1362
  %v1367 = vadd.f32 %v1354, %v1362
  %v1368 = vadd.f32 %v1355, %v1362
  %v1369 = vadd.f32 %v1356, %v1362
  %v1370 = vmax.f32 %v1364, 0.0
  %v1371 = vmax.f32 %v1365, 0.0
  %v1372 = vmax.f32 %v1366, 0.0
  %v1373 = vmax.f32 %v1367, 0.0
  %v1374 = vmax.f32 %v1368, 0.0
  %v1375 = vmax.f32 %v1369, 0.0
  %1376 = vmatprep.subr.mxu0 %v55
  %1377 = vmatpush1.msra.mxu0 %v54
  %1378 = vmatprep.subr.mxu0 %v57
  %1379 = vmatpush1.msra.mxu0 %v56
  %1380 = vmatprep.subr.mxu0 %v59
  %1381 = vmatpush1.msra.mxu0 %v58
  %1382 = vmatprep.subr.mxu0 %v86
  %1383 = vmatpush1.msra.mxu0 %v83
  %1384 = vmatprep.subr.mxu0 0.0
  %1385 = vmatpush1.msra.mxu0 0.0
  %1386 = vmatprep.subr.mxu0 0.0
  %1387 = vmatpush1.msra.mxu0 0.0
  %1388 = vmatprep.subr.mxu0 0.0
  %1389 = vmatpush1.msra.mxu0 0.0
  %1390 = vmatprep.subr.mxu0 0.0
  %1391 = vmatpush1.msra.mxu0 0.0
  %1392 = vmatprep.subr.mxu0 0.0
  %1393 = vmatpush1.msra.mxu0 0.0
  %1394 = vmatprep.subr.mxu0 0.0
  %1395 = vmatpush1.msra.mxu0 0.0
  %1396 = vmatprep.subr.mxu0 0.0
  %1397 = vmatpush1.msra.mxu0 0.0
  %1398 = vmatprep.subr.mxu0 0.0
  %1399 = vmatpush1.msra.mxu0 0.0
  %1400 = vmatprep.subr.mxu0 0.0
  %1401 = vmatpush1.msra.mxu0 0.0
  %1402 = vmatprep.subr.mxu0 0.0
  %1403 = vmatpush1.msra.mxu0 0.0
  %1404 = vmatprep.subr.mxu0 0.0
  %1405 = vmatpush1.msra.mxu0 0.0
  %1406 = vmatprep.subr.mxu0 0.0
  %1407 = vmatpush1.msra.mxu0 0.0
  %1408 = vmatprep.subr.mxu0 0.0
  %1409 = vmatpush1.msra.mxu0 0.0
  %1410 = vmatprep.subr.mxu0 0.0
  %1411 = vmatpush1.msra.mxu0 0.0
  %1412 = vmatprep.subr.mxu0 0.0
  %1413 = vmatpush1.msra.mxu0 0.0
  %1414 = vmatprep.subr.mxu0 0.0
  %1415 = vmatpush1.msra.mxu0 0.0
  %1416 = vmatprep.subr.mxu0 0.0
  %1417 = vmatpush1.msra.mxu0 0.0
  %1418 = vmatprep.subr.mxu0 0.0
  %1419 = vmatpush1.msra.mxu0 0.0
  %1420 = vmatprep.subr.mxu0 0.0
  %1421 = vmatpush1.msra.mxu0 0.0
  %1422 = vmatprep.subr.mxu0 0.0
  %1423 = vmatpush1.msra.mxu0 0.0
  %1424 = vmatprep.subr.mxu0 0.0
  %1425 = vmatpush1.msra.mxu0 0.0
  %1426 = vmatprep.subr.mxu0 0.0
  %1427 = vmatpush1.msra.mxu0 0.0
  %1428 = vmatprep.subr.mxu0 0.0
  %1429 = vmatpush1.msra.mxu0 0.0
  %1430 = vmatprep.subr.mxu0 0.0
  %1431 = vmatpush1.msra.mxu0 0.0
  %1432 = vmatprep.subr.mxu0 0.0
  %1433 = vmatpush1.msra.mxu0 0.0
  %1434 = vmatprep.subr.mxu0 0.0
  %1435 = vmatpush1.msra.mxu0 0.0
  %1436 = vmatprep.subr.mxu0 0.0
  %1437 = vmatpush1.msra.mxu0 0.0
  %1438 = vmatprep.subr.mxu0 0.0
  %1439 = vmatpush1.msra.mxu0 0.0
  %1440 = vmatprep.mubr.f32.mxu0 0.0
  %1441 = vmatmul.mubr.f32.gmra.mrb[0].mxu0 %v484
  %v1442 = vpop.f32.mrb[0].mxu0
  %v1443 = vadd.f32 0.0, %v1442
  %v1444 = vpop.f32.mrb[0].mxu0
  %v1445 = vadd.f32 0.0, %v1444
  %1446 = vmatprep.mubr.f32.mxu0 0.0
  %1447 = vmatmul.mubr.f32.gmra.mrb[0].mxu0 %v487
  %v1448 = vpop.f32.mrb[0].mxu0
  %v1449 = vadd.f32 0.0, %v1448
  %v1450 = vpop.f32.mrb[0].mxu0
  %v1451 = vadd.f32 0.0, %v1450
  %1452 = vmatprep.mubr.f32.mxu0 0.0
  %1453 = vmatmul.mubr.f32.gmra.mrb[0].mxu0 %v490
  %v1454 = vpop.f32.mrb[0].mxu0
  %v1455 = vadd.f32 0.0, %v1454
  %v1456 = vpop.f32.mrb[0].mxu0
  %v1457 = vadd.f32 0.0, %v1456
  %1458 = vmatprep.mubr.f32.mxu0 0.0
  %1459 = vmatmul.mubr.f32.gmra.mrb[0].mxu0 %v493
  %v1460 = vpop.f32.mrb[0].mxu0
  %v1461 = vadd.f32 0.0, %v1460
  %v1462 = vpop.f32.mrb[0].mxu0
  %v1463 = vadd.f32 0.0, %v1462
  %1464 = vmatprep.mubr.f32.mxu0 0.0
  %1465 = vmatmul.mubr.f32.gmra.mrb[0].mxu0 %v496
  %v1466 = vpop.f32.mrb[0].mxu0
  %v1467 = vadd.f32 0.0, %v1466
  %v1468 = vpop.f32.mrb[0].mxu0
  %v1469 = vadd.f32 0.0, %v1468
  %1470 = vmatprep.mubr.f32.mxu0 0.0
  %1471 = vmatmul.mubr.f32.gmra.mrb[0].mxu0 %v499
  %v1472 = vpop.f32.mrb[0].mxu0
  %v1473 = vadd.f32 0.0, %v1472
  %v1474 = vpop.f32.mrb[0].mxu0
  %v1475 = vadd.f32 0.0, %v1474
  %1476 = vdwg.mxu0
  %1477 = vmatprep.subr.mxu0 %v39
  %1478 = vmatpush1.msra.mxu0 %v38
  %1479 = vmatprep.subr.mxu0 %v41
  %1480 = vmatpush1.msra.mxu0 %v40
  %1481 = vmatprep.subr.mxu0 %v43
  %1482 = vmatpush1.msra.mxu0 %v42
  %1483 = vmatprep.subr.mxu0 %v211
  %1484 = vmatpush1.msra.mxu0 %v208
  %1485 = vmatprep.subr.mxu0 0.0
  %1486 = vmatpush1.msra.mxu0 0.0
  %1487 = vmatprep.subr.mxu0 0.0
  %1488 = vmatpush1.msra.mxu0 0.0
  %1489 = vmatprep.subr.mxu0 0.0
  %1490 = vmatpush1.msra.mxu0 0.0
  %1491 = vmatprep.subr.mxu0 0.0
  %1492 = vmatpush1.msra.mxu0 0.0
  %1493 = vmatprep.subr.mxu0 0.0
  %1494 = vmatpush1.msra.mxu0 0.0
  %1495 = vmatprep.subr.mxu0 0.0
  %1496 = vmatpush1.msra.mxu0 0.0
  %1497 = vmatprep.subr.mxu0 0.0
  %1498 = vmatpush1.msra.mxu0 0.0
  %1499 = vmatprep.subr.mxu0 0.0
  %1500 = vmatpush1.msra.mxu0 0.0
  %1501 = vmatprep.subr.mxu0 0.0
  %1502 = vmatpush1.msra.mxu0 0.0
  %1503 = vmatprep.subr.mxu0 0.0
  %1504 = vmatpush1.msra.mxu0 0.0
  %1505 = vmatprep.subr.mxu0 0.0
  %1506 = vmatpush1.msra.mxu0 0.0
  %1507 = vmatprep.subr.mxu0 0.0
  %1508 = vmatpush1.msra.mxu0 0.0
  %1509 = vmatprep.subr.mxu0 0.0
  %1510 = vmatpush1.msra.mxu0 0.0
  %1511 = vmatprep.subr.mxu0 0.0
  %1512 = vmatpush1.msra.mxu0 0.0
  %1513 = vmatprep.subr.mxu0 0.0
  %1514 = vmatpush1.msra.mxu0 0.0
  %1515 = vmatprep.subr.mxu0 0.0
  %1516 = vmatpush1.msra.mxu0 0.0
  %1517 = vmatprep.subr.mxu0 0.0
  %1518 = vmatpush1.msra.mxu0 0.0
  %1519 = vmatprep.subr.mxu0 0.0
  %1520 = vmatpush1.msra.mxu0 0.0
  %1521 = vmatprep.subr.mxu0 0.0
  %1522 = vmatpush1.msra.mxu0 0.0
  %1523 = vmatprep.subr.mxu0 0.0
  %1524 = vmatpush1.msra.mxu0 0.0
  %1525 = vmatprep.subr.mxu0 0.0
  %1526 = vmatpush1.msra.mxu0 0.0
  %1527 = vmatprep.subr.mxu0 0.0
  %1528 = vmatpush1.msra.mxu0 0.0
  %1529 = vmatprep.subr.mxu0 0.0
  %1530 = vmatpush1.msra.mxu0 0.0
  %1531 = vmatprep.subr.mxu0 0.0
  %1532 = vmatpush1.msra.mxu0 0.0
  %1533 = vmatprep.subr.mxu0 0.0
  %1534 = vmatpush1.msra.mxu0 0.0
  %1535 = vmatprep.subr.mxu0 0.0
  %1536 = vmatpush1.msra.mxu0 0.0
  %1537 = vmatprep.subr.mxu0 0.0
  %1538 = vmatpush1.msra.mxu0 0.0
  %1539 = vmatprep.subr.mxu0 0.0
  %1540 = vmatpush1.msra.mxu0 0.0
  %1541 = vmatprep.mubr.f32.mxu0 0.0
  %1542 = vmatmul.mubr.f32.gmra.mrb[0].mxu0 %v331
  %v1543 = vpop.f32.mrb[0].mxu0
  %v1544 = vadd.f32 %v1443, %v1543
  %v1545 = vpop.f32.mrb[0].mxu0
  %v1546 = vadd.f32 %v1445, %v1545
  %1547 = vmatprep.mubr.f32.mxu0 0.0
  %1548 = vmatmul.mubr.f32.gmra.mrb[0].mxu0 %v334
  %v1549 = vpop.f32.mrb[0].mxu0
  %v1550 = vadd.f32 %v1449, %v1549
  %v1551 = vpop.f32.mrb[0].mxu0
  %v1552 = vadd.f32 %v1451, %v1551
  %1553 = vmatprep.mubr.f32.mxu0 0.0
  %1554 = vmatmul.mubr.f32.gmra.mrb[0].mxu0 %v337
  %v1555 = vpop.f32.mrb[0].mxu0
  %v1556 = vadd.f32 %v1455, %v1555
  %v1557 = vpop.f32.mrb[0].mxu0
  %v1558 = vadd.f32 %v1457, %v1557
  %1559 = vmatprep.mubr.f32.mxu0 0.0
  %1560 = vmatmul.mubr.f32.gmra.mrb[0].mxu0 %v340
  %v1561 = vpop.f32.mrb[0].mxu0
  %v1562 = vadd.f32 %v1461, %v1561
  %v1563 = vpop.f32.mrb[0].mxu0
  %v1564 = vadd.f32 %v1463, %v1563
  %1565 = vmatprep.mubr.f32.mxu0 0.0
  %1566 = vmatmul.mubr.f32.gmra.mrb[0].mxu0 %v343
  %v1567 = vpop.f32.mrb[0].mxu0
  %v1568 = vadd.f32 %v1467, %v1567
  %v1569 = vpop.f32.mrb[0].mxu0
  %v1570 = vadd.f32 %v1469, %v1569
  %1571 = vmatprep.mubr.f32.mxu0 0.0
  %1572 = vmatmul.mubr.f32.gmra.mrb[0].mxu0 %v346
  %v1573 = vpop.f32.mrb[0].mxu0
  %v1574 = vadd.f32 %v1473, %v1573
  %v1575 = vpop.f32.mrb[0].mxu0
  %v1576 = vadd.f32 %v1475, %v1575
  %1577 = vdwg.mxu0
  %1578 = vmatprep.subr.mxu0 %v323
  %1579 = vmatpush1.msra.mxu0 %v322
  %1580 = vmatprep.subr.mxu0 %v325
  %1581 = vmatpush1.msra.mxu0 %v324
  %1582 = vmatprep.subr.mxu0 %v327
  %1583 = vmatpush1.msra.mxu0 %v326
  %1584 = vmatprep.subr.mxu0 %v352
  %1585 = vmatpush1.msra.mxu0 %v349
  %1586 = vmatprep.subr.mxu0 0.0
  %1587 = vmatpush1.msra.mxu0 0.0
  %1588 = vmatprep.subr.mxu0 0.0
  %1589 = vmatpush1.msra.mxu0 0.0
  %1590 = vmatprep.subr.mxu0 0.0
  %1591 = vmatpush1.msra.mxu0 0.0
  %1592 = vmatprep.subr.mxu0 0.0
  %1593 = vmatpush1.msra.mxu0 0.0
  %1594 = vmatprep.subr.mxu0 0.0
  %1595 = vmatpush1.msra.mxu0 0.0
  %1596 = vmatprep.subr.mxu0 0.0
  %1597 = vmatpush1.msra.mxu0 0.0
  %1598 = vmatprep.subr.mxu0 0.0
  %1599 = vmatpush1.msra.mxu0 0.0
  %1600 = vmatprep.subr.mxu0 0.0
  %1601 = vmatpush1.msra.mxu0 0.0
  %1602 = vmatprep.subr.mxu0 0.0
  %1603 = vmatpush1.msra.mxu0 0.0
  %1604 = vmatprep.subr.mxu0 0.0
  %1605 = vmatpush1.msra.mxu0 0.0
  %1606 = vmatprep.subr.mxu0 0.0
  %1607 = vmatpush1.msra.mxu0 0.0
  %1608 = vmatprep.subr.mxu0 0.0
  %1609 = vmatpush1.msra.mxu0 0.0
  %1610 = vmatprep.subr.mxu0 0.0
  %1611 = vmatpush1.msra.mxu0 0.0
  %1612 = vmatprep.subr.mxu0 0.0
  %1613 = vmatpush1.msra.mxu0 0.0
  %1614 = vmatprep.subr.mxu0 0.0
  %1615 = vmatpush1.msra.mxu0 0.0
  %1616 = vmatprep.subr.mxu0 0.0
  %1617 = vmatpush1.msra.mxu0 0.0
  %1618 = vmatprep.subr.mxu0 0.0
  %1619 = vmatpush1.msra.mxu0 0.0
  %1620 = vmatprep.subr.mxu0 0.0
  %1621 = vmatpush1.msra.mxu0 0.0
  %1622 = vmatprep.subr.mxu0 0.0
  %1623 = vmatpush1.msra.mxu0 0.0
  %1624 = vmatprep.subr.mxu0 0.0
  %1625 = vmatpush1.msra.mxu0 0.0
  %1626 = vmatprep.subr.mxu0 0.0
  %1627 = vmatpush1.msra.mxu0 0.0
  %1628 = vmatprep.subr.mxu0 0.0
  %1629 = vmatpush1.msra.mxu0 0.0
  %1630 = vmatprep.subr.mxu0 0.0
  %1631 = vmatpush1.msra.mxu0 0.0
  %1632 = vmatprep.subr.mxu0 0.0
  %1633 = vmatpush1.msra.mxu0 0.0
  %1634 = vmatprep.subr.mxu0 0.0
  %1635 = vmatpush1.msra.mxu0 0.0
  %1636 = vmatprep.subr.mxu0 0.0
  %1637 = vmatpush1.msra.mxu0 0.0
  %1638 = vmatprep.subr.mxu0 0.0
  %1639 = vmatpush1.msra.mxu0 0.0
  %1640 = vmatprep.subr.mxu0 0.0
  %1641 = vmatpush1.msra.mxu0 0.0
  %1642 = vmatprep.mubr.f32.mxu0 0.0
  %1643 = vmatmul.mubr.f32.gmra.mrb[0].mxu0 %v637
  %v1644 = vpop.f32.mrb[0].mxu0
  %v1645 = vadd.f32 0.0, %v1644
  %v1646 = vpop.f32.mrb[0].mxu0
  %v1647 = vadd.f32 0.0, %v1646
  %1648 = vmatprep.mubr.f32.mxu0 0.0
  %1649 = vmatmul.mubr.f32.gmra.mrb[0].mxu0 %v640
  %v1650 = vpop.f32.mrb[0].mxu0
  %v1651 = vadd.f32 0.0, %v1650
  %v1652 = vpop.f32.mrb[0].mxu0
  %v1653 = vadd.f32 0.0, %v1652
  %1654 = vmatprep.mubr.f32.mxu0 0.0
  %1655 = vmatmul.mubr.f32.gmra.mrb[0].mxu0 %v643
  %v1656 = vpop.f32.mrb[0].mxu0
  %v1657 = vadd.f32 0.0, %v1656
  %v1658 = vpop.f32.mrb[0].mxu0
  %v1659 = vadd.f32 0.0, %v1658
  %1660 = vmatprep.mubr.f32.mxu0 0.0
  %1661 = vmatmul.mubr.f32.gmra.mrb[0].mxu0 %v646
  %v1662 = vpop.f32.mrb[0].mxu0
  %v1663 = vadd.f32 0.0, %v1662
  %v1664 = vpop.f32.mrb[0].mxu0
  %v1665 = vadd.f32 0.0, %v1664
  %1666 = vmatprep.mubr.f32.mxu0 0.0
  %1667 = vmatmul.mubr.f32.gmra.mrb[0].mxu0 %v649
  %v1668 = vpop.f32.mrb[0].mxu0
  %v1669 = vadd.f32 0.0, %v1668
  %v1670 = vpop.f32.mrb[0].mxu0
  %v1671 = vadd.f32 0.0, %v1670
  %1672 = vmatprep.mubr.f32.mxu0 0.0
  %1673 = vmatmul.mubr.f32.gmra.mrb[0].mxu0 %v652
  %v1674 = vpop.f32.mrb[0].mxu0
  %v1675 = vadd.f32 0.0, %v1674
  %v1676 = vpop.f32.mrb[0].mxu0
  %v1677 = vadd.f32 0.0, %v1676
  %1678 = vdwg.mxu0
  %v1679 = vadd.f32 %v1544, %v1645
  %v1680 = vadd.f32 %v1546, %v1647
  %v1681 = vadd.f32 %v1550, %v1651
  %v1682 = vadd.f32 %v1552, %v1653
  %v1683 = vadd.f32 %v1556, %v1657
  %v1684 = vadd.f32 %v1558, %v1659
  %v1685 = vadd.f32 %v1562, %v1663
  %v1686 = vadd.f32 %v1564, %v1665
  %v1687 = vadd.f32 %v1568, %v1669
  %v1688 = vadd.f32 %v1570, %v1671
  %v1689 = vadd.f32 %v1574, %v1675
  %v1690 = vadd.f32 %v1576, %v1677
  %1691 = vmatprep.subr.mxu0 %v476
  %1692 = vmatpush1.msra.mxu0 %v475
  %1693 = vmatprep.subr.mxu0 %v478
  %1694 = vmatpush1.msra.mxu0 %v477
  %1695 = vmatprep.subr.mxu0 %v480
  %1696 = vmatpush1.msra.mxu0 %v479
  %1697 = vmatprep.subr.mxu0 %v505
  %1698 = vmatpush1.msra.mxu0 %v502
  %1699 = vmatprep.subr.mxu0 0.0
  %1700 = vmatpush1.msra.mxu0 0.0
  %1701 = vmatprep.subr.mxu0 0.0
  %1702 = vmatpush1.msra.mxu0 0.0
  %1703 = vmatprep.subr.mxu0 0.0
  %1704 = vmatpush1.msra.mxu0 0.0
  %1705 = vmatprep.subr.mxu0 0.0
  %1706 = vmatpush1.msra.mxu0 0.0
  %1707 = vmatprep.subr.mxu0 0.0
  %1708 = vmatpush1.msra.mxu0 0.0
  %1709 = vmatprep.subr.mxu0 0.0
  %1710 = vmatpush1.msra.mxu0 0.0
  %1711 = vmatprep.subr.mxu0 0.0
  %1712 = vmatpush1.msra.mxu0 0.0
  %1713 = vmatprep.subr.mxu0 0.0
  %1714 = vmatpush1.msra.mxu0 0.0
  %1715 = vmatprep.subr.mxu0 0.0
  %1716 = vmatpush1.msra.mxu0 0.0
  %1717 = vmatprep.subr.mxu0 0.0
  %1718 = vmatpush1.msra.mxu0 0.0
  %1719 = vmatprep.subr.mxu0 0.0
  %1720 = vmatpush1.msra.mxu0 0.0
  %1721 = vmatprep.subr.mxu0 0.0
  %1722 = vmatpush1.msra.mxu0 0.0
  %1723 = vmatprep.subr.mxu0 0.0
  %1724 = vmatpush1.msra.mxu0 0.0
  %1725 = vmatprep.subr.mxu0 0.0
  %1726 = vmatpush1.msra.mxu0 0.0
  %1727 = vmatprep.subr.mxu0 0.0
  %1728 = vmatpush1.msra.mxu0 0.0
  %1729 = vmatprep.subr.mxu0 0.0
  %1730 = vmatpush1.msra.mxu0 0.0
  %1731 = vmatprep.subr.mxu0 0.0
  %1732 = vmatpush1.msra.mxu0 0.0
  %1733 = vmatprep.subr.mxu0 0.0
  %1734 = vmatpush1.msra.mxu0 0.0
  %1735 = vmatprep.subr.mxu0 0.0
  %1736 = vmatpush1.msra.mxu0 0.0
  %1737 = vmatprep.subr.mxu0 0.0
  %1738 = vmatpush1.msra.mxu0 0.0
  %1739 = vmatprep.subr.mxu0 0.0
  %1740 = vmatpush1.msra.mxu0 0.0
  %1741 = vmatprep.subr.mxu0 0.0
  %1742 = vmatpush1.msra.mxu0 0.0
  %1743 = vmatprep.subr.mxu0 0.0
  %1744 = vmatpush1.msra.mxu0 0.0
  %1745 = vmatprep.subr.mxu0 0.0
  %1746 = vmatpush1.msra.mxu0 0.0
  %1747 = vmatprep.subr.mxu0 0.0
  %1748 = vmatpush1.msra.mxu0 0.0
  %1749 = vmatprep.subr.mxu0 0.0
  %1750 = vmatpush1.msra.mxu0 0.0
  %1751 = vmatprep.subr.mxu0 0.0
  %1752 = vmatpush1.msra.mxu0 0.0
  %1753 = vmatprep.subr.mxu0 0.0
  %1754 = vmatpush1.msra.mxu0 0.0
  %1755 = vmatprep.mubr.f32.mxu0 0.0
  %1756 = vmatmul.mubr.f32.gmra.mrb[0].mxu0 %v1215
  %v1757 = vpop.f32.mrb[0].mxu0
  %v1758 = vadd.f32 0.0, %v1757
  %v1759 = vpop.f32.mrb[0].mxu0
  %v1760 = vadd.f32 0.0, %v1759
  %1761 = vmatprep.mubr.f32.mxu0 0.0
  %1762 = vmatmul.mubr.f32.gmra.mrb[0].mxu0 %v1218
  %v1763 = vpop.f32.mrb[0].mxu0
  %v1764 = vadd.f32 0.0, %v1763
  %v1765 = vpop.f32.mrb[0].mxu0
  %v1766 = vadd.f32 0.0, %v1765
  %1767 = vmatprep.mubr.f32.mxu0 0.0
  %1768 = vmatmul.mubr.f32.gmra.mrb[0].mxu0 %v1221
  %v1769 = vpop.f32.mrb[0].mxu0
  %v1770 = vadd.f32 0.0, %v1769
  %v1771 = vpop.f32.mrb[0].mxu0
  %v1772 = vadd.f32 0.0, %v1771
  %1773 = vmatprep.mubr.f32.mxu0 0.0
  %1774 = vmatmul.mubr.f32.gmra.mrb[0].mxu0 %v1224
  %v1775 = vpop.f32.mrb[0].mxu0
  %v1776 = vadd.f32 0.0, %v1775
  %v1777 = vpop.f32.mrb[0].mxu0
  %v1778 = vadd.f32 0.0, %v1777
  %1779 = vmatprep.mubr.f32.mxu0 0.0
  %1780 = vmatmul.mubr.f32.gmra.mrb[0].mxu0 %v1227
  %v1781 = vpop.f32.mrb[0].mxu0
  %v1782 = vadd.f32 0.0, %v1781
  %v1783 = vpop.f32.mrb[0].mxu0
  %v1784 = vadd.f32 0.0, %v1783
  %1785 = vmatprep.mubr.f32.mxu0 0.0
  %1786 = vmatmul.mubr.f32.gmra.mrb[0].mxu0 %v1230
  %v1787 = vpop.f32.mrb[0].mxu0
  %v1788 = vadd.f32 0.0, %v1787
  %v1789 = vpop.f32.mrb[0].mxu0
  %v1790 = vadd.f32 0.0, %v1789
  %1791 = vdwg.mxu0
  %v1792 = vadd.f32 %v1679, %v1758
  %v1793 = vadd.f32 %v1680, %v1760
  %v1794 = vadd.f32 %v1681, %v1764
  %v1795 = vadd.f32 %v1682, %v1766
  %v1796 = vadd.f32 %v1683, %v1770
  %v1797 = vadd.f32 %v1684, %v1772
  %v1798 = vadd.f32 %v1685, %v1776
  %v1799 = vadd.f32 %v1686, %v1778
  %v1800 = vadd.f32 %v1687, %v1782
  %v1801 = vadd.f32 %v1688, %v1784
  %v1802 = vadd.f32 %v1689, %v1788
  %v1803 = vadd.f32 %v1690, %v1790
  %s1804 = scalar_lea.vmem %s0, 288
  %v1805 = vld [vmem:[%s1804] sm:$0xff]
  %v1806 = vld [vmem:[%s1804 + $0x8] sm:$0xff]
  %v1807 = vld [vmem:[%s1804 + $0x10] sm:$0xff]
  %v1808 = vld [vmem:[%s1804 + $0x18] sm:$0xff]
  %v1809 = vld [vmem:[%s1804 + $0x20] sm:$0xff]
  %v1810 = vld [vmem:[%s1804 + $0x28] sm:$0xff]
  %v1812 = vsel %vm62, %v1805, 0
  %v1815 = vsel %vm62, %v1806, 0
  %v1818 = vsel %vm62, %v1807, 0
  %v1821 = vsel %vm62, %v1808, 0
  %v1824 = vsel %vm62, %v1809, 0
  %v1827 = vsel %vm62, %v1810, 0
  %1829 = vmatprep.subr.mxu0 %v629
  %1830 = vmatpush1.msra.mxu0 %v628
  %1831 = vmatprep.subr.mxu0 %v631
  %1832 = vmatpush1.msra.mxu0 %v630
  %1833 = vmatprep.subr.mxu0 %v633
  %1834 = vmatpush1.msra.mxu0 %v632
  %1835 = vmatprep.subr.mxu0 %v658
  %1836 = vmatpush1.msra.mxu0 %v655
  %1837 = vmatprep.subr.mxu0 0.0
  %1838 = vmatpush1.msra.mxu0 0.0
  %1839 = vmatprep.subr.mxu0 0.0
  %1840 = vmatpush1.msra.mxu0 0.0
  %1841 = vmatprep.subr.mxu0 0.0
  %1842 = vmatpush1.msra.mxu0 0.0
  %1843 = vmatprep.subr.mxu0 0.0
  %1844 = vmatpush1.msra.mxu0 0.0
  %1845 = vmatprep.subr.mxu0 0.0
  %1846 = vmatpush1.msra.mxu0 0.0
  %1847 = vmatprep.subr.mxu0 0.0
  %1848 = vmatpush1.msra.mxu0 0.0
  %1849 = vmatprep.subr.mxu0 0.0
  %1850 = vmatpush1.msra.mxu0 0.0
  %1851 = vmatprep.subr.mxu0 0.0
  %1852 = vmatpush1.msra.mxu0 0.0
  %1853 = vmatprep.subr.mxu0 0.0
  %1854 = vmatpush1.msra.mxu0 0.0
  %1855 = vmatprep.subr.mxu0 0.0
  %1856 = vmatpush1.msra.mxu0 0.0
  %1857 = vmatprep.subr.mxu0 0.0
  %1858 = vmatpush1.msra.mxu0 0.0
  %1859 = vmatprep.subr.mxu0 0.0
  %1860 = vmatpush1.msra.mxu0 0.0
  %1861 = vmatprep.subr.mxu0 0.0
  %1862 = vmatpush1.msra.mxu0 0.0
  %1863 = vmatprep.subr.mxu0 0.0
  %1864 = vmatpush1.msra.mxu0 0.0
  %1865 = vmatprep.subr.mxu0 0.0
  %1866 = vmatpush1.msra.mxu0 0.0
  %1867 = vmatprep.subr.mxu0 0.0
  %1868 = vmatpush1.msra.mxu0 0.0
  %1869 = vmatprep.subr.mxu0 0.0
  %1870 = vmatpush1.msra.mxu0 0.0
  %1871 = vmatprep.subr.mxu0 0.0
  %1872 = vmatpush1.msra.mxu0 0.0
  %1873 = vmatprep.subr.mxu0 0.0
  %1874 = vmatpush1.msra.mxu0 0.0
  %1875 = vmatprep.subr.mxu0 0.0
  %1876 = vmatpush1.msra.mxu0 0.0
  %1877 = vmatprep.subr.mxu0 0.0
  %1878 = vmatpush1.msra.mxu0 0.0
  %1879 = vmatprep.subr.mxu0 0.0
  %1880 = vmatpush1.msra.mxu0 0.0
  %1881 = vmatprep.subr.mxu0 0.0
  %1882 = vmatpush1.msra.mxu0 0.0
  %1883 = vmatprep.subr.mxu0 0.0
  %1884 = vmatpush1.msra.mxu0 0.0
  %1885 = vmatprep.subr.mxu0 0.0
  %1886 = vmatpush1.msra.mxu0 0.0
  %1887 = vmatprep.subr.mxu0 0.0
  %1888 = vmatpush1.msra.mxu0 0.0
  %1889 = vmatprep.subr.mxu0 0.0
  %1890 = vmatpush1.msra.mxu0 0.0
  %1891 = vmatprep.subr.mxu0 0.0
  %1892 = vmatpush1.msra.mxu0 0.0
  %1893 = vmatprep.mubr.f32.mxu0 0.0
  %1894 = vmatmul.mubr.f32.gmra.mrb[0].mxu0 %v1812
  %v1895 = vpop.f32.mrb[0].mxu0
  %v1896 = vadd.f32 0.0, %v1895
  %v1897 = vpop.f32.mrb[0].mxu0
  %v1898 = vadd.f32 0.0, %v1897
  %1899 = vmatprep.mubr.f32.mxu0 0.0
  %1900 = vmatmul.mubr.f32.gmra.mrb[0].mxu0 %v1815
  %v1901 = vpop.f32.mrb[0].mxu0
  %v1902 = vadd.f32 0.0, %v1901
  %v1903 = vpop.f32.mrb[0].mxu0
  %v1904 = vadd.f32 0.0, %v1903
  %1905 = vmatprep.mubr.f32.mxu0 0.0
  %1906 = vmatmul.mubr.f32.gmra.mrb[0].mxu0 %v1818
  %v1907 = vpop.f32.mrb[0].mxu0
  %v1908 = vadd.f32 0.0, %v1907
  %v1909 = vpop.f32.mrb[0].mxu0
  %v1910 = vadd.f32 0.0, %v1909
  %1911 = vmatprep.mubr.f32.mxu0 0.0
  %1912 = vmatmul.mubr.f32.gmra.mrb[0].mxu0 %v1821
  %v1913 = vpop.f32.mrb[0].mxu0
  %v1914 = vadd.f32 0.0, %v1913
  %v1915 = vpop.f32.mrb[0].mxu0
  %v1916 = vadd.f32 0.0, %v1915
  %1917 = vmatprep.mubr.f32.mxu0 0.0
  %1918 = vmatmul.mubr.f32.gmra.mrb[0].mxu0 %v1824
  %v1919 = vpop.f32.mrb[0].mxu0
  %v1920 = vadd.f32 0.0, %v1919
  %v1921 = vpop.f32.mrb[0].mxu0
  %v1922 = vadd.f32 0.0, %v1921
  %1923 = vmatprep.mubr.f32.mxu0 0.0
  %1924 = vmatmul.mubr.f32.gmra.mrb[0].mxu0 %v1827
  %v1925 = vpop.f32.mrb[0].mxu0
  %v1926 = vadd.f32 0.0, %v1925
  %v1927 = vpop.f32.mrb[0].mxu0
  %v1928 = vadd.f32 0.0, %v1927
  %1929 = vdwg.mxu0
  %v1930 = vadd.f32 %v1792, %v1896
  %v1931 = vadd.f32 %v1793, %v1898
  %v1932 = vadd.f32 %v1794, %v1902
  %v1933 = vadd.f32 %v1795, %v1904
  %v1934 = vadd.f32 %v1796, %v1908
  %v1935 = vadd.f32 %v1797, %v1910
  %v1936 = vadd.f32 %v1798, %v1914
  %v1937 = vadd.f32 %v1799, %v1916
  %v1938 = vadd.f32 %v1800, %v1920
  %v1939 = vadd.f32 %v1801, %v1922
  %v1940 = vadd.f32 %v1802, %v1926
  %v1941 = vadd.f32 %v1803, %v1928
  %v1942 = vmax.f32 %v1930, %v1931
  %v1943 = vmax.f32 %v1932, %v1933
  %v1944 = vmax.f32 %v1934, %v1935
  %v1945 = vmax.f32 %v1936, %v1937
  %v1946 = vmax.f32 %v1938, %v1939
  %v1947 = vmax.f32 %v1940, %v1941
  %1948 = vmatprep.subr.mxu0 %v55
  %1949 = vmatpush1.msra.mxu0 %v54
  %1950 = vmatprep.subr.mxu0 %v57
  %1951 = vmatpush1.msra.mxu0 %v56
  %1952 = vmatprep.subr.mxu0 %v59
  %1953 = vmatpush1.msra.mxu0 %v58
  %1954 = vmatprep.subr.mxu0 %v86
  %1955 = vmatpush1.msra.mxu0 %v83
  %1956 = vmatprep.subr.mxu0 0.0
  %1957 = vmatpush1.msra.mxu0 0.0
  %1958 = vmatprep.subr.mxu0 0.0
  %1959 = vmatpush1.msra.mxu0 0.0
  %1960 = vmatprep.subr.mxu0 0.0
  %1961 = vmatpush1.msra.mxu0 0.0
  %1962 = vmatprep.subr.mxu0 0.0
  %1963 = vmatpush1.msra.mxu0 0.0
  %1964 = vmatprep.subr.mxu0 0.0
  %1965 = vmatpush1.msra.mxu0 0.0
  %1966 = vmatprep.subr.mxu0 0.0
  %1967 = vmatpush1.msra.mxu0 0.0
  %1968 = vmatprep.subr.mxu0 0.0
  %1969 = vmatpush1.msra.mxu0 0.0
  %1970 = vmatprep.subr.mxu0 0.0
  %1971 = vmatpush1.msra.mxu0 0.0
  %1972 = vmatprep.subr.mxu0 0.0
  %1973 = vmatpush1.msra.mxu0 0.0
  %1974 = vmatprep.subr.mxu0 0.0
  %1975 = vmatpush1.msra.mxu0 0.0
  %1976 = vmatprep.subr.mxu0 0.0
  %1977 = vmatpush1.msra.mxu0 0.0
  %1978 = vmatprep.subr.mxu0 0.0
  %1979 = vmatpush1.msra.mxu0 0.0
  %1980 = vmatprep.subr.mxu0 0.0
  %1981 = vmatpush1.msra.mxu0 0.0
  %1982 = vmatprep.subr.mxu0 0.0
  %1983 = vmatpush1.msra.mxu0 0.0
  %1984 = vmatprep.subr.mxu0 0.0
  %1985 = vmatpush1.msra.mxu0 0.0
  %1986 = vmatprep.subr.mxu0 0.0
  %1987 = vmatpush1.msra.mxu0 0.0
  %1988 = vmatprep.subr.mxu0 0.0
  %1989 = vmatpush1.msra.mxu0 0.0
  %1990 = vmatprep.subr.mxu0 0.0
  %1991 = vmatpush1.msra.mxu0 0.0
  %1992 = vmatprep.subr.mxu0 0.0
  %1993 = vmatpush1.msra.mxu0 0.0
  %1994 = vmatprep.subr.mxu0 0.0
  %1995 = vmatpush1.msra.mxu0 0.0
  %1996 = vmatprep.subr.mxu0 0.0
  %1997 = vmatpush1.msra.mxu0 0.0
  %1998 = vmatprep.subr.mxu0 0.0
  %1999 = vmatpush1.msra.mxu0 0.0
  %2000 = vmatprep.subr.mxu0 0.0
  %2001 = vmatpush1.msra.mxu0 0.0
  %2002 = vmatprep.subr.mxu0 0.0
  %2003 = vmatpush1.msra.mxu0 0.0
  %2004 = vmatprep.subr.mxu0 0.0
  %2005 = vmatpush1.msra.mxu0 0.0
  %2006 = vmatprep.subr.mxu0 0.0
  %2007 = vmatpush1.msra.mxu0 0.0
  %2008 = vmatprep.subr.mxu0 0.0
  %2009 = vmatpush1.msra.mxu0 0.0
  %2010 = vmatprep.subr.mxu0 0.0
  %2011 = vmatpush1.msra.mxu0 0.0
  %2012 = vmatprep.mubr.f32.mxu0 0.0
  %2013 = vmatmul.mubr.f32.gmra.mrb[0].mxu0 %v637
  %v2014 = vpop.f32.mrb[0].mxu0
  %v2015 = vadd.f32 0.0, %v2014
  %v2016 = vpop.f32.mrb[0].mxu0
  %v2017 = vadd.f32 0.0, %v2016
  %2018 = vmatprep.mubr.f32.mxu0 0.0
  %2019 = vmatmul.mubr.f32.gmra.mrb[0].mxu0 %v640
  %v2020 = vpop.f32.mrb[0].mxu0
  %v2021 = vadd.f32 0.0, %v2020
  %v2022 = vpop.f32.mrb[0].mxu0
  %v2023 = vadd.f32 0.0, %v2022
  %2024 = vmatprep.mubr.f32.mxu0 0.0
  %2025 = vmatmul.mubr.f32.gmra.mrb[0].mxu0 %v643
  %v2026 = vpop.f32.mrb[0].mxu0
  %v2027 = vadd.f32 0.0, %v2026
  %v2028 = vpop.f32.mrb[0].mxu0
  %v2029 = vadd.f32 0.0, %v2028
  %2030 = vmatprep.mubr.f32.mxu0 0.0
  %2031 = vmatmul.mubr.f32.gmra.mrb[0].mxu0 %v646
  %v2032 = vpop.f32.mrb[0].mxu0
  %v2033 = vadd.f32 0.0, %v2032
  %v2034 = vpop.f32.mrb[0].mxu0
  %v2035 = vadd.f32 0.0, %v2034
  %2036 = vmatprep.mubr.f32.mxu0 0.0
  %2037 = vmatmul.mubr.f32.gmra.mrb[0].mxu0 %v649
  %v2038 = vpop.f32.mrb[0].mxu0
  %v2039 = vadd.f32 0.0, %v2038
  %v2040 = vpop.f32.mrb[0].mxu0
  %v2041 = vadd.f32 0.0, %v2040
  %2042 = vmatprep.mubr.f32.mxu0 0.0
  %2043 = vmatmul.mubr.f32.gmra.mrb[0].mxu0 %v652
  %v2044 = vpop.f32.mrb[0].mxu0
  %v2045 = vadd.f32 0.0, %v2044
  %v2046 = vpop.f32.mrb[0].mxu0
  %v2047 = vadd.f32 0.0, %v2046
  %2048 = vdwg.mxu0
  %2049 = vmatprep.subr.mxu0 %v39
  %2050 = vmatpush1.msra.mxu0 %v38
  %2051 = vmatprep.subr.mxu0 %v41
  %2052 = vmatpush1.msra.mxu0 %v40
  %2053 = vmatprep.subr.mxu0 %v43
  %2054 = vmatpush1.msra.mxu0 %v42
  %2055 = vmatprep.subr.mxu0 %v211
  %2056 = vmatpush1.msra.mxu0 %v208
  %2057 = vmatprep.subr.mxu0 0.0
  %2058 = vmatpush1.msra.mxu0 0.0
  %2059 = vmatprep.subr.mxu0 0.0
  %2060 = vmatpush1.msra.mxu0 0.0
  %2061 = vmatprep.subr.mxu0 0.0
  %2062 = vmatpush1.msra.mxu0 0.0
  %2063 = vmatprep.subr.mxu0 0.0
  %2064 = vmatpush1.msra.mxu0 0.0
  %2065 = vmatprep.subr.mxu0 0.0
  %2066 = vmatpush1.msra.mxu0 0.0
  %2067 = vmatprep.subr.mxu0 0.0
  %2068 = vmatpush1.msra.mxu0 0.0
  %2069 = vmatprep.subr.mxu0 0.0
  %2070 = vmatpush1.msra.mxu0 0.0
  %2071 = vmatprep.subr.mxu0 0.0
  %2072 = vmatpush1.msra.mxu0 0.0
  %2073 = vmatprep.subr.mxu0 0.0
  %2074 = vmatpush1.msra.mxu0 0.0
  %2075 = vmatprep.subr.mxu0 0.0
  %2076 = vmatpush1.msra.mxu0 0.0
  %2077 = vmatprep.subr.mxu0 0.0
  %2078 = vmatpush1.msra.mxu0 0.0
  %2079 = vmatprep.subr.mxu0 0.0
  %2080 = vmatpush1.msra.mxu0 0.0
  %2081 = vmatprep.subr.mxu0 0.0
  %2082 = vmatpush1.msra.mxu0 0.0
  %2083 = vmatprep.subr.mxu0 0.0
  %2084 = vmatpush1.msra.mxu0 0.0
  %2085 = vmatprep.subr.mxu0 0.0
  %2086 = vmatpush1.msra.mxu0 0.0
  %2087 = vmatprep.subr.mxu0 0.0
  %2088 = vmatpush1.msra.mxu0 0.0
  %2089 = vmatprep.subr.mxu0 0.0
  %2090 = vmatpush1.msra.mxu0 0.0
  %2091 = vmatprep.subr.mxu0 0.0
  %2092 = vmatpush1.msra.mxu0 0.0
  %2093 = vmatprep.subr.mxu0 0.0
  %2094 = vmatpush1.msra.mxu0 0.0
  %2095 = vmatprep.subr.mxu0 0.0
  %2096 = vmatpush1.msra.mxu0 0.0
  %2097 = vmatprep.subr.mxu0 0.0
  %2098 = vmatpush1.msra.mxu0 0.0
  %2099 = vmatprep.subr.mxu0 0.0
  %2100 = vmatpush1.msra.mxu0 0.0
  %2101 = vmatprep.subr.mxu0 0.0
  %2102 = vmatpush1.msra.mxu0 0.0
  %2103 = vmatprep.subr.mxu0 0.0
  %2104 = vmatpush1.msra.mxu0 0.0
  %2105 = vmatprep.subr.mxu0 0.0
  %2106 = vmatpush1.msra.mxu0 0.0
  %2107 = vmatprep.subr.mxu0 0.0
  %2108 = vmatpush1.msra.mxu0 0.0
  %2109 = vmatprep.subr.mxu0 0.0
  %2110 = vmatpush1.msra.mxu0 0.0
  %2111 = vmatprep.subr.mxu0 0.0
  %2112 = vmatpush1.msra.mxu0 0.0
  %2113 = vmatprep.mubr.f32.mxu0 0.0
  %2114 = vmatmul.mubr.f32.gmra.mrb[0].mxu0 %v484
  %v2115 = vpop.f32.mrb[0].mxu0
  %v2116 = vadd.f32 %v2015, %v2115
  %v2117 = vpop.f32.mrb[0].mxu0
  %v2118 = vadd.f32 %v2017, %v2117
  %2119 = vmatprep.mubr.f32.mxu0 0.0
  %2120 = vmatmul.mubr.f32.gmra.mrb[0].mxu0 %v487
  %v2121 = vpop.f32.mrb[0].mxu0
  %v2122 = vadd.f32 %v2021, %v2121
  %v2123 = vpop.f32.mrb[0].mxu0
  %v2124 = vadd.f32 %v2023, %v2123
  %2125 = vmatprep.mubr.f32.mxu0 0.0
  %2126 = vmatmul.mubr.f32.gmra.mrb[0].mxu0 %v490
  %v2127 = vpop.f32.mrb[0].mxu0
  %v2128 = vadd.f32 %v2027, %v2127
  %v2129 = vpop.f32.mrb[0].mxu0
  %v2130 = vadd.f32 %v2029, %v2129
  %2131 = vmatprep.mubr.f32.mxu0 0.0
  %2132 = vmatmul.mubr.f32.gmra.mrb[0].mxu0 %v493
  %v2133 = vpop.f32.mrb[0].mxu0
  %v2134 = vadd.f32 %v2033, %v2133
  %v2135 = vpop.f32.mrb[0].mxu0
  %v2136 = vadd.f32 %v2035, %v2135
  %2137 = vmatprep.mubr.f32.mxu0 0.0
  %2138 = vmatmul.mubr.f32.gmra.mrb[0].mxu0 %v496
  %v2139 = vpop.f32.mrb[0].mxu0
  %v2140 = vadd.f32 %v2039, %v2139
  %v2141 = vpop.f32.mrb[0].mxu0
  %v2142 = vadd.f32 %v2041, %v2141
  %2143 = vmatprep.mubr.f32.mxu0 0.0
  %2144 = vmatmul.mubr.f32.gmra.mrb[0].mxu0 %v499
  %v2145 = vpop.f32.mrb[0].mxu0
  %v2146 = vadd.f32 %v2045, %v2145
  %v2147 = vpop.f32.mrb[0].mxu0
  %v2148 = vadd.f32 %v2047, %v2147
  %2149 = vdwg.mxu0
  %2150 = vmatprep.subr.mxu0 %v323
  %2151 = vmatpush1.msra.mxu0 %v322
  %2152 = vmatprep.subr.mxu0 %v325
  %2153 = vmatpush1.msra.mxu0 %v324
  %2154 = vmatprep.subr.mxu0 %v327
  %2155 = vmatpush1.msra.mxu0 %v326
  %2156 = vmatprep.subr.mxu0 %v352
  %2157 = vmatpush1.msra.mxu0 %v349
  %2158 = vmatprep.subr.mxu0 0.0
  %2159 = vmatpush1.msra.mxu0 0.0
  %2160 = vmatprep.subr.mxu0 0.0
  %2161 = vmatpush1.msra.mxu0 0.0
  %2162 = vmatprep.subr.mxu0 0.0
  %2163 = vmatpush1.msra.mxu0 0.0
  %2164 = vmatprep.subr.mxu0 0.0
  %2165 = vmatpush1.msra.mxu0 0.0
  %2166 = vmatprep.subr.mxu0 0.0
  %2167 = vmatpush1.msra.mxu0 0.0
  %2168 = vmatprep.subr.mxu0 0.0
  %2169 = vmatpush1.msra.mxu0 0.0
  %2170 = vmatprep.subr.mxu0 0.0
  %2171 = vmatpush1.msra.mxu0 0.0
  %2172 = vmatprep.subr.mxu0 0.0
  %2173 = vmatpush1.msra.mxu0 0.0
  %2174 = vmatprep.subr.mxu0 0.0
  %2175 = vmatpush1.msra.mxu0 0.0
  %2176 = vmatprep.subr.mxu0 0.0
  %2177 = vmatpush1.msra.mxu0 0.0
  %2178 = vmatprep.subr.mxu0 0.0
  %2179 = vmatpush1.msra.mxu0 0.0
  %2180 = vmatprep.subr.mxu0 0.0
  %2181 = vmatpush1.msra.mxu0 0.0
  %2182 = vmatprep.subr.mxu0 0.0
  %2183 = vmatpush1.msra.mxu0 0.0
  %2184 = vmatprep.subr.mxu0 0.0
  %2185 = vmatpush1.msra.mxu0 0.0
  %2186 = vmatprep.subr.mxu0 0.0
  %2187 = vmatpush1.msra.mxu0 0.0
  %2188 = vmatprep.subr.mxu0 0.0
  %2189 = vmatpush1.msra.mxu0 0.0
  %2190 = vmatprep.subr.mxu0 0.0
  %2191 = vmatpush1.msra.mxu0 0.0
  %2192 = vmatprep.subr.mxu0 0.0
  %2193 = vmatpush1.msra.mxu0 0.0
  %2194 = vmatprep.subr.mxu0 0.0
  %2195 = vmatpush1.msra.mxu0 0.0
  %2196 = vmatprep.subr.mxu0 0.0
  %2197 = vmatpush1.msra.mxu0 0.0
  %2198 = vmatprep.subr.mxu0 0.0
  %2199 = vmatpush1.msra.mxu0 0.0
  %2200 = vmatprep.subr.mxu0 0.0
  %2201 = vmatpush1.msra.mxu0 0.0
  %2202 = vmatprep.subr.mxu0 0.0
  %2203 = vmatpush1.msra.mxu0 0.0
  %2204 = vmatprep.subr.mxu0 0.0
  %2205 = vmatpush1.msra.mxu0 0.0
  %2206 = vmatprep.subr.mxu0 0.0
  %2207 = vmatpush1.msra.mxu0 0.0
  %2208 = vmatprep.subr.mxu0 0.0
  %2209 = vmatpush1.msra.mxu0 0.0
  %2210 = vmatprep.subr.mxu0 0.0
  %2211 = vmatpush1.msra.mxu0 0.0
  %2212 = vmatprep.subr.mxu0 0.0
  %2213 = vmatpush1.msra.mxu0 0.0
  %2214 = vmatprep.mubr.f32.mxu0 0.0
  %2215 = vmatmul.mubr.f32.gmra.mrb[0].mxu0 %v1215
  %v2216 = vpop.f32.mrb[0].mxu0
  %v2217 = vadd.f32 0.0, %v2216
  %v2218 = vpop.f32.mrb[0].mxu0
  %v2219 = vadd.f32 0.0, %v2218
  %2220 = vmatprep.mubr.f32.mxu0 0.0
  %2221 = vmatmul.mubr.f32.gmra.mrb[0].mxu0 %v1218
  %v2222 = vpop.f32.mrb[0].mxu0
  %v2223 = vadd.f32 0.0, %v2222
  %v2224 = vpop.f32.mrb[0].mxu0
  %v2225 = vadd.f32 0.0, %v2224
  %2226 = vmatprep.mubr.f32.mxu0 0.0
  %2227 = vmatmul.mubr.f32.gmra.mrb[0].mxu0 %v1221
  %v2228 = vpop.f32.mrb[0].mxu0
  %v2229 = vadd.f32 0.0, %v2228
  %v2230 = vpop.f32.mrb[0].mxu0
  %v2231 = vadd.f32 0.0, %v2230
  %2232 = vmatprep.mubr.f32.mxu0 0.0
  %2233 = vmatmul.mubr.f32.gmra.mrb[0].mxu0 %v1224
  %v2234 = vpop.f32.mrb[0].mxu0
  %v2235 = vadd.f32 0.0, %v2234
  %v2236 = vpop.f32.mrb[0].mxu0
  %v2237 = vadd.f32 0.0, %v2236
  %2238 = vmatprep.mubr.f32.mxu0 0.0
  %2239 = vmatmul.mubr.f32.gmra.mrb[0].mxu0 %v1227
  %v2240 = vpop.f32.mrb[0].mxu0
  %v2241 = vadd.f32 0.0, %v2240
  %v2242 = vpop.f32.mrb[0].mxu0
  %v2243 = vadd.f32 0.0, %v2242
  %2244 = vmatprep.mubr.f32.mxu0 0.0
  %2245 = vmatmul.mubr.f32.gmra.mrb[0].mxu0 %v1230
  %v2246 = vpop.f32.mrb[0].mxu0
  %v2247 = vadd.f32 0.0, %v2246
  %v2248 = vpop.f32.mrb[0].mxu0
  %v2249 = vadd.f32 0.0, %v2248
  %2250 = vdwg.mxu0
  %v2251 = vadd.f32 %v2116, %v2217
  %v2252 = vadd.f32 %v2118, %v2219
  %v2253 = vadd.f32 %v2122, %v2223
  %v2254 = vadd.f32 %v2124, %v2225
  %v2255 = vadd.f32 %v2128, %v2229
  %v2256 = vadd.f32 %v2130, %v2231
  %v2257 = vadd.f32 %v2134, %v2235
  %v2258 = vadd.f32 %v2136, %v2237
  %v2259 = vadd.f32 %v2140, %v2241
  %v2260 = vadd.f32 %v2142, %v2243
  %v2261 = vadd.f32 %v2146, %v2247
  %v2262 = vadd.f32 %v2148, %v2249
  %2263 = vmatprep.subr.mxu0 %v476
  %2264 = vmatpush1.msra.mxu0 %v475
  %2265 = vmatprep.subr.mxu0 %v478
  %2266 = vmatpush1.msra.mxu0 %v477
  %2267 = vmatprep.subr.mxu0 %v480
  %2268 = vmatpush1.msra.mxu0 %v479
  %2269 = vmatprep.subr.mxu0 %v505
  %2270 = vmatpush1.msra.mxu0 %v502
  %2271 = vmatprep.subr.mxu0 0.0
  %2272 = vmatpush1.msra.mxu0 0.0
  %2273 = vmatprep.subr.mxu0 0.0
  %2274 = vmatpush1.msra.mxu0 0.0
  %2275 = vmatprep.subr.mxu0 0.0
  %2276 = vmatpush1.msra.mxu0 0.0
  %2277 = vmatprep.subr.mxu0 0.0
  %2278 = vmatpush1.msra.mxu0 0.0
  %2279 = vmatprep.subr.mxu0 0.0
  %2280 = vmatpush1.msra.mxu0 0.0
  %2281 = vmatprep.subr.mxu0 0.0
  %2282 = vmatpush1.msra.mxu0 0.0
  %2283 = vmatprep.subr.mxu0 0.0
  %2284 = vmatpush1.msra.mxu0 0.0
  %2285 = vmatprep.subr.mxu0 0.0
  %2286 = vmatpush1.msra.mxu0 0.0
  %2287 = vmatprep.subr.mxu0 0.0
  %2288 = vmatpush1.msra.mxu0 0.0
  %2289 = vmatprep.subr.mxu0 0.0
  %2290 = vmatpush1.msra.mxu0 0.0
  %2291 = vmatprep.subr.mxu0 0.0
  %2292 = vmatpush1.msra.mxu0 0.0
  %2293 = vmatprep.subr.mxu0 0.0
  %2294 = vmatpush1.msra.mxu0 0.0
  %2295 = vmatprep.subr.mxu0 0.0
  %2296 = vmatpush1.msra.mxu0 0.0
  %2297 = vmatprep.subr.mxu0 0.0
  %2298 = vmatpush1.msra.mxu0 0.0
  %2299 = vmatprep.subr.mxu0 0.0
  %2300 = vmatpush1.msra.mxu0 0.0
  %2301 = vmatprep.subr.mxu0 0.0
  %2302 = vmatpush1.msra.mxu0 0.0
  %2303 = vmatprep.subr.mxu0 0.0
  %2304 = vmatpush1.msra.mxu0 0.0
  %2305 = vmatprep.subr.mxu0 0.0
  %2306 = vmatpush1.msra.mxu0 0.0
  %2307 = vmatprep.subr.mxu0 0.0
  %2308 = vmatpush1.msra.mxu0 0.0
  %2309 = vmatprep.subr.mxu0 0.0
  %2310 = vmatpush1.msra.mxu0 0.0
  %2311 = vmatprep.subr.mxu0 0.0
  %2312 = vmatpush1.msra.mxu0 0.0
  %2313 = vmatprep.subr.mxu0 0.0
  %2314 = vmatpush1.msra.mxu0 0.0
  %2315 = vmatprep.subr.mxu0 0.0
  %2316 = vmatpush1.msra.mxu0 0.0
  %2317 = vmatprep.subr.mxu0 0.0
  %2318 = vmatpush1.msra.mxu0 0.0
  %2319 = vmatprep.subr.mxu0 0.0
  %2320 = vmatpush1.msra.mxu0 0.0
  %2321 = vmatprep.subr.mxu0 0.0
  %2322 = vmatpush1.msra.mxu0 0.0
  %2323 = vmatprep.subr.mxu0 0.0
  %2324 = vmatpush1.msra.mxu0 0.0
  %2325 = vmatprep.subr.mxu0 0.0
  %2326 = vmatpush1.msra.mxu0 0.0
  %2327 = vmatprep.mubr.f32.mxu0 0.0
  %2328 = vmatmul.mubr.f32.gmra.mrb[0].mxu0 %v1812
  %v2329 = vpop.f32.mrb[0].mxu0
  %v2330 = vadd.f32 0.0, %v2329
  %v2331 = vpop.f32.mrb[0].mxu0
  %v2332 = vadd.f32 0.0, %v2331
  %2333 = vmatprep.mubr.f32.mxu0 0.0
  %2334 = vmatmul.mubr.f32.gmra.mrb[0].mxu0 %v1815
  %v2335 = vpop.f32.mrb[0].mxu0
  %v2336 = vadd.f32 0.0, %v2335
  %v2337 = vpop.f32.mrb[0].mxu0
  %v2338 = vadd.f32 0.0, %v2337
  %2339 = vmatprep.mubr.f32.mxu0 0.0
  %2340 = vmatmul.mubr.f32.gmra.mrb[0].mxu0 %v1818
  %v2341 = vpop.f32.mrb[0].mxu0
  %v2342 = vadd.f32 0.0, %v2341
  %v2343 = vpop.f32.mrb[0].mxu0
  %v2344 = vadd.f32 0.0, %v2343
  %2345 = vmatprep.mubr.f32.mxu0 0.0
  %2346 = vmatmul.mubr.f32.gmra.mrb[0].mxu0 %v1821
  %v2347 = vpop.f32.mrb[0].mxu0
  %v2348 = vadd.f32 0.0, %v2347
  %v2349 = vpop.f32.mrb[0].mxu0
  %v2350 = vadd.f32 0.0, %v2349
  %2351 = vmatprep.mubr.f32.mxu0 0.0
  %2352 = vmatmul.mubr.f32.gmra.mrb[0].mxu0 %v1824
  %v2353 = vpop.f32.mrb[0].mxu0
  %v2354 = vadd.f32 0.0, %v2353
  %v2355 = vpop.f32.mrb[0].mxu0
  %v2356 = vadd.f32 0.0, %v2355
  %2357 = vmatprep.mubr.f32.mxu0 0.0
  %2358 = vmatmul.mubr.f32.gmra.mrb[0].mxu0 %v1827
  %v2359 = vpop.f32.mrb[0].mxu0
  %v2360 = vadd.f32 0.0, %v2359
  %v2361 = vpop.f32.mrb[0].mxu0
  %v2362 = vadd.f32 0.0, %v2361
  %2363 = vdwg.mxu0
  %v2364 = vadd.f32 %v2251, %v2330
  %v2365 = vadd.f32 %v2252, %v2332
  %v2366 = vadd.f32 %v2253, %v2336
  %v2367 = vadd.f32 %v2254, %v2338
  %v2368 = vadd.f32 %v2255, %v2342
  %v2369 = vadd.f32 %v2256, %v2344
  %v2370 = vadd.f32 %v2257, %v2348
  %v2371 = vadd.f32 %v2258, %v2350
  %v2372 = vadd.f32 %v2259, %v2354
  %v2373 = vadd.f32 %v2260, %v2356
  %v2374 = vadd.f32 %v2261, %v2360
  %v2375 = vadd.f32 %v2262, %v2362
  %s2376 = scalar_lea.vmem %s0, 336
  %v2377 = vld [vmem:[%s2376] sm:$0xff]
  %v2378 = vld [vmem:[%s2376 + $0x8] sm:$0xff]
  %v2379 = vld [vmem:[%s2376 + $0x10] sm:$0xff]
  %v2380 = vld [vmem:[%s2376 + $0x18] sm:$0xff]
  %v2381 = vld [vmem:[%s2376 + $0x20] sm:$0xff]
  %v2382 = vld [vmem:[%s2376 + $0x28] sm:$0xff]
  %v2384 = vsel %vm62, %v2377, 0
  %v2387 = vsel %vm62, %v2378, 0
  %v2390 = vsel %vm62, %v2379, 0
  %v2393 = vsel %vm62, %v2380, 0
  %v2396 = vsel %vm62, %v2381, 0
  %v2399 = vsel %vm62, %v2382, 0
  %2401 = vmatprep.subr.mxu0 %v629
  %2402 = vmatpush1.msra.mxu0 %v628
  %2403 = vmatprep.subr.mxu0 %v631
  %2404 = vmatpush1.msra.mxu0 %v630
  %2405 = vmatprep.subr.mxu0 %v633
  %2406 = vmatpush1.msra.mxu0 %v632
  %2407 = vmatprep.subr.mxu0 %v658
  %2408 = vmatpush1.msra.mxu0 %v655
  %2409 = vmatprep.subr.mxu0 0.0
  %2410 = vmatpush1.msra.mxu0 0.0
  %2411 = vmatprep.subr.mxu0 0.0
  %2412 = vmatpush1.msra.mxu0 0.0
  %2413 = vmatprep.subr.mxu0 0.0
  %2414 = vmatpush1.msra.mxu0 0.0
  %2415 = vmatprep.subr.mxu0 0.0
  %2416 = vmatpush1.msra.mxu0 0.0
  %2417 = vmatprep.subr.mxu0 0.0
  %2418 = vmatpush1.msra.mxu0 0.0
  %2419 = vmatprep.subr.mxu0 0.0
  %2420 = vmatpush1.msra.mxu0 0.0
  %2421 = vmatprep.subr.mxu0 0.0
  %2422 = vmatpush1.msra.mxu0 0.0
  %2423 = vmatprep.subr.mxu0 0.0
  %2424 = vmatpush1.msra.mxu0 0.0
  %2425 = vmatprep.subr.mxu0 0.0
  %2426 = vmatpush1.msra.mxu0 0.0
  %2427 = vmatprep.subr.mxu0 0.0
  %2428 = vmatpush1.msra.mxu0 0.0
  %2429 = vmatprep.subr.mxu0 0.0
  %2430 = vmatpush1.msra.mxu0 0.0
  %2431 = vmatprep.subr.mxu0 0.0
  %2432 = vmatpush1.msra.mxu0 0.0
  %2433 = vmatprep.subr.mxu0 0.0
  %2434 = vmatpush1.msra.mxu0 0.0
  %2435 = vmatprep.subr.mxu0 0.0
  %2436 = vmatpush1.msra.mxu0 0.0
  %2437 = vmatprep.subr.mxu0 0.0
  %2438 = vmatpush1.msra.mxu0 0.0
  %2439 = vmatprep.subr.mxu0 0.0
  %2440 = vmatpush1.msra.mxu0 0.0
  %2441 = vmatprep.subr.mxu0 0.0
  %2442 = vmatpush1.msra.mxu0 0.0
  %2443 = vmatprep.subr.mxu0 0.0
  %2444 = vmatpush1.msra.mxu0 0.0
  %2445 = vmatprep.subr.mxu0 0.0
  %2446 = vmatpush1.msra.mxu0 0.0
  %2447 = vmatprep.subr.mxu0 0.0
  %2448 = vmatpush1.msra.mxu0 0.0
  %2449 = vmatprep.subr.mxu0 0.0
  %2450 = vmatpush1.msra.mxu0 0.0
  %2451 = vmatprep.subr.mxu0 0.0
  %2452 = vmatpush1.msra.mxu0 0.0
  %2453 = vmatprep.subr.mxu0 0.0
  %2454 = vmatpush1.msra.mxu0 0.0
  %2455 = vmatprep.subr.mxu0 0.0
  %2456 = vmatpush1.msra.mxu0 0.0
  %2457 = vmatprep.subr.mxu0 0.0
  %2458 = vmatpush1.msra.mxu0 0.0
  %2459 = vmatprep.subr.mxu0 0.0
  %2460 = vmatpush1.msra.mxu0 0.0
  %2461 = vmatprep.subr.mxu0 0.0
  %2462 = vmatpush1.msra.mxu0 0.0
  %2463 = vmatprep.subr.mxu0 0.0
  %2464 = vmatpush1.msra.mxu0 0.0
  %2465 = vmatprep.mubr.f32.mxu0 0.0
  %2466 = vmatmul.mubr.f32.gmra.mrb[0].mxu0 %v2384
  %v2467 = vpop.f32.mrb[0].mxu0
  %v2468 = vadd.f32 0.0, %v2467
  %v2469 = vpop.f32.mrb[0].mxu0
  %v2470 = vadd.f32 0.0, %v2469
  %2471 = vmatprep.mubr.f32.mxu0 0.0
  %2472 = vmatmul.mubr.f32.gmra.mrb[0].mxu0 %v2387
  %v2473 = vpop.f32.mrb[0].mxu0
  %v2474 = vadd.f32 0.0, %v2473
  %v2475 = vpop.f32.mrb[0].mxu0
  %v2476 = vadd.f32 0.0, %v2475
  %2477 = vmatprep.mubr.f32.mxu0 0.0
  %2478 = vmatmul.mubr.f32.gmra.mrb[0].mxu0 %v2390
  %v2479 = vpop.f32.mrb[0].mxu0
  %v2480 = vadd.f32 0.0, %v2479
  %v2481 = vpop.f32.mrb[0].mxu0
  %v2482 = vadd.f32 0.0, %v2481
  %2483 = vmatprep.mubr.f32.mxu0 0.0
  %2484 = vmatmul.mubr.f32.gmra.mrb[0].mxu0 %v2393
  %v2485 = vpop.f32.mrb[0].mxu0
  %v2486 = vadd.f32 0.0, %v2485
  %v2487 = vpop.f32.mrb[0].mxu0
  %v2488 = vadd.f32 0.0, %v2487
  %2489 = vmatprep.mubr.f32.mxu0 0.0
  %2490 = vmatmul.mubr.f32.gmra.mrb[0].mxu0 %v2396
  %v2491 = vpop.f32.mrb[0].mxu0
  %v2492 = vadd.f32 0.0, %v2491
  %v2493 = vpop.f32.mrb[0].mxu0
  %v2494 = vadd.f32 0.0, %v2493
  %2495 = vmatprep.mubr.f32.mxu0 0.0
  %2496 = vmatmul.mubr.f32.gmra.mrb[0].mxu0 %v2399
  %v2497 = vpop.f32.mrb[0].mxu0
  %v2498 = vadd.f32 0.0, %v2497
  %v2499 = vpop.f32.mrb[0].mxu0
  %v2500 = vadd.f32 0.0, %v2499
  %2501 = vdwg.mxu0
  %v2502 = vadd.f32 %v2364, %v2468
  %v2503 = vadd.f32 %v2365, %v2470
  %v2504 = vadd.f32 %v2366, %v2474
  %v2505 = vadd.f32 %v2367, %v2476
  %v2506 = vadd.f32 %v2368, %v2480
  %v2507 = vadd.f32 %v2369, %v2482
  %v2508 = vadd.f32 %v2370, %v2486
  %v2509 = vadd.f32 %v2371, %v2488
  %v2510 = vadd.f32 %v2372, %v2492
  %v2511 = vadd.f32 %v2373, %v2494
  %v2512 = vadd.f32 %v2374, %v2498
  %v2513 = vadd.f32 %v2375, %v2500
  %v2514 = vmax.f32 %v2502, %v2503
  %v2515 = vmax.f32 %v2504, %v2505
  %v2516 = vmax.f32 %v2506, %v2507
  %v2517 = vmax.f32 %v2508, %v2509
  %v2518 = vmax.f32 %v2510, %v2511
  %v2519 = vmax.f32 %v2512, %v2513
  %v2520 = vmax.f32 %v1942, %v2514
  %v2521 = vmax.f32 %v1943, %v2515
  %v2522 = vmax.f32 %v1944, %v2516
  %v2523 = vmax.f32 %v1945, %v2517
  %v2524 = vmax.f32 %v1946, %v2518
  %v2525 = vmax.f32 %v1947, %v2519
  %v2526 = vadd.f32 %v2520, %v1362
  %v2527 = vadd.f32 %v2521, %v1362
  %v2528 = vadd.f32 %v2522, %v1362
  %v2529 = vadd.f32 %v2523, %v1362
  %v2530 = vadd.f32 %v2524, %v1362
  %v2531 = vadd.f32 %v2525, %v1362
  %v2532 = vmax.f32 %v2526, 0.0
  %v2533 = vmax.f32 %v2527, 0.0
  %v2534 = vmax.f32 %v2528, 0.0
  %v2535 = vmax.f32 %v2529, 0.0
  %v2536 = vmax.f32 %v2530, 0.0
  %v2537 = vmax.f32 %v2531, 0.0
  %v2538 = vld [vmem:[%s3] sm:$0xff]
  %v2539 = vld [vmem:[%s3 + $0x8] sm:$0xff]
  %v2540 = vld [vmem:[%s3 + $0x10] sm:$0xff]
  %v2541 = vld [vmem:[%s3 + $0x18] sm:$0xff]
  %v2542 = vld [vmem:[%s3 + $0x20] sm:$0xff]
  %v2543 = vld [vmem:[%s3 + $0x28] sm:$0xff]
  %v2544 = vld [vmem:[%s3 + $0x30] sm:$0xff]
  %v2545 = vld [vmem:[%s3 + $0x38] sm:$0xff]
  %v2546 = vld [vmem:[%s3 + $0x40] sm:$0xff]
  %v2547 = vld [vmem:[%s3 + $0x48] sm:$0xff]
  %v2548 = vld [vmem:[%s3 + $0x50] sm:$0xff]
  %v2549 = vld [vmem:[%s3 + $0x58] sm:$0xff]
  %v2550 = vld [vmem:[%s3 + $0x60] sm:$0xff]
  %v2551 = vld [vmem:[%s3 + $0x68] sm:$0xff]
  %v2552 = vld [vmem:[%s3 + $0x70] sm:$0xff]
  %v2553 = vld [vmem:[%s3 + $0x78] sm:$0xff]
  %v2554 = vld [vmem:[%s3 + $0x80] sm:$0xff]
  %v2555 = vld [vmem:[%s3 + $0x88] sm:$0xff]
  %v2556 = vld [vmem:[%s3 + $0x90] sm:$0xff]
  %v2557 = vld [vmem:[%s3 + $0x98] sm:$0xff]
  %v2558 = vld [vmem:[%s3 + $0xa0] sm:$0xff]
  %v2559 = vld [vmem:[%s3 + $0xa8] sm:$0xff]
  %v2560 = vld [vmem:[%s3 + $0xb0] sm:$0xff]
  %v2561 = vld [vmem:[%s3 + $0xb8] sm:$0xff]
  %v2562 = vld [vmem:[%s3 + $0xc0] sm:$0xff]
  %v2563 = vld [vmem:[%s3 + $0xc8] sm:$0xff]
  %v2564 = vld [vmem:[%s3 + $0xd0] sm:$0xff]
  %v2565 = vld [vmem:[%s3 + $0xd8] sm:$0xff]
  %v2566 = vld [vmem:[%s3 + $0xe0] sm:$0xff]
  %v2567 = vld [vmem:[%s3 + $0xe8] sm:$0xff]
  %v2568 = vld [vmem:[%s3 + $0xf0] sm:$0xff]
  %v2569 = vld [vmem:[%s3 + $0xf8] sm:$0xff]
  %s2570 = scalar_lea.vmem %s3, 256
  %v2571 = vld [vmem:[%s2570] sm:$0xff]
  %v2572 = vld [vmem:[%s2570 + $0x8] sm:$0xff]
  %v2573 = vld [vmem:[%s2570 + $0x10] sm:$0xff]
  %v2574 = vld [vmem:[%s2570 + $0x18] sm:$0xff]
  %v2575 = vld [vmem:[%s2570 + $0x20] sm:$0xff]
  %v2576 = vld [vmem:[%s2570 + $0x28] sm:$0xff]
  %v2577 = vld [vmem:[%s2570 + $0x30] sm:$0xff]
  %v2578 = vld [vmem:[%s2570 + $0x38] sm:$0xff]
  %v2579 = vld [vmem:[%s2570 + $0x40] sm:$0xff]
  %v2580 = vld [vmem:[%s2570 + $0x48] sm:$0xff]
  %v2581 = vld [vmem:[%s2570 + $0x50] sm:$0xff]
  %v2582 = vld [vmem:[%s2570 + $0x58] sm:$0xff]
  %v2583 = vld [vmem:[%s2570 + $0x60] sm:$0xff]
  %v2584 = vld [vmem:[%s2570 + $0x68] sm:$0xff]
  %v2585 = vld [vmem:[%s2570 + $0x70] sm:$0xff]
  %v2586 = vld [vmem:[%s2570 + $0x78] sm:$0xff]
  %v2587 = vld [vmem:[%s2570 + $0x80] sm:$0xff]
  %v2588 = vld [vmem:[%s2570 + $0x88] sm:$0xff]
  %v2589 = vld [vmem:[%s2570 + $0x90] sm:$0xff]
  %v2590 = vld [vmem:[%s2570 + $0x98] sm:$0xff]
  %v2591 = vld [vmem:[%s2570 + $0xa0] sm:$0xff]
  %v2592 = vld [vmem:[%s2570 + $0xa8] sm:$0xff]
  %v2593 = vld [vmem:[%s2570 + $0xb0] sm:$0xff]
  %v2594 = vld [vmem:[%s2570 + $0xb8] sm:$0xff]
  %v2595 = vld [vmem:[%s2570 + $0xc0] sm:$0xff]
  %v2596 = vld [vmem:[%s2570 + $0xc8] sm:$0xff]
  %v2597 = vld [vmem:[%s2570 + $0xd0] sm:$0xff]
  %v2598 = vld [vmem:[%s2570 + $0xd8] sm:$0xff]
  %v2599 = vld [vmem:[%s2570 + $0xe0] sm:$0xff]
  %v2600 = vld [vmem:[%s2570 + $0xe8] sm:$0xff]
  %v2601 = vld [vmem:[%s2570 + $0xf0] sm:$0xff]
  %v2602 = vld [vmem:[%s2570 + $0xf8] sm:$0xff]
  %2603 = vmatprep.subr.mxu0 %v2572
  %2604 = vmatpush1.msra.mxu0 %v2571
  %2605 = vmatprep.subr.mxu0 %v2574
  %2606 = vmatpush1.msra.mxu0 %v2573
  %2607 = vmatprep.subr.mxu0 %v2576
  %2608 = vmatpush1.msra.mxu0 %v2575
  %2609 = vmatprep.subr.mxu0 %v2578
  %2610 = vmatpush1.msra.mxu0 %v2577
  %2611 = vmatprep.subr.mxu0 %v2580
  %2612 = vmatpush1.msra.mxu0 %v2579
  %2613 = vmatprep.subr.mxu0 %v2582
  %2614 = vmatpush1.msra.mxu0 %v2581
  %2615 = vmatprep.subr.mxu0 %v2584
  %2616 = vmatpush1.msra.mxu0 %v2583
  %2617 = vmatprep.subr.mxu0 %v2586
  %2618 = vmatpush1.msra.mxu0 %v2585
  %2619 = vmatprep.subr.mxu0 %v2588
  %2620 = vmatpush1.msra.mxu0 %v2587
  %2621 = vmatprep.subr.mxu0 %v2590
  %2622 = vmatpush1.msra.mxu0 %v2589
  %2623 = vmatprep.subr.mxu0 %v2592
  %2624 = vmatpush1.msra.mxu0 %v2591
  %2625 = vmatprep.subr.mxu0 %v2594
  %2626 = vmatpush1.msra.mxu0 %v2593
  %2627 = vmatprep.subr.mxu0 %v2596
  %2628 = vmatpush1.msra.mxu0 %v2595
  %2629 = vmatprep.subr.mxu0 %v2598
  %2630 = vmatpush1.msra.mxu0 %v2597
  %2631 = vmatprep.subr.mxu0 %v2600
  %2632 = vmatpush1.msra.mxu0 %v2599
  %2633 = vmatprep.subr.mxu0 %v2602
  %2634 = vmatpush1.msra.mxu0 %v2601
  %2635 = vmatprep.subr.mxu0 0.0
  %2636 = vmatpush1.msra.mxu0 0.0
  %2637 = vmatprep.subr.mxu0 0.0
  %2638 = vmatpush1.msra.mxu0 0.0
  %2639 = vmatprep.subr.mxu0 0.0
  %2640 = vmatpush1.msra.mxu0 0.0
  %2641 = vmatprep.subr.mxu0 0.0
  %2642 = vmatpush1.msra.mxu0 0.0
  %2643 = vmatprep.subr.mxu0 0.0
  %2644 = vmatpush1.msra.mxu0 0.0
  %2645 = vmatprep.subr.mxu0 0.0
  %2646 = vmatpush1.msra.mxu0 0.0
  %2647 = vmatprep.subr.mxu0 0.0
  %2648 = vmatpush1.msra.mxu0 0.0
  %2649 = vmatprep.subr.mxu0 0.0
  %2650 = vmatpush1.msra.mxu0 0.0
  %2651 = vmatprep.subr.mxu0 0.0
  %2652 = vmatpush1.msra.mxu0 0.0
  %2653 = vmatprep.subr.mxu0 0.0
  %2654 = vmatpush1.msra.mxu0 0.0
  %2655 = vmatprep.subr.mxu0 0.0
  %2656 = vmatpush1.msra.mxu0 0.0
  %2657 = vmatprep.subr.mxu0 0.0
  %2658 = vmatpush1.msra.mxu0 0.0
  %2659 = vmatprep.subr.mxu0 0.0
  %2660 = vmatpush1.msra.mxu0 0.0
  %2661 = vmatprep.subr.mxu0 0.0
  %2662 = vmatpush1.msra.mxu0 0.0
  %2663 = vmatprep.subr.mxu0 0.0
  %2664 = vmatpush1.msra.mxu0 0.0
  %2665 = vmatprep.subr.mxu0 0.0
  %2666 = vmatpush1.msra.mxu0 0.0
  %2667 = vmatprep.mubr.f32.mxu0 0.0
  %2668 = vmatmul.mubr.f32.gmra.mrb[0].mxu0 %v2532
  %v2669 = vpop.f32.mrb[0].mxu0
  %v2670 = vadd.f32 0.0, %v2669
  %v2671 = vpop.f32.mrb[0].mxu0
  %v2672 = vadd.f32 0.0, %v2671
  %2673 = vmatprep.mubr.f32.mxu0 0.0
  %2674 = vmatmul.mubr.f32.gmra.mrb[0].mxu0 %v2533
  %v2675 = vpop.f32.mrb[0].mxu0
  %v2676 = vadd.f32 0.0, %v2675
  %v2677 = vpop.f32.mrb[0].mxu0
  %v2678 = vadd.f32 0.0, %v2677
  %2679 = vmatprep.mubr.f32.mxu0 0.0
  %2680 = vmatmul.mubr.f32.gmra.mrb[0].mxu0 %v2534
  %v2681 = vpop.f32.mrb[0].mxu0
  %v2682 = vadd.f32 0.0, %v2681
  %v2683 = vpop.f32.mrb[0].mxu0
  %v2684 = vadd.f32 0.0, %v2683
  %2685 = vmatprep.mubr.f32.mxu0 0.0
  %2686 = vmatmul.mubr.f32.gmra.mrb[0].mxu0 %v2535
  %v2687 = vpop.f32.mrb[0].mxu0
  %v2688 = vadd.f32 0.0, %v2687
  %v2689 = vpop.f32.mrb[0].mxu0
  %v2690 = vadd.f32 0.0, %v2689
  %2691 = vdwg.mxu0
  %2692 = vmatprep.subr.mxu0 %v2539
  %2693 = vmatpush1.msra.mxu0 %v2538
  %2694 = vmatprep.subr.mxu0 %v2541
  %2695 = vmatpush1.msra.mxu0 %v2540
  %2696 = vmatprep.subr.mxu0 %v2543
  %2697 = vmatpush1.msra.mxu0 %v2542
  %2698 = vmatprep.subr.mxu0 %v2545
  %2699 = vmatpush1.msra.mxu0 %v2544
  %2700 = vmatprep.subr.mxu0 %v2547
  %2701 = vmatpush1.msra.mxu0 %v2546
  %2702 = vmatprep.subr.mxu0 %v2549
  %2703 = vmatpush1.msra.mxu0 %v2548
  %2704 = vmatprep.subr.mxu0 %v2551
  %2705 = vmatpush1.msra.mxu0 %v2550
  %2706 = vmatprep.subr.mxu0 %v2553
  %2707 = vmatpush1.msra.mxu0 %v2552
  %2708 = vmatprep.subr.mxu0 %v2555
  %2709 = vmatpush1.msra.mxu0 %v2554
  %2710 = vmatprep.subr.mxu0 %v2557
  %2711 = vmatpush1.msra.mxu0 %v2556
  %2712 = vmatprep.subr.mxu0 %v2559
  %2713 = vmatpush1.msra.mxu0 %v2558
  %2714 = vmatprep.subr.mxu0 %v2561
  %2715 = vmatpush1.msra.mxu0 %v2560
  %2716 = vmatprep.subr.mxu0 %v2563
  %2717 = vmatpush1.msra.mxu0 %v2562
  %2718 = vmatprep.subr.mxu0 %v2565
  %2719 = vmatpush1.msra.mxu0 %v2564
  %2720 = vmatprep.subr.mxu0 %v2567
  %2721 = vmatpush1.msra.mxu0 %v2566
  %2722 = vmatprep.subr.mxu0 %v2569
  %2723 = vmatpush1.msra.mxu0 %v2568
  %2724 = vmatprep.subr.mxu0 0.0
  %2725 = vmatpush1.msra.mxu0 0.0
  %2726 = vmatprep.subr.mxu0 0.0
  %2727 = vmatpush1.msra.mxu0 0.0
  %2728 = vmatprep.subr.mxu0 0.0
  %2729 = vmatpush1.msra.mxu0 0.0
  %2730 = vmatprep.subr.mxu0 0.0
  %2731 = vmatpush1.msra.mxu0 0.0
  %2732 = vmatprep.subr.mxu0 0.0
  %2733 = vmatpush1.msra.mxu0 0.0
  %2734 = vmatprep.subr.mxu0 0.0
  %2735 = vmatpush1.msra.mxu0 0.0
  %2736 = vmatprep.subr.mxu0 0.0
  %2737 = vmatpush1.msra.mxu0 0.0
  %2738 = vmatprep.subr.mxu0 0.0
  %2739 = vmatpush1.msra.mxu0 0.0
  %2740 = vmatprep.subr.mxu0 0.0
  %2741 = vmatpush1.msra.mxu0 0.0
  %2742 = vmatprep.subr.mxu0 0.0
  %2743 = vmatpush1.msra.mxu0 0.0
  %2744 = vmatprep.subr.mxu0 0.0
  %2745 = vmatpush1.msra.mxu0 0.0
  %2746 = vmatprep.subr.mxu0 0.0
  %2747 = vmatpush1.msra.mxu0 0.0
  %2748 = vmatprep.subr.mxu0 0.0
  %2749 = vmatpush1.msra.mxu0 0.0
  %2750 = vmatprep.subr.mxu0 0.0
  %2751 = vmatpush1.msra.mxu0 0.0
  %2752 = vmatprep.subr.mxu0 0.0
  %2753 = vmatpush1.msra.mxu0 0.0
  %2754 = vmatprep.subr.mxu0 0.0
  %2755 = vmatpush1.msra.mxu0 0.0
  %2756 = vmatprep.mubr.f32.mxu0 0.0
  %2757 = vmatmul.mubr.f32.gmra.mrb[0].mxu0 %v1370
  %v2758 = vpop.f32.mrb[0].mxu0
  %v2759 = vadd.f32 %v2670, %v2758
  %v2760 = vpop.f32.mrb[0].mxu0
  %v2761 = vadd.f32 %v2672, %v2760
  %2762 = vmatprep.mubr.f32.mxu0 0.0
  %2763 = vmatmul.mubr.f32.gmra.mrb[0].mxu0 %v1371
  %v2764 = vpop.f32.mrb[0].mxu0
  %v2765 = vadd.f32 %v2676, %v2764
  %v2766 = vpop.f32.mrb[0].mxu0
  %v2767 = vadd.f32 %v2678, %v2766
  %2768 = vmatprep.mubr.f32.mxu0 0.0
  %2769 = vmatmul.mubr.f32.gmra.mrb[0].mxu0 %v1372
  %v2770 = vpop.f32.mrb[0].mxu0
  %v2771 = vadd.f32 %v2682, %v2770
  %v2772 = vpop.f32.mrb[0].mxu0
  %v2773 = vadd.f32 %v2684, %v2772
  %2774 = vmatprep.mubr.f32.mxu0 0.0
  %2775 = vmatmul.mubr.f32.gmra.mrb[0].mxu0 %v1373
  %v2776 = vpop.f32.mrb[0].mxu0
  %v2777 = vadd.f32 %v2688, %v2776
  %v2778 = vpop.f32.mrb[0].mxu0
  %v2779 = vadd.f32 %v2690, %v2778
  %2780 = vdwg.mxu0
  %s2781 = scalar_lea.vmem %s3, 512
  %v2782 = vld [vmem:[%s2781] sm:$0xff]
  %v2783 = vld [vmem:[%s2781 + $0x8] sm:$0xff]
  %v2784 = vld [vmem:[%s2781 + $0x10] sm:$0xff]
  %v2785 = vld [vmem:[%s2781 + $0x18] sm:$0xff]
  %v2786 = vld [vmem:[%s2781 + $0x20] sm:$0xff]
  %v2787 = vld [vmem:[%s2781 + $0x28] sm:$0xff]
  %v2788 = vld [vmem:[%s2781 + $0x30] sm:$0xff]
  %v2789 = vld [vmem:[%s2781 + $0x38] sm:$0xff]
  %v2790 = vld [vmem:[%s2781 + $0x40] sm:$0xff]
  %v2791 = vld [vmem:[%s2781 + $0x48] sm:$0xff]
  %v2792 = vld [vmem:[%s2781 + $0x50] sm:$0xff]
  %v2793 = vld [vmem:[%s2781 + $0x58] sm:$0xff]
  %v2794 = vld [vmem:[%s2781 + $0x60] sm:$0xff]
  %v2795 = vld [vmem:[%s2781 + $0x68] sm:$0xff]
  %v2796 = vld [vmem:[%s2781 + $0x70] sm:$0xff]
  %v2797 = vld [vmem:[%s2781 + $0x78] sm:$0xff]
  %v2798 = vld [vmem:[%s2781 + $0x80] sm:$0xff]
  %v2799 = vld [vmem:[%s2781 + $0x88] sm:$0xff]
  %v2800 = vld [vmem:[%s2781 + $0x90] sm:$0xff]
  %v2801 = vld [vmem:[%s2781 + $0x98] sm:$0xff]
  %v2802 = vld [vmem:[%s2781 + $0xa0] sm:$0xff]
  %v2803 = vld [vmem:[%s2781 + $0xa8] sm:$0xff]
  %v2804 = vld [vmem:[%s2781 + $0xb0] sm:$0xff]
  %v2805 = vld [vmem:[%s2781 + $0xb8] sm:$0xff]
  %v2806 = vld [vmem:[%s2781 + $0xc0] sm:$0xff]
  %v2807 = vld [vmem:[%s2781 + $0xc8] sm:$0xff]
  %v2808 = vld [vmem:[%s2781 + $0xd0] sm:$0xff]
  %v2809 = vld [vmem:[%s2781 + $0xd8] sm:$0xff]
  %v2810 = vld [vmem:[%s2781 + $0xe0] sm:$0xff]
  %v2811 = vld [vmem:[%s2781 + $0xe8] sm:$0xff]
  %v2812 = vld [vmem:[%s2781 + $0xf0] sm:$0xff]
  %v2813 = vld [vmem:[%s2781 + $0xf8] sm:$0xff]
  %2814 = vmatprep.subr.mxu0 %v2783
  %2815 = vmatpush1.msra.mxu0 %v2782
  %2816 = vmatprep.subr.mxu0 %v2785
  %2817 = vmatpush1.msra.mxu0 %v2784
  %2818 = vmatprep.subr.mxu0 %v2787
  %2819 = vmatpush1.msra.mxu0 %v2786
  %2820 = vmatprep.subr.mxu0 %v2789
  %2821 = vmatpush1.msra.mxu0 %v2788
  %2822 = vmatprep.subr.mxu0 %v2791
  %2823 = vmatpush1.msra.mxu0 %v2790
  %2824 = vmatprep.subr.mxu0 %v2793
  %2825 = vmatpush1.msra.mxu0 %v2792
  %2826 = vmatprep.subr.mxu0 %v2795
  %2827 = vmatpush1.msra.mxu0 %v2794
  %2828 = vmatprep.subr.mxu0 %v2797
  %2829 = vmatpush1.msra.mxu0 %v2796
  %2830 = vmatprep.subr.mxu0 %v2799
  %2831 = vmatpush1.msra.mxu0 %v2798
  %2832 = vmatprep.subr.mxu0 %v2801
  %2833 = vmatpush1.msra.mxu0 %v2800
  %2834 = vmatprep.subr.mxu0 %v2803
  %2835 = vmatpush1.msra.mxu0 %v2802
  %2836 = vmatprep.subr.mxu0 %v2805
  %2837 = vmatpush1.msra.mxu0 %v2804
  %2838 = vmatprep.subr.mxu0 %v2807
  %2839 = vmatpush1.msra.mxu0 %v2806
  %2840 = vmatprep.subr.mxu0 %v2809
  %2841 = vmatpush1.msra.mxu0 %v2808
  %2842 = vmatprep.subr.mxu0 %v2811
  %2843 = vmatpush1.msra.mxu0 %v2810
  %2844 = vmatprep.subr.mxu0 %v2813
  %2845 = vmatpush1.msra.mxu0 %v2812
  %2846 = vmatprep.subr.mxu0 0.0
  %2847 = vmatpush1.msra.mxu0 0.0
  %2848 = vmatprep.subr.mxu0 0.0
  %2849 = vmatpush1.msra.mxu0 0.0
  %2850 = vmatprep.subr.mxu0 0.0
  %2851 = vmatpush1.msra.mxu0 0.0
  %2852 = vmatprep.subr.mxu0 0.0
  %2853 = vmatpush1.msra.mxu0 0.0
  %2854 = vmatprep.subr.mxu0 0.0
  %2855 = vmatpush1.msra.mxu0 0.0
  %2856 = vmatprep.subr.mxu0 0.0
  %2857 = vmatpush1.msra.mxu0 0.0
  %2858 = vmatprep.subr.mxu0 0.0
  %2859 = vmatpush1.msra.mxu0 0.0
  %2860 = vmatprep.subr.mxu0 0.0
  %2861 = vmatpush1.msra.mxu0 0.0
  %2862 = vmatprep.subr.mxu0 0.0
  %2863 = vmatpush1.msra.mxu0 0.0
  %2864 = vmatprep.subr.mxu0 0.0
  %2865 = vmatpush1.msra.mxu0 0.0
  %2866 = vmatprep.subr.mxu0 0.0
  %2867 = vmatpush1.msra.mxu0 0.0
  %2868 = vmatprep.subr.mxu0 0.0
  %2869 = vmatpush1.msra.mxu0 0.0
  %2870 = vmatprep.subr.mxu0 0.0
  %2871 = vmatpush1.msra.mxu0 0.0
  %2872 = vmatprep.subr.mxu0 0.0
  %2873 = vmatpush1.msra.mxu0 0.0
  %2874 = vmatprep.subr.mxu0 0.0
  %2875 = vmatpush1.msra.mxu0 0.0
  %2876 = vmatprep.subr.mxu0 0.0
  %2877 = vmatpush1.msra.mxu0 0.0
  %2878 = vmatprep.mubr.f32.mxu0 0.0
  %2879 = vmatmul.mubr.f32.gmra.mrb[0].mxu0 %v1371
  %v2880 = vpop.f32.mrb[0].mxu0
  %v2881 = vadd.f32 0.0, %v2880
  %v2882 = vpop.f32.mrb[0].mxu0
  %v2883 = vadd.f32 0.0, %v2882
  %2884 = vmatprep.mubr.f32.mxu0 0.0
  %2885 = vmatmul.mubr.f32.gmra.mrb[0].mxu0 %v1372
  %v2886 = vpop.f32.mrb[0].mxu0
  %v2887 = vadd.f32 0.0, %v2886
  %v2888 = vpop.f32.mrb[0].mxu0
  %v2889 = vadd.f32 0.0, %v2888
  %2890 = vmatprep.mubr.f32.mxu0 0.0
  %2891 = vmatmul.mubr.f32.gmra.mrb[0].mxu0 %v1373
  %v2892 = vpop.f32.mrb[0].mxu0
  %v2893 = vadd.f32 0.0, %v2892
  %v2894 = vpop.f32.mrb[0].mxu0
  %v2895 = vadd.f32 0.0, %v2894
  %2896 = vmatprep.mubr.f32.mxu0 0.0
  %2897 = vmatmul.mubr.f32.gmra.mrb[0].mxu0 %v1374
  %v2898 = vpop.f32.mrb[0].mxu0
  %v2899 = vadd.f32 0.0, %v2898
  %v2900 = vpop.f32.mrb[0].mxu0
  %v2901 = vadd.f32 0.0, %v2900
  %2902 = vdwg.mxu0
  %v2903 = vadd.f32 %v2759, %v2881
  %v2904 = vadd.f32 %v2761, %v2883
  %v2905 = vadd.f32 %v2765, %v2887
  %v2906 = vadd.f32 %v2767, %v2889
  %v2907 = vadd.f32 %v2771, %v2893
  %v2908 = vadd.f32 %v2773, %v2895
  %v2909 = vadd.f32 %v2777, %v2899
  %v2910 = vadd.f32 %v2779, %v2901
  %s2911 = scalar_lea.vmem %s3, 768
  %v2912 = vld [vmem:[%s2911] sm:$0xff]
  %v2913 = vld [vmem:[%s2911 + $0x8] sm:$0xff]
  %v2914 = vld [vmem:[%s2911 + $0x10] sm:$0xff]
  %v2915 = vld [vmem:[%s2911 + $0x18] sm:$0xff]
  %v2916 = vld [vmem:[%s2911 + $0x20] sm:$0xff]
  %v2917 = vld [vmem:[%s2911 + $0x28] sm:$0xff]
  %v2918 = vld [vmem:[%s2911 + $0x30] sm:$0xff]
  %v2919 = vld [vmem:[%s2911 + $0x38] sm:$0xff]
  %v2920 = vld [vmem:[%s2911 + $0x40] sm:$0xff]
  %v2921 = vld [vmem:[%s2911 + $0x48] sm:$0xff]
  %v2922 = vld [vmem:[%s2911 + $0x50] sm:$0xff]
  %v2923 = vld [vmem:[%s2911 + $0x58] sm:$0xff]
  %v2924 = vld [vmem:[%s2911 + $0x60] sm:$0xff]
  %v2925 = vld [vmem:[%s2911 + $0x68] sm:$0xff]
  %v2926 = vld [vmem:[%s2911 + $0x70] sm:$0xff]
  %v2927 = vld [vmem:[%s2911 + $0x78] sm:$0xff]
  %v2928 = vld [vmem:[%s2911 + $0x80] sm:$0xff]
  %v2929 = vld [vmem:[%s2911 + $0x88] sm:$0xff]
  %v2930 = vld [vmem:[%s2911 + $0x90] sm:$0xff]
  %v2931 = vld [vmem:[%s2911 + $0x98] sm:$0xff]
  %v2932 = vld [vmem:[%s2911 + $0xa0] sm:$0xff]
  %v2933 = vld [vmem:[%s2911 + $0xa8] sm:$0xff]
  %v2934 = vld [vmem:[%s2911 + $0xb0] sm:$0xff]
  %v2935 = vld [vmem:[%s2911 + $0xb8] sm:$0xff]
  %v2936 = vld [vmem:[%s2911 + $0xc0] sm:$0xff]
  %v2937 = vld [vmem:[%s2911 + $0xc8] sm:$0xff]
  %v2938 = vld [vmem:[%s2911 + $0xd0] sm:$0xff]
  %v2939 = vld [vmem:[%s2911 + $0xd8] sm:$0xff]
  %v2940 = vld [vmem:[%s2911 + $0xe0] sm:$0xff]
  %v2941 = vld [vmem:[%s2911 + $0xe8] sm:$0xff]
  %v2942 = vld [vmem:[%s2911 + $0xf0] sm:$0xff]
  %v2943 = vld [vmem:[%s2911 + $0xf8] sm:$0xff]
  %2944 = vmatprep.subr.mxu0 %v2913
  %2945 = vmatpush1.msra.mxu0 %v2912
  %2946 = vmatprep.subr.mxu0 %v2915
  %2947 = vmatpush1.msra.mxu0 %v2914
  %2948 = vmatprep.subr.mxu0 %v2917
  %2949 = vmatpush1.msra.mxu0 %v2916
  %2950 = vmatprep.subr.mxu0 %v2919
  %2951 = vmatpush1.msra.mxu0 %v2918
  %2952 = vmatprep.subr.mxu0 %v2921
  %2953 = vmatpush1.msra.mxu0 %v2920
  %2954 = vmatprep.subr.mxu0 %v2923
  %2955 = vmatpush1.msra.mxu0 %v2922
  %2956 = vmatprep.subr.mxu0 %v2925
  %2957 = vmatpush1.msra.mxu0 %v2924
  %2958 = vmatprep.subr.mxu0 %v2927
  %2959 = vmatpush1.msra.mxu0 %v2926
  %2960 = vmatprep.subr.mxu0 %v2929
  %2961 = vmatpush1.msra.mxu0 %v2928
  %2962 = vmatprep.subr.mxu0 %v2931
  %2963 = vmatpush1.msra.mxu0 %v2930
  %2964 = vmatprep.subr.mxu0 %v2933
  %2965 = vmatpush1.msra.mxu0 %v2932
  %2966 = vmatprep.subr.mxu0 %v2935
  %2967 = vmatpush1.msra.mxu0 %v2934
  %2968 = vmatprep.subr.mxu0 %v2937
  %2969 = vmatpush1.msra.mxu0 %v2936
  %2970 = vmatprep.subr.mxu0 %v2939
  %2971 = vmatpush1.msra.mxu0 %v2938
  %2972 = vmatprep.subr.mxu0 %v2941
  %2973 = vmatpush1.msra.mxu0 %v2940
  %2974 = vmatprep.subr.mxu0 %v2943
  %2975 = vmatpush1.msra.mxu0 %v2942
  %2976 = vmatprep.subr.mxu0 0.0
  %2977 = vmatpush1.msra.mxu0 0.0
  %2978 = vmatprep.subr.mxu0 0.0
  %2979 = vmatpush1.msra.mxu0 0.0
  %2980 = vmatprep.subr.mxu0 0.0
  %2981 = vmatpush1.msra.mxu0 0.0
  %2982 = vmatprep.subr.mxu0 0.0
  %2983 = vmatpush1.msra.mxu0 0.0
  %2984 = vmatprep.subr.mxu0 0.0
  %2985 = vmatpush1.msra.mxu0 0.0
  %2986 = vmatprep.subr.mxu0 0.0
  %2987 = vmatpush1.msra.mxu0 0.0
  %2988 = vmatprep.subr.mxu0 0.0
  %2989 = vmatpush1.msra.mxu0 0.0
  %2990 = vmatprep.subr.mxu0 0.0
  %2991 = vmatpush1.msra.mxu0 0.0
  %2992 = vmatprep.subr.mxu0 0.0
  %2993 = vmatpush1.msra.mxu0 0.0
  %2994 = vmatprep.subr.mxu0 0.0
  %2995 = vmatpush1.msra.mxu0 0.0
  %2996 = vmatprep.subr.mxu0 0.0
  %2997 = vmatpush1.msra.mxu0 0.0
  %2998 = vmatprep.subr.mxu0 0.0
  %2999 = vmatpush1.msra.mxu0 0.0
  %3000 = vmatprep.subr.mxu0 0.0
  %3001 = vmatpush1.msra.mxu0 0.0
  %3002 = vmatprep.subr.mxu0 0.0
  %3003 = vmatpush1.msra.mxu0 0.0
  %3004 = vmatprep.subr.mxu0 0.0
  %3005 = vmatpush1.msra.mxu0 0.0
  %3006 = vmatprep.subr.mxu0 0.0
  %3007 = vmatpush1.msra.mxu0 0.0
  %3008 = vmatprep.mubr.f32.mxu0 0.0
  %3009 = vmatmul.mubr.f32.gmra.mrb[0].mxu0 %v2533
  %v3010 = vpop.f32.mrb[0].mxu0
  %v3011 = vadd.f32 0.0, %v3010
  %v3012 = vpop.f32.mrb[0].mxu0
  %v3013 = vadd.f32 0.0, %v3012
  %3014 = vmatprep.mubr.f32.mxu0 0.0
  %3015 = vmatmul.mubr.f32.gmra.mrb[0].mxu0 %v2534
  %v3016 = vpop.f32.mrb[0].mxu0
  %v3017 = vadd.f32 0.0, %v3016
  %v3018 = vpop.f32.mrb[0].mxu0
  %v3019 = vadd.f32 0.0, %v3018
  %3020 = vmatprep.mubr.f32.mxu0 0.0
  %3021 = vmatmul.mubr.f32.gmra.mrb[0].mxu0 %v2535
  %v3022 = vpop.f32.mrb[0].mxu0
  %v3023 = vadd.f32 0.0, %v3022
  %v3024 = vpop.f32.mrb[0].mxu0
  %v3025 = vadd.f32 0.0, %v3024
  %3026 = vmatprep.mubr.f32.mxu0 0.0
  %3027 = vmatmul.mubr.f32.gmra.mrb[0].mxu0 %v2536
  %v3028 = vpop.f32.mrb[0].mxu0
  %v3029 = vadd.f32 0.0, %v3028
  %v3030 = vpop.f32.mrb[0].mxu0
  %v3031 = vadd.f32 0.0, %v3030
  %3032 = vdwg.mxu0
  %v3033 = vadd.f32 %v2903, %v3011
  %v3034 = vadd.f32 %v2904, %v3013
  %v3035 = vadd.f32 %v2905, %v3017
  %v3036 = vadd.f32 %v2906, %v3019
  %v3037 = vadd.f32 %v2907, %v3023
  %v3038 = vadd.f32 %v2908, %v3025
  %v3039 = vadd.f32 %v2909, %v3029
  %v3040 = vadd.f32 %v2910, %v3031
  %s3041 = scalar_lea.vmem %s3, 1024
  %v3042 = vld [vmem:[%s3041] sm:$0xff]
  %v3043 = vld [vmem:[%s3041 + $0x8] sm:$0xff]
  %v3044 = vld [vmem:[%s3041 + $0x10] sm:$0xff]
  %v3045 = vld [vmem:[%s3041 + $0x18] sm:$0xff]
  %v3046 = vld [vmem:[%s3041 + $0x20] sm:$0xff]
  %v3047 = vld [vmem:[%s3041 + $0x28] sm:$0xff]
  %v3048 = vld [vmem:[%s3041 + $0x30] sm:$0xff]
  %v3049 = vld [vmem:[%s3041 + $0x38] sm:$0xff]
  %v3050 = vld [vmem:[%s3041 + $0x40] sm:$0xff]
  %v3051 = vld [vmem:[%s3041 + $0x48] sm:$0xff]
  %v3052 = vld [vmem:[%s3041 + $0x50] sm:$0xff]
  %v3053 = vld [vmem:[%s3041 + $0x58] sm:$0xff]
  %v3054 = vld [vmem:[%s3041 + $0x60] sm:$0xff]
  %v3055 = vld [vmem:[%s3041 + $0x68] sm:$0xff]
  %v3056 = vld [vmem:[%s3041 + $0x70] sm:$0xff]
  %v3057 = vld [vmem:[%s3041 + $0x78] sm:$0xff]
  %v3058 = vld [vmem:[%s3041 + $0x80] sm:$0xff]
  %v3059 = vld [vmem:[%s3041 + $0x88] sm:$0xff]
  %v3060 = vld [vmem:[%s3041 + $0x90] sm:$0xff]
  %v3061 = vld [vmem:[%s3041 + $0x98] sm:$0xff]
  %v3062 = vld [vmem:[%s3041 + $0xa0] sm:$0xff]
  %v3063 = vld [vmem:[%s3041 + $0xa8] sm:$0xff]
  %v3064 = vld [vmem:[%s3041 + $0xb0] sm:$0xff]
  %v3065 = vld [vmem:[%s3041 + $0xb8] sm:$0xff]
  %v3066 = vld [vmem:[%s3041 + $0xc0] sm:$0xff]
  %v3067 = vld [vmem:[%s3041 + $0xc8] sm:$0xff]
  %v3068 = vld [vmem:[%s3041 + $0xd0] sm:$0xff]
  %v3069 = vld [vmem:[%s3041 + $0xd8] sm:$0xff]
  %v3070 = vld [vmem:[%s3041 + $0xe0] sm:$0xff]
  %v3071 = vld [vmem:[%s3041 + $0xe8] sm:$0xff]
  %v3072 = vld [vmem:[%s3041 + $0xf0] sm:$0xff]
  %v3073 = vld [vmem:[%s3041 + $0xf8] sm:$0xff]
  %3074 = vmatprep.subr.mxu0 %v3043
  %3075 = vmatpush1.msra.mxu0 %v3042
  %3076 = vmatprep.subr.mxu0 %v3045
  %3077 = vmatpush1.msra.mxu0 %v3044
  %3078 = vmatprep.subr.mxu0 %v3047
  %3079 = vmatpush1.msra.mxu0 %v3046
  %3080 = vmatprep.subr.mxu0 %v3049
  %3081 = vmatpush1.msra.mxu0 %v3048
  %3082 = vmatprep.subr.mxu0 %v3051
  %3083 = vmatpush1.msra.mxu0 %v3050
  %3084 = vmatprep.subr.mxu0 %v3053
  %3085 = vmatpush1.msra.mxu0 %v3052
  %3086 = vmatprep.subr.mxu0 %v3055
  %3087 = vmatpush1.msra.mxu0 %v3054
  %3088 = vmatprep.subr.mxu0 %v3057
  %3089 = vmatpush1.msra.mxu0 %v3056
  %3090 = vmatprep.subr.mxu0 %v3059
  %3091 = vmatpush1.msra.mxu0 %v3058
  %3092 = vmatprep.subr.mxu0 %v3061
  %3093 = vmatpush1.msra.mxu0 %v3060
  %3094 = vmatprep.subr.mxu0 %v3063
  %3095 = vmatpush1.msra.mxu0 %v3062
  %3096 = vmatprep.subr.mxu0 %v3065
  %3097 = vmatpush1.msra.mxu0 %v3064
  %3098 = vmatprep.subr.mxu0 %v3067
  %3099 = vmatpush1.msra.mxu0 %v3066
  %3100 = vmatprep.subr.mxu0 %v3069
  %3101 = vmatpush1.msra.mxu0 %v3068
  %3102 = vmatprep.subr.mxu0 %v3071
  %3103 = vmatpush1.msra.mxu0 %v3070
  %3104 = vmatprep.subr.mxu0 %v3073
  %3105 = vmatpush1.msra.mxu0 %v3072
  %3106 = vmatprep.subr.mxu0 0.0
  %3107 = vmatpush1.msra.mxu0 0.0
  %3108 = vmatprep.subr.mxu0 0.0
  %3109 = vmatpush1.msra.mxu0 0.0
  %3110 = vmatprep.subr.mxu0 0.0
  %3111 = vmatpush1.msra.mxu0 0.0
  %3112 = vmatprep.subr.mxu0 0.0
  %3113 = vmatpush1.msra.mxu0 0.0
  %3114 = vmatprep.subr.mxu0 0.0
  %3115 = vmatpush1.msra.mxu0 0.0
  %3116 = vmatprep.subr.mxu0 0.0
  %3117 = vmatpush1.msra.mxu0 0.0
  %3118 = vmatprep.subr.mxu0 0.0
  %3119 = vmatpush1.msra.mxu0 0.0
  %3120 = vmatprep.subr.mxu0 0.0
  %3121 = vmatpush1.msra.mxu0 0.0
  %3122 = vmatprep.subr.mxu0 0.0
  %3123 = vmatpush1.msra.mxu0 0.0
  %3124 = vmatprep.subr.mxu0 0.0
  %3125 = vmatpush1.msra.mxu0 0.0
  %3126 = vmatprep.subr.mxu0 0.0
  %3127 = vmatpush1.msra.mxu0 0.0
  %3128 = vmatprep.subr.mxu0 0.0
  %3129 = vmatpush1.msra.mxu0 0.0
  %3130 = vmatprep.subr.mxu0 0.0
  %3131 = vmatpush1.msra.mxu0 0.0
  %3132 = vmatprep.subr.mxu0 0.0
  %3133 = vmatpush1.msra.mxu0 0.0
  %3134 = vmatprep.subr.mxu0 0.0
  %3135 = vmatpush1.msra.mxu0 0.0
  %3136 = vmatprep.subr.mxu0 0.0
  %3137 = vmatpush1.msra.mxu0 0.0
  %3138 = vmatprep.mubr.f32.mxu0 0.0
  %3139 = vmatmul.mubr.f32.gmra.mrb[0].mxu0 %v1372
  %v3140 = vpop.f32.mrb[0].mxu0
  %v3141 = vadd.f32 0.0, %v3140
  %v3142 = vpop.f32.mrb[0].mxu0
  %v3143 = vadd.f32 0.0, %v3142
  %3144 = vmatprep.mubr.f32.mxu0 0.0
  %3145 = vmatmul.mubr.f32.gmra.mrb[0].mxu0 %v1373
  %v3146 = vpop.f32.mrb[0].mxu0
  %v3147 = vadd.f32 0.0, %v3146
  %v3148 = vpop.f32.mrb[0].mxu0
  %v3149 = vadd.f32 0.0, %v3148
  %3150 = vmatprep.mubr.f32.mxu0 0.0
  %3151 = vmatmul.mubr.f32.gmra.mrb[0].mxu0 %v1374
  %v3152 = vpop.f32.mrb[0].mxu0
  %v3153 = vadd.f32 0.0, %v3152
  %v3154 = vpop.f32.mrb[0].mxu0
  %v3155 = vadd.f32 0.0, %v3154
  %3156 = vmatprep.mubr.f32.mxu0 0.0
  %3157 = vmatmul.mubr.f32.gmra.mrb[0].mxu0 %v1375
  %v3158 = vpop.f32.mrb[0].mxu0
  %v3159 = vadd.f32 0.0, %v3158
  %v3160 = vpop.f32.mrb[0].mxu0
  %v3161 = vadd.f32 0.0, %v3160
  %3162 = vdwg.mxu0
  %v3163 = vadd.f32 %v3033, %v3141
  %v3164 = vadd.f32 %v3034, %v3143
  %v3165 = vadd.f32 %v3035, %v3147
  %v3166 = vadd.f32 %v3036, %v3149
  %v3167 = vadd.f32 %v3037, %v3153
  %v3168 = vadd.f32 %v3038, %v3155
  %v3169 = vadd.f32 %v3039, %v3159
  %v3170 = vadd.f32 %v3040, %v3161
  %v3171 = vmax.f32 %v3163, %v3164
  %v3172 = vmax.f32 %v3165, %v3166
  %v3173 = vmax.f32 %v3167, %v3168
  %v3174 = vmax.f32 %v3169, %v3170
  %3175 = vmatprep.subr.mxu0 %v2572
  %3176 = vmatpush1.msra.mxu0 %v2571
  %3177 = vmatprep.subr.mxu0 %v2574
  %3178 = vmatpush1.msra.mxu0 %v2573
  %3179 = vmatprep.subr.mxu0 %v2576
  %3180 = vmatpush1.msra.mxu0 %v2575
  %3181 = vmatprep.subr.mxu0 %v2578
  %3182 = vmatpush1.msra.mxu0 %v2577
  %3183 = vmatprep.subr.mxu0 %v2580
  %3184 = vmatpush1.msra.mxu0 %v2579
  %3185 = vmatprep.subr.mxu0 %v2582
  %3186 = vmatpush1.msra.mxu0 %v2581
  %3187 = vmatprep.subr.mxu0 %v2584
  %3188 = vmatpush1.msra.mxu0 %v2583
  %3189 = vmatprep.subr.mxu0 %v2586
  %3190 = vmatpush1.msra.mxu0 %v2585
  %3191 = vmatprep.subr.mxu0 %v2588
  %3192 = vmatpush1.msra.mxu0 %v2587
  %3193 = vmatprep.subr.mxu0 %v2590
  %3194 = vmatpush1.msra.mxu0 %v2589
  %3195 = vmatprep.subr.mxu0 %v2592
  %3196 = vmatpush1.msra.mxu0 %v2591
  %3197 = vmatprep.subr.mxu0 %v2594
  %3198 = vmatpush1.msra.mxu0 %v2593
  %3199 = vmatprep.subr.mxu0 %v2596
  %3200 = vmatpush1.msra.mxu0 %v2595
  %3201 = vmatprep.subr.mxu0 %v2598
  %3202 = vmatpush1.msra.mxu0 %v2597
  %3203 = vmatprep.subr.mxu0 %v2600
  %3204 = vmatpush1.msra.mxu0 %v2599
  %3205 = vmatprep.subr.mxu0 %v2602
  %3206 = vmatpush1.msra.mxu0 %v2601
  %3207 = vmatprep.subr.mxu0 0.0
  %3208 = vmatpush1.msra.mxu0 0.0
  %3209 = vmatprep.subr.mxu0 0.0
  %3210 = vmatpush1.msra.mxu0 0.0
  %3211 = vmatprep.subr.mxu0 0.0
  %3212 = vmatpush1.msra.mxu0 0.0
  %3213 = vmatprep.subr.mxu0 0.0
  %3214 = vmatpush1.msra.mxu0 0.0
  %3215 = vmatprep.subr.mxu0 0.0
  %3216 = vmatpush1.msra.mxu0 0.0
  %3217 = vmatprep.subr.mxu0 0.0
  %3218 = vmatpush1.msra.mxu0 0.0
  %3219 = vmatprep.subr.mxu0 0.0
  %3220 = vmatpush1.msra.mxu0 0.0
  %3221 = vmatprep.subr.mxu0 0.0
  %3222 = vmatpush1.msra.mxu0 0.0
  %3223 = vmatprep.subr.mxu0 0.0
  %3224 = vmatpush1.msra.mxu0 0.0
  %3225 = vmatprep.subr.mxu0 0.0
  %3226 = vmatpush1.msra.mxu0 0.0
  %3227 = vmatprep.subr.mxu0 0.0
  %3228 = vmatpush1.msra.mxu0 0.0
  %3229 = vmatprep.subr.mxu0 0.0
  %3230 = vmatpush1.msra.mxu0 0.0
  %3231 = vmatprep.subr.mxu0 0.0
  %3232 = vmatpush1.msra.mxu0 0.0
  %3233 = vmatprep.subr.mxu0 0.0
  %3234 = vmatpush1.msra.mxu0 0.0
  %3235 = vmatprep.subr.mxu0 0.0
  %3236 = vmatpush1.msra.mxu0 0.0
  %3237 = vmatprep.subr.mxu0 0.0
  %3238 = vmatpush1.msra.mxu0 0.0
  %3239 = vmatprep.mubr.f32.mxu0 0.0
  %3240 = vmatmul.mubr.f32.gmra.mrb[0].mxu0 %v1371
  %v3241 = vpop.f32.mrb[0].mxu0
  %v3242 = vadd.f32 0.0, %v3241
  %v3243 = vpop.f32.mrb[0].mxu0
  %v3244 = vadd.f32 0.0, %v3243
  %3245 = vmatprep.mubr.f32.mxu0 0.0
  %3246 = vmatmul.mubr.f32.gmra.mrb[0].mxu0 %v1372
  %v3247 = vpop.f32.mrb[0].mxu0
  %v3248 = vadd.f32 0.0, %v3247
  %v3249 = vpop.f32.mrb[0].mxu0
  %v3250 = vadd.f32 0.0, %v3249
  %3251 = vmatprep.mubr.f32.mxu0 0.0
  %3252 = vmatmul.mubr.f32.gmra.mrb[0].mxu0 %v1373
  %v3253 = vpop.f32.mrb[0].mxu0
  %v3254 = vadd.f32 0.0, %v3253
  %v3255 = vpop.f32.mrb[0].mxu0
  %v3256 = vadd.f32 0.0, %v3255
  %3257 = vmatprep.mubr.f32.mxu0 0.0
  %3258 = vmatmul.mubr.f32.gmra.mrb[0].mxu0 %v1374
  %v3259 = vpop.f32.mrb[0].mxu0
  %v3260 = vadd.f32 0.0, %v3259
  %v3261 = vpop.f32.mrb[0].mxu0
  %v3262 = vadd.f32 0.0, %v3261
  %3263 = vdwg.mxu0
  %3264 = vmatprep.subr.mxu0 %v2539
  %3265 = vmatpush1.msra.mxu0 %v2538
  %3266 = vmatprep.subr.mxu0 %v2541
  %3267 = vmatpush1.msra.mxu0 %v2540
  %3268 = vmatprep.subr.mxu0 %v2543
  %3269 = vmatpush1.msra.mxu0 %v2542
  %3270 = vmatprep.subr.mxu0 %v2545
  %3271 = vmatpush1.msra.mxu0 %v2544
  %3272 = vmatprep.subr.mxu0 %v2547
  %3273 = vmatpush1.msra.mxu0 %v2546
  %3274 = vmatprep.subr.mxu0 %v2549
  %3275 = vmatpush1.msra.mxu0 %v2548
  %3276 = vmatprep.subr.mxu0 %v2551
  %3277 = vmatpush1.msra.mxu0 %v2550
  %3278 = vmatprep.subr.mxu0 %v2553
  %3279 = vmatpush1.msra.mxu0 %v2552
  %3280 = vmatprep.subr.mxu0 %v2555
  %3281 = vmatpush1.msra.mxu0 %v2554
  %3282 = vmatprep.subr.mxu0 %v2557
  %3283 = vmatpush1.msra.mxu0 %v2556
  %3284 = vmatprep.subr.mxu0 %v2559
  %3285 = vmatpush1.msra.mxu0 %v2558
  %3286 = vmatprep.subr.mxu0 %v2561
  %3287 = vmatpush1.msra.mxu0 %v2560
  %3288 = vmatprep.subr.mxu0 %v2563
  %3289 = vmatpush1.msra.mxu0 %v2562
  %3290 = vmatprep.subr.mxu0 %v2565
  %3291 = vmatpush1.msra.mxu0 %v2564
  %3292 = vmatprep.subr.mxu0 %v2567
  %3293 = vmatpush1.msra.mxu0 %v2566
  %3294 = vmatprep.subr.mxu0 %v2569
  %3295 = vmatpush1.msra.mxu0 %v2568
  %3296 = vmatprep.subr.mxu0 0.0
  %3297 = vmatpush1.msra.mxu0 0.0
  %3298 = vmatprep.subr.mxu0 0.0
  %3299 = vmatpush1.msra.mxu0 0.0
  %3300 = vmatprep.subr.mxu0 0.0
  %3301 = vmatpush1.msra.mxu0 0.0
  %3302 = vmatprep.subr.mxu0 0.0
  %3303 = vmatpush1.msra.mxu0 0.0
  %3304 = vmatprep.subr.mxu0 0.0
  %3305 = vmatpush1.msra.mxu0 0.0
  %3306 = vmatprep.subr.mxu0 0.0
  %3307 = vmatpush1.msra.mxu0 0.0
  %3308 = vmatprep.subr.mxu0 0.0
  %3309 = vmatpush1.msra.mxu0 0.0
  %3310 = vmatprep.subr.mxu0 0.0
  %3311 = vmatpush1.msra.mxu0 0.0
  %3312 = vmatprep.subr.mxu0 0.0
  %3313 = vmatpush1.msra.mxu0 0.0
  %3314 = vmatprep.subr.mxu0 0.0
  %3315 = vmatpush1.msra.mxu0 0.0
  %3316 = vmatprep.subr.mxu0 0.0
  %3317 = vmatpush1.msra.mxu0 0.0
  %3318 = vmatprep.subr.mxu0 0.0
  %3319 = vmatpush1.msra.mxu0 0.0
  %3320 = vmatprep.subr.mxu0 0.0
  %3321 = vmatpush1.msra.mxu0 0.0
  %3322 = vmatprep.subr.mxu0 0.0
  %3323 = vmatpush1.msra.mxu0 0.0
  %3324 = vmatprep.subr.mxu0 0.0
  %3325 = vmatpush1.msra.mxu0 0.0
  %3326 = vmatprep.subr.mxu0 0.0
  %3327 = vmatpush1.msra.mxu0 0.0
  %3328 = vmatprep.mubr.f32.mxu0 0.0
  %3329 = vmatmul.mubr.f32.gmra.mrb[0].mxu0 %v2532
  %v3330 = vpop.f32.mrb[0].mxu0
  %v3331 = vadd.f32 %v3242, %v3330
  %v3332 = vpop.f32.mrb[0].mxu0
  %v3333 = vadd.f32 %v3244, %v3332
  %3334 = vmatprep.mubr.f32.mxu0 0.0
  %3335 = vmatmul.mubr.f32.gmra.mrb[0].mxu0 %v2533
  %v3336 = vpop.f32.mrb[0].mxu0
  %v3337 = vadd.f32 %v3248, %v3336
  %v3338 = vpop.f32.mrb[0].mxu0
  %v3339 = vadd.f32 %v3250, %v3338
  %3340 = vmatprep.mubr.f32.mxu0 0.0
  %3341 = vmatmul.mubr.f32.gmra.mrb[0].mxu0 %v2534
  %v3342 = vpop.f32.mrb[0].mxu0
  %v3343 = vadd.f32 %v3254, %v3342
  %v3344 = vpop.f32.mrb[0].mxu0
  %v3345 = vadd.f32 %v3256, %v3344
  %3346 = vmatprep.mubr.f32.mxu0 0.0
  %3347 = vmatmul.mubr.f32.gmra.mrb[0].mxu0 %v2535
  %v3348 = vpop.f32.mrb[0].mxu0
  %v3349 = vadd.f32 %v3260, %v3348
  %v3350 = vpop.f32.mrb[0].mxu0
  %v3351 = vadd.f32 %v3262, %v3350
  %3352 = vdwg.mxu0
  %3353 = vmatprep.subr.mxu0 %v2783
  %3354 = vmatpush1.msra.mxu0 %v2782
  %3355 = vmatprep.subr.mxu0 %v2785
  %3356 = vmatpush1.msra.mxu0 %v2784
  %3357 = vmatprep.subr.mxu0 %v2787
  %3358 = vmatpush1.msra.mxu0 %v2786
  %3359 = vmatprep.subr.mxu0 %v2789
  %3360 = vmatpush1.msra.mxu0 %v2788
  %3361 = vmatprep.subr.mxu0 %v2791
  %3362 = vmatpush1.msra.mxu0 %v2790
  %3363 = vmatprep.subr.mxu0 %v2793
  %3364 = vmatpush1.msra.mxu0 %v2792
  %3365 = vmatprep.subr.mxu0 %v2795
  %3366 = vmatpush1.msra.mxu0 %v2794
  %3367 = vmatprep.subr.mxu0 %v2797
  %3368 = vmatpush1.msra.mxu0 %v2796
  %3369 = vmatprep.subr.mxu0 %v2799
  %3370 = vmatpush1.msra.mxu0 %v2798
  %3371 = vmatprep.subr.mxu0 %v2801
  %3372 = vmatpush1.msra.mxu0 %v2800
  %3373 = vmatprep.subr.mxu0 %v2803
  %3374 = vmatpush1.msra.mxu0 %v2802
  %3375 = vmatprep.subr.mxu0 %v2805
  %3376 = vmatpush1.msra.mxu0 %v2804
  %3377 = vmatprep.subr.mxu0 %v2807
  %3378 = vmatpush1.msra.mxu0 %v2806
  %3379 = vmatprep.subr.mxu0 %v2809
  %3380 = vmatpush1.msra.mxu0 %v2808
  %3381 = vmatprep.subr.mxu0 %v2811
  %3382 = vmatpush1.msra.mxu0 %v2810
  %3383 = vmatprep.subr.mxu0 %v2813
  %3384 = vmatpush1.msra.mxu0 %v2812
  %3385 = vmatprep.subr.mxu0 0.0
  %3386 = vmatpush1.msra.mxu0 0.0
  %3387 = vmatprep.subr.mxu0 0.0
  %3388 = vmatpush1.msra.mxu0 0.0
  %3389 = vmatprep.subr.mxu0 0.0
  %3390 = vmatpush1.msra.mxu0 0.0
  %3391 = vmatprep.subr.mxu0 0.0
  %3392 = vmatpush1.msra.mxu0 0.0
  %3393 = vmatprep.subr.mxu0 0.0
  %3394 = vmatpush1.msra.mxu0 0.0
  %3395 = vmatprep.subr.mxu0 0.0
  %3396 = vmatpush1.msra.mxu0 0.0
  %3397 = vmatprep.subr.mxu0 0.0
  %3398 = vmatpush1.msra.mxu0 0.0
  %3399 = vmatprep.subr.mxu0 0.0
  %3400 = vmatpush1.msra.mxu0 0.0
  %3401 = vmatprep.subr.mxu0 0.0
  %3402 = vmatpush1.msra.mxu0 0.0
  %3403 = vmatprep.subr.mxu0 0.0
  %3404 = vmatpush1.msra.mxu0 0.0
  %3405 = vmatprep.subr.mxu0 0.0
  %3406 = vmatpush1.msra.mxu0 0.0
  %3407 = vmatprep.subr.mxu0 0.0
  %3408 = vmatpush1.msra.mxu0 0.0
  %3409 = vmatprep.subr.mxu0 0.0
  %3410 = vmatpush1.msra.mxu0 0.0
  %3411 = vmatprep.subr.mxu0 0.0
  %3412 = vmatpush1.msra.mxu0 0.0
  %3413 = vmatprep.subr.mxu0 0.0
  %3414 = vmatpush1.msra.mxu0 0.0
  %3415 = vmatprep.subr.mxu0 0.0
  %3416 = vmatpush1.msra.mxu0 0.0
  %3417 = vmatprep.mubr.f32.mxu0 0.0
  %3418 = vmatmul.mubr.f32.gmra.mrb[0].mxu0 %v2533
  %v3419 = vpop.f32.mrb[0].mxu0
  %v3420 = vadd.f32 0.0, %v3419
  %v3421 = vpop.f32.mrb[0].mxu0
  %v3422 = vadd.f32 0.0, %v3421
  %3423 = vmatprep.mubr.f32.mxu0 0.0
  %3424 = vmatmul.mubr.f32.gmra.mrb[0].mxu0 %v2534
  %v3425 = vpop.f32.mrb[0].mxu0
  %v3426 = vadd.f32 0.0, %v3425
  %v3427 = vpop.f32.mrb[0].mxu0
  %v3428 = vadd.f32 0.0, %v3427
  %3429 = vmatprep.mubr.f32.mxu0 0.0
  %3430 = vmatmul.mubr.f32.gmra.mrb[0].mxu0 %v2535
  %v3431 = vpop.f32.mrb[0].mxu0
  %v3432 = vadd.f32 0.0, %v3431
  %v3433 = vpop.f32.mrb[0].mxu0
  %v3434 = vadd.f32 0.0, %v3433
  %3435 = vmatprep.mubr.f32.mxu0 0.0
  %3436 = vmatmul.mubr.f32.gmra.mrb[0].mxu0 %v2536
  %v3437 = vpop.f32.mrb[0].mxu0
  %v3438 = vadd.f32 0.0, %v3437
  %v3439 = vpop.f32.mrb[0].mxu0
  %v3440 = vadd.f32 0.0, %v3439
  %3441 = vdwg.mxu0
  %v3442 = vadd.f32 %v3331, %v3420
  %v3443 = vadd.f32 %v3333, %v3422
  %v3444 = vadd.f32 %v3337, %v3426
  %v3445 = vadd.f32 %v3339, %v3428
  %v3446 = vadd.f32 %v3343, %v3432
  %v3447 = vadd.f32 %v3345, %v3434
  %v3448 = vadd.f32 %v3349, %v3438
  %v3449 = vadd.f32 %v3351, %v3440
  %3450 = vmatprep.subr.mxu0 %v2913
  %3451 = vmatpush1.msra.mxu0 %v2912
  %3452 = vmatprep.subr.mxu0 %v2915
  %3453 = vmatpush1.msra.mxu0 %v2914
  %3454 = vmatprep.subr.mxu0 %v2917
  %3455 = vmatpush1.msra.mxu0 %v2916
  %3456 = vmatprep.subr.mxu0 %v2919
  %3457 = vmatpush1.msra.mxu0 %v2918
  %3458 = vmatprep.subr.mxu0 %v2921
  %3459 = vmatpush1.msra.mxu0 %v2920
  %3460 = vmatprep.subr.mxu0 %v2923
  %3461 = vmatpush1.msra.mxu0 %v2922
  %3462 = vmatprep.subr.mxu0 %v2925
  %3463 = vmatpush1.msra.mxu0 %v2924
  %3464 = vmatprep.subr.mxu0 %v2927
  %3465 = vmatpush1.msra.mxu0 %v2926
  %3466 = vmatprep.subr.mxu0 %v2929
  %3467 = vmatpush1.msra.mxu0 %v2928
  %3468 = vmatprep.subr.mxu0 %v2931
  %3469 = vmatpush1.msra.mxu0 %v2930
  %3470 = vmatprep.subr.mxu0 %v2933
  %3471 = vmatpush1.msra.mxu0 %v2932
  %3472 = vmatprep.subr.mxu0 %v2935
  %3473 = vmatpush1.msra.mxu0 %v2934
  %3474 = vmatprep.subr.mxu0 %v2937
  %3475 = vmatpush1.msra.mxu0 %v2936
  %3476 = vmatprep.subr.mxu0 %v2939
  %3477 = vmatpush1.msra.mxu0 %v2938
  %3478 = vmatprep.subr.mxu0 %v2941
  %3479 = vmatpush1.msra.mxu0 %v2940
  %3480 = vmatprep.subr.mxu0 %v2943
  %3481 = vmatpush1.msra.mxu0 %v2942
  %3482 = vmatprep.subr.mxu0 0.0
  %3483 = vmatpush1.msra.mxu0 0.0
  %3484 = vmatprep.subr.mxu0 0.0
  %3485 = vmatpush1.msra.mxu0 0.0
  %3486 = vmatprep.subr.mxu0 0.0
  %3487 = vmatpush1.msra.mxu0 0.0
  %3488 = vmatprep.subr.mxu0 0.0
  %3489 = vmatpush1.msra.mxu0 0.0
  %3490 = vmatprep.subr.mxu0 0.0
  %3491 = vmatpush1.msra.mxu0 0.0
  %3492 = vmatprep.subr.mxu0 0.0
  %3493 = vmatpush1.msra.mxu0 0.0
  %3494 = vmatprep.subr.mxu0 0.0
  %3495 = vmatpush1.msra.mxu0 0.0
  %3496 = vmatprep.subr.mxu0 0.0
  %3497 = vmatpush1.msra.mxu0 0.0
  %3498 = vmatprep.subr.mxu0 0.0
  %3499 = vmatpush1.msra.mxu0 0.0
  %3500 = vmatprep.subr.mxu0 0.0
  %3501 = vmatpush1.msra.mxu0 0.0
  %3502 = vmatprep.subr.mxu0 0.0
  %3503 = vmatpush1.msra.mxu0 0.0
  %3504 = vmatprep.subr.mxu0 0.0
  %3505 = vmatpush1.msra.mxu0 0.0
  %3506 = vmatprep.subr.mxu0 0.0
  %3507 = vmatpush1.msra.mxu0 0.0
  %3508 = vmatprep.subr.mxu0 0.0
  %3509 = vmatpush1.msra.mxu0 0.0
  %3510 = vmatprep.subr.mxu0 0.0
  %3511 = vmatpush1.msra.mxu0 0.0
  %3512 = vmatprep.subr.mxu0 0.0
  %3513 = vmatpush1.msra.mxu0 0.0
  %3514 = vmatprep.mubr.f32.mxu0 0.0
  %3515 = vmatmul.mubr.f32.gmra.mrb[0].mxu0 %v1372
  %v3516 = vpop.f32.mrb[0].mxu0
  %v3517 = vadd.f32 0.0, %v3516
  %v3518 = vpop.f32.mrb[0].mxu0
  %v3519 = vadd.f32 0.0, %v3518
  %3520 = vmatprep.mubr.f32.mxu0 0.0
  %3521 = vmatmul.mubr.f32.gmra.mrb[0].mxu0 %v1373
  %v3522 = vpop.f32.mrb[0].mxu0
  %v3523 = vadd.f32 0.0, %v3522
  %v3524 = vpop.f32.mrb[0].mxu0
  %v3525 = vadd.f32 0.0, %v3524
  %3526 = vmatprep.mubr.f32.mxu0 0.0
  %3527 = vmatmul.mubr.f32.gmra.mrb[0].mxu0 %v1374
  %v3528 = vpop.f32.mrb[0].mxu0
  %v3529 = vadd.f32 0.0, %v3528
  %v3530 = vpop.f32.mrb[0].mxu0
  %v3531 = vadd.f32 0.0, %v3530
  %3532 = vmatprep.mubr.f32.mxu0 0.0
  %3533 = vmatmul.mubr.f32.gmra.mrb[0].mxu0 %v1375
  %v3534 = vpop.f32.mrb[0].mxu0
  %v3535 = vadd.f32 0.0, %v3534
  %v3536 = vpop.f32.mrb[0].mxu0
  %v3537 = vadd.f32 0.0, %v3536
  %3538 = vdwg.mxu0
  %v3539 = vadd.f32 %v3442, %v3517
  %v3540 = vadd.f32 %v3443, %v3519
  %v3541 = vadd.f32 %v3444, %v3523
  %v3542 = vadd.f32 %v3445, %v3525
  %v3543 = vadd.f32 %v3446, %v3529
  %v3544 = vadd.f32 %v3447, %v3531
  %v3545 = vadd.f32 %v3448, %v3535
  %v3546 = vadd.f32 %v3449, %v3537
  %3547 = vmatprep.subr.mxu0 %v3043
  %3548 = vmatpush1.msra.mxu0 %v3042
  %3549 = vmatprep.subr.mxu0 %v3045
  %3550 = vmatpush1.msra.mxu0 %v3044
  %3551 = vmatprep.subr.mxu0 %v3047
  %3552 = vmatpush1.msra.mxu0 %v3046
  %3553 = vmatprep.subr.mxu0 %v3049
  %3554 = vmatpush1.msra.mxu0 %v3048
  %3555 = vmatprep.subr.mxu0 %v3051
  %3556 = vmatpush1.msra.mxu0 %v3050
  %3557 = vmatprep.subr.mxu0 %v3053
  %3558 = vmatpush1.msra.mxu0 %v3052
  %3559 = vmatprep.subr.mxu0 %v3055
  %3560 = vmatpush1.msra.mxu0 %v3054
  %3561 = vmatprep.subr.mxu0 %v3057
  %3562 = vmatpush1.msra.mxu0 %v3056
  %3563 = vmatprep.subr.mxu0 %v3059
  %3564 = vmatpush1.msra.mxu0 %v3058
  %3565 = vmatprep.subr.mxu0 %v3061
  %3566 = vmatpush1.msra.mxu0 %v3060
  %3567 = vmatprep.subr.mxu0 %v3063
  %3568 = vmatpush1.msra.mxu0 %v3062
  %3569 = vmatprep.subr.mxu0 %v3065
  %3570 = vmatpush1.msra.mxu0 %v3064
  %3571 = vmatprep.subr.mxu0 %v3067
  %3572 = vmatpush1.msra.mxu0 %v3066
  %3573 = vmatprep.subr.mxu0 %v3069
  %3574 = vmatpush1.msra.mxu0 %v3068
  %3575 = vmatprep.subr.mxu0 %v3071
  %3576 = vmatpush1.msra.mxu0 %v3070
  %3577 = vmatprep.subr.mxu0 %v3073
  %3578 = vmatpush1.msra.mxu0 %v3072
  %3579 = vmatprep.subr.mxu0 0.0
  %3580 = vmatpush1.msra.mxu0 0.0
  %3581 = vmatprep.subr.mxu0 0.0
  %3582 = vmatpush1.msra.mxu0 0.0
  %3583 = vmatprep.subr.mxu0 0.0
  %3584 = vmatpush1.msra.mxu0 0.0
  %3585 = vmatprep.subr.mxu0 0.0
  %3586 = vmatpush1.msra.mxu0 0.0
  %3587 = vmatprep.subr.mxu0 0.0
  %3588 = vmatpush1.msra.mxu0 0.0
  %3589 = vmatprep.subr.mxu0 0.0
  %3590 = vmatpush1.msra.mxu0 0.0
  %3591 = vmatprep.subr.mxu0 0.0
  %3592 = vmatpush1.msra.mxu0 0.0
  %3593 = vmatprep.subr.mxu0 0.0
  %3594 = vmatpush1.msra.mxu0 0.0
  %3595 = vmatprep.subr.mxu0 0.0
  %3596 = vmatpush1.msra.mxu0 0.0
  %3597 = vmatprep.subr.mxu0 0.0
  %3598 = vmatpush1.msra.mxu0 0.0
  %3599 = vmatprep.subr.mxu0 0.0
  %3600 = vmatpush1.msra.mxu0 0.0
  %3601 = vmatprep.subr.mxu0 0.0
  %3602 = vmatpush1.msra.mxu0 0.0
  %3603 = vmatprep.subr.mxu0 0.0
  %3604 = vmatpush1.msra.mxu0 0.0
  %3605 = vmatprep.subr.mxu0 0.0
  %3606 = vmatpush1.msra.mxu0 0.0
  %3607 = vmatprep.subr.mxu0 0.0
  %3608 = vmatpush1.msra.mxu0 0.0
  %3609 = vmatprep.subr.mxu0 0.0
  %3610 = vmatpush1.msra.mxu0 0.0
  %3611 = vmatprep.mubr.f32.mxu0 0.0
  %3612 = vmatmul.mubr.f32.gmra.mrb[0].mxu0 %v2534
  %v3613 = vpop.f32.mrb[0].mxu0
  %v3614 = vadd.f32 0.0, %v3613
  %v3615 = vpop.f32.mrb[0].mxu0
  %v3616 = vadd.f32 0.0, %v3615
  %3617 = vmatprep.mubr.f32.mxu0 0.0
  %3618 = vmatmul.mubr.f32.gmra.mrb[0].mxu0 %v2535
  %v3619 = vpop.f32.mrb[0].mxu0
  %v3620 = vadd.f32 0.0, %v3619
  %v3621 = vpop.f32.mrb[0].mxu0
  %v3622 = vadd.f32 0.0, %v3621
  %3623 = vmatprep.mubr.f32.mxu0 0.0
  %3624 = vmatmul.mubr.f32.gmra.mrb[0].mxu0 %v2536
  %v3625 = vpop.f32.mrb[0].mxu0
  %v3626 = vadd.f32 0.0, %v3625
  %v3627 = vpop.f32.mrb[0].mxu0
  %v3628 = vadd.f32 0.0, %v3627
  %3629 = vmatprep.mubr.f32.mxu0 0.0
  %3630 = vmatmul.mubr.f32.gmra.mrb[0].mxu0 %v2537
  %v3631 = vpop.f32.mrb[0].mxu0
  %v3632 = vadd.f32 0.0, %v3631
  %v3633 = vpop.f32.mrb[0].mxu0
  %v3634 = vadd.f32 0.0, %v3633
  %3635 = vdwg.mxu0
  %v3636 = vadd.f32 %v3539, %v3614
  %v3637 = vadd.f32 %v3540, %v3616
  %v3638 = vadd.f32 %v3541, %v3620
  %v3639 = vadd.f32 %v3542, %v3622
  %v3640 = vadd.f32 %v3543, %v3626
  %v3641 = vadd.f32 %v3544, %v3628
  %v3642 = vadd.f32 %v3545, %v3632
  %v3643 = vadd.f32 %v3546, %v3634
  %v3644 = vmax.f32 %v3636, %v3637
  %v3645 = vmax.f32 %v3638, %v3639
  %v3646 = vmax.f32 %v3640, %v3641
  %v3647 = vmax.f32 %v3642, %v3643
  %v3648 = vmax.f32 %v3171, %v3644
  %v3649 = vmax.f32 %v3172, %v3645
  %v3650 = vmax.f32 %v3173, %v3646
  %v3651 = vmax.f32 %v3174, %v3647
  %v3652 = vld [vmem:[%s4] sm:$0x1]
  %v3654 = vlaneseq
  %v3655 = vshrl.u32 %v3654, 7
  %v3656 = vsub.s32 0, %v3655
  %v3657 = vrot.slane %v3652, %v3656
  %v3659 = vadd.f32 %v3648, %v3657
  %v3660 = vadd.f32 %v3649, %v3657
  %v3661 = vadd.f32 %v3650, %v3657
  %v3662 = vadd.f32 %v3651, %v3657
  %v3663 = vmax.f32 %v3659, 0.0
  %v3664 = vmax.f32 %v3660, 0.0
  %v3665 = vmax.f32 %v3661, 0.0
  %v3666 = vmax.f32 %v3662, 0.0
  %v3667 = vld [vmem:[%s5] sm:$0xff]
  %v3668 = vld [vmem:[%s5 + $0x8] sm:$0xff]
  %v3669 = vld [vmem:[%s5 + $0x10] sm:$0xff]
  %v3670 = vld [vmem:[%s5 + $0x18] sm:$0xff]
  %v3671 = vld [vmem:[%s5 + $0x20] sm:$0xff]
  %v3672 = vld [vmem:[%s5 + $0x28] sm:$0xff]
  %v3673 = vld [vmem:[%s5 + $0x30] sm:$0xff]
  %v3674 = vld [vmem:[%s5 + $0x38] sm:$0xff]
  %v3675 = vld [vmem:[%s5 + $0x40] sm:$0xff]
  %v3676 = vld [vmem:[%s5 + $0x48] sm:$0xff]
  %v3677 = vld [vmem:[%s5 + $0x50] sm:$0xff]
  %v3678 = vld [vmem:[%s5 + $0x58] sm:$0xff]
  %v3679 = vld [vmem:[%s5 + $0x60] sm:$0xff]
  %v3680 = vld [vmem:[%s5 + $0x68] sm:$0xff]
  %v3681 = vld [vmem:[%s5 + $0x70] sm:$0xff]
  %v3682 = vld [vmem:[%s5 + $0x78] sm:$0xff]
  %s3683 = scalar_lea.vmem %s5, 128
  %v3684 = vld [vmem:[%s3683] sm:$0xff]
  %v3685 = vld [vmem:[%s3683 + $0x8] sm:$0xff]
  %v3686 = vld [vmem:[%s3683 + $0x10] sm:$0xff]
  %v3687 = vld [vmem:[%s3683 + $0x18] sm:$0xff]
  %v3688 = vld [vmem:[%s3683 + $0x20] sm:$0xff]
  %v3689 = vld [vmem:[%s3683 + $0x28] sm:$0xff]
  %v3690 = vld [vmem:[%s3683 + $0x30] sm:$0xff]
  %v3691 = vld [vmem:[%s3683 + $0x38] sm:$0xff]
  %v3692 = vld [vmem:[%s3683 + $0x40] sm:$0xff]
  %v3693 = vld [vmem:[%s3683 + $0x48] sm:$0xff]
  %v3694 = vld [vmem:[%s3683 + $0x50] sm:$0xff]
  %v3695 = vld [vmem:[%s3683 + $0x58] sm:$0xff]
  %v3696 = vld [vmem:[%s3683 + $0x60] sm:$0xff]
  %v3697 = vld [vmem:[%s3683 + $0x68] sm:$0xff]
  %v3698 = vld [vmem:[%s3683 + $0x70] sm:$0xff]
  %v3699 = vld [vmem:[%s3683 + $0x78] sm:$0xff]
  %3700 = vmatprep.subr.mxu0 0.0
  %3701 = vmatpush1.msra.mxu0 %v3684
  %3702 = vmatprep.subr.mxu0 0.0
  %3703 = vmatpush1.msra.mxu0 %v3685
  %3704 = vmatprep.subr.mxu0 0.0
  %3705 = vmatpush1.msra.mxu0 %v3686
  %3706 = vmatprep.subr.mxu0 0.0
  %3707 = vmatpush1.msra.mxu0 %v3687
  %3708 = vmatprep.subr.mxu0 0.0
  %3709 = vmatpush1.msra.mxu0 %v3688
  %3710 = vmatprep.subr.mxu0 0.0
  %3711 = vmatpush1.msra.mxu0 %v3689
  %3712 = vmatprep.subr.mxu0 0.0
  %3713 = vmatpush1.msra.mxu0 %v3690
  %3714 = vmatprep.subr.mxu0 0.0
  %3715 = vmatpush1.msra.mxu0 %v3691
  %3716 = vmatprep.subr.mxu0 0.0
  %3717 = vmatpush1.msra.mxu0 %v3692
  %3718 = vmatprep.subr.mxu0 0.0
  %3719 = vmatpush1.msra.mxu0 %v3693
  %3720 = vmatprep.subr.mxu0 0.0
  %3721 = vmatpush1.msra.mxu0 %v3694
  %3722 = vmatprep.subr.mxu0 0.0
  %3723 = vmatpush1.msra.mxu0 %v3695
  %3724 = vmatprep.subr.mxu0 0.0
  %3725 = vmatpush1.msra.mxu0 %v3696
  %3726 = vmatprep.subr.mxu0 0.0
  %3727 = vmatpush1.msra.mxu0 %v3697
  %3728 = vmatprep.subr.mxu0 0.0
  %3729 = vmatpush1.msra.mxu0 %v3698
  %3730 = vmatprep.subr.mxu0 0.0
  %3731 = vmatpush1.msra.mxu0 %v3699
  %3732 = vmatprep.subr.mxu0 0.0
  %3733 = vmatpush1.msra.mxu0 0.0
  %3734 = vmatprep.subr.mxu0 0.0
  %3735 = vmatpush1.msra.mxu0 0.0
  %3736 = vmatprep.subr.mxu0 0.0
  %3737 = vmatpush1.msra.mxu0 0.0
  %3738 = vmatprep.subr.mxu0 0.0
  %3739 = vmatpush1.msra.mxu0 0.0
  %3740 = vmatprep.subr.mxu0 0.0
  %3741 = vmatpush1.msra.mxu0 0.0
  %3742 = vmatprep.subr.mxu0 0.0
  %3743 = vmatpush1.msra.mxu0 0.0
  %3744 = vmatprep.subr.mxu0 0.0
  %3745 = vmatpush1.msra.mxu0 0.0
  %3746 = vmatprep.subr.mxu0 0.0
  %3747 = vmatpush1.msra.mxu0 0.0
  %3748 = vmatprep.subr.mxu0 0.0
  %3749 = vmatpush1.msra.mxu0 0.0
  %3750 = vmatprep.subr.mxu0 0.0
  %3751 = vmatpush1.msra.mxu0 0.0
  %3752 = vmatprep.subr.mxu0 0.0
  %3753 = vmatpush1.msra.mxu0 0.0
  %3754 = vmatprep.subr.mxu0 0.0
  %3755 = vmatpush1.msra.mxu0 0.0
  %3756 = vmatprep.subr.mxu0 0.0
  %3757 = vmatpush1.msra.mxu0 0.0
  %3758 = vmatprep.subr.mxu0 0.0
  %3759 = vmatpush1.msra.mxu0 0.0
  %3760 = vmatprep.subr.mxu0 0.0
  %3761 = vmatpush1.msra.mxu0 0.0
  %3762 = vmatprep.subr.mxu0 0.0
  %3763 = vmatpush1.msra.mxu0 0.0
  %3764 = vmatprep.mubr.f32.mxu0 0.0
  %3765 = vmatmul.mubr.f32.gmra.mrb[0].mxu0 %v3664
  %v3766 = vpop.f32.mrb[0].mxu0
  %v3767 = vadd.f32 0.0, %v3766
  %v3768 = vpop.f32.mrb[0].mxu0
  %3769 = vdwg.mxu0
  %3770 = vmatprep.subr.mxu0 0.0
  %3771 = vmatpush1.msra.mxu0 %v3667
  %3772 = vmatprep.subr.mxu0 0.0
  %3773 = vmatpush1.msra.mxu0 %v3668
  %3774 = vmatprep.subr.mxu0 0.0
  %3775 = vmatpush1.msra.mxu0 %v3669
  %3776 = vmatprep.subr.mxu0 0.0
  %3777 = vmatpush1.msra.mxu0 %v3670
  %3778 = vmatprep.subr.mxu0 0.0
  %3779 = vmatpush1.msra.mxu0 %v3671
  %3780 = vmatprep.subr.mxu0 0.0
  %3781 = vmatpush1.msra.mxu0 %v3672
  %3782 = vmatprep.subr.mxu0 0.0
  %3783 = vmatpush1.msra.mxu0 %v3673
  %3784 = vmatprep.subr.mxu0 0.0
  %3785 = vmatpush1.msra.mxu0 %v3674
  %3786 = vmatprep.subr.mxu0 0.0
  %3787 = vmatpush1.msra.mxu0 %v3675
  %3788 = vmatprep.subr.mxu0 0.0
  %3789 = vmatpush1.msra.mxu0 %v3676
  %3790 = vmatprep.subr.mxu0 0.0
  %3791 = vmatpush1.msra.mxu0 %v3677
  %3792 = vmatprep.subr.mxu0 0.0
  %3793 = vmatpush1.msra.mxu0 %v3678
  %3794 = vmatprep.subr.mxu0 0.0
  %3795 = vmatpush1.msra.mxu0 %v3679
  %3796 = vmatprep.subr.mxu0 0.0
  %3797 = vmatpush1.msra.mxu0 %v3680
  %3798 = vmatprep.subr.mxu0 0.0
  %3799 = vmatpush1.msra.mxu0 %v3681
  %3800 = vmatprep.subr.mxu0 0.0
  %3801 = vmatpush1.msra.mxu0 %v3682
  %3802 = vmatprep.subr.mxu0 0.0
  %3803 = vmatpush1.msra.mxu0 0.0
  %3804 = vmatprep.subr.mxu0 0.0
  %3805 = vmatpush1.msra.mxu0 0.0
  %3806 = vmatprep.subr.mxu0 0.0
  %3807 = vmatpush1.msra.mxu0 0.0
  %3808 = vmatprep.subr.mxu0 0.0
  %3809 = vmatpush1.msra.mxu0 0.0
  %3810 = vmatprep.subr.mxu0 0.0
  %3811 = vmatpush1.msra.mxu0 0.0
  %3812 = vmatprep.subr.mxu0 0.0
  %3813 = vmatpush1.msra.mxu0 0.0
  %3814 = vmatprep.subr.mxu0 0.0
  %3815 = vmatpush1.msra.mxu0 0.0
  %3816 = vmatprep.subr.mxu0 0.0
  %3817 = vmatpush1.msra.mxu0 0.0
  %3818 = vmatprep.subr.mxu0 0.0
  %3819 = vmatpush1.msra.mxu0 0.0
  %3820 = vmatprep.subr.mxu0 0.0
  %3821 = vmatpush1.msra.mxu0 0.0
  %3822 = vmatprep.subr.mxu0 0.0
  %3823 = vmatpush1.msra.mxu0 0.0
  %3824 = vmatprep.subr.mxu0 0.0
  %3825 = vmatpush1.msra.mxu0 0.0
  %3826 = vmatprep.subr.mxu0 0.0
  %3827 = vmatpush1.msra.mxu0 0.0
  %3828 = vmatprep.subr.mxu0 0.0
  %3829 = vmatpush1.msra.mxu0 0.0
  %3830 = vmatprep.subr.mxu0 0.0
  %3831 = vmatpush1.msra.mxu0 0.0
  %3832 = vmatprep.subr.mxu0 0.0
  %3833 = vmatpush1.msra.mxu0 0.0
  %3834 = vmatprep.mubr.f32.mxu0 0.0
  %3835 = vmatmul.mubr.f32.gmra.mrb[0].mxu0 %v3663
  %v3836 = vpop.f32.mrb[0].mxu0
  %v3837 = vadd.f32 %v3767, %v3836
  %v3838 = vpop.f32.mrb[0].mxu0
  %3839 = vdwg.mxu0
  %s3840 = scalar_lea.vmem %s5, 256
  %v3841 = vld [vmem:[%s3840] sm:$0xff]
  %v3842 = vld [vmem:[%s3840 + $0x8] sm:$0xff]
  %v3843 = vld [vmem:[%s3840 + $0x10] sm:$0xff]
  %v3844 = vld [vmem:[%s3840 + $0x18] sm:$0xff]
  %v3845 = vld [vmem:[%s3840 + $0x20] sm:$0xff]
  %v3846 = vld [vmem:[%s3840 + $0x28] sm:$0xff]
  %v3847 = vld [vmem:[%s3840 + $0x30] sm:$0xff]
  %v3848 = vld [vmem:[%s3840 + $0x38] sm:$0xff]
  %v3849 = vld [vmem:[%s3840 + $0x40] sm:$0xff]
  %v3850 = vld [vmem:[%s3840 + $0x48] sm:$0xff]
  %v3851 = vld [vmem:[%s3840 + $0x50] sm:$0xff]
  %v3852 = vld [vmem:[%s3840 + $0x58] sm:$0xff]
  %v3853 = vld [vmem:[%s3840 + $0x60] sm:$0xff]
  %v3854 = vld [vmem:[%s3840 + $0x68] sm:$0xff]
  %v3855 = vld [vmem:[%s3840 + $0x70] sm:$0xff]
  %v3856 = vld [vmem:[%s3840 + $0x78] sm:$0xff]
  %3857 = vmatprep.subr.mxu0 0.0
  %3858 = vmatpush1.msra.mxu0 %v3841
  %3859 = vmatprep.subr.mxu0 0.0
  %3860 = vmatpush1.msra.mxu0 %v3842
  %3861 = vmatprep.subr.mxu0 0.0
  %3862 = vmatpush1.msra.mxu0 %v3843
  %3863 = vmatprep.subr.mxu0 0.0
  %3864 = vmatpush1.msra.mxu0 %v3844
  %3865 = vmatprep.subr.mxu0 0.0
  %3866 = vmatpush1.msra.mxu0 %v3845
  %3867 = vmatprep.subr.mxu0 0.0
  %3868 = vmatpush1.msra.mxu0 %v3846
  %3869 = vmatprep.subr.mxu0 0.0
  %3870 = vmatpush1.msra.mxu0 %v3847
  %3871 = vmatprep.subr.mxu0 0.0
  %3872 = vmatpush1.msra.mxu0 %v3848
  %3873 = vmatprep.subr.mxu0 0.0
  %3874 = vmatpush1.msra.mxu0 %v3849
  %3875 = vmatprep.subr.mxu0 0.0
  %3876 = vmatpush1.msra.mxu0 %v3850
  %3877 = vmatprep.subr.mxu0 0.0
  %3878 = vmatpush1.msra.mxu0 %v3851
  %3879 = vmatprep.subr.mxu0 0.0
  %3880 = vmatpush1.msra.mxu0 %v3852
  %3881 = vmatprep.subr.mxu0 0.0
  %3882 = vmatpush1.msra.mxu0 %v3853
  %3883 = vmatprep.subr.mxu0 0.0
  %3884 = vmatpush1.msra.mxu0 %v3854
  %3885 = vmatprep.subr.mxu0 0.0
  %3886 = vmatpush1.msra.mxu0 %v3855
  %3887 = vmatprep.subr.mxu0 0.0
  %3888 = vmatpush1.msra.mxu0 %v3856
  %3889 = vmatprep.subr.mxu0 0.0
  %3890 = vmatpush1.msra.mxu0 0.0
  %3891 = vmatprep.subr.mxu0 0.0
  %3892 = vmatpush1.msra.mxu0 0.0
  %3893 = vmatprep.subr.mxu0 0.0
  %3894 = vmatpush1.msra.mxu0 0.0
  %3895 = vmatprep.subr.mxu0 0.0
  %3896 = vmatpush1.msra.mxu0 0.0
  %3897 = vmatprep.subr.mxu0 0.0
  %3898 = vmatpush1.msra.mxu0 0.0
  %3899 = vmatprep.subr.mxu0 0.0
  %3900 = vmatpush1.msra.mxu0 0.0
  %3901 = vmatprep.subr.mxu0 0.0
  %3902 = vmatpush1.msra.mxu0 0.0
  %3903 = vmatprep.subr.mxu0 0.0
  %3904 = vmatpush1.msra.mxu0 0.0
  %3905 = vmatprep.subr.mxu0 0.0
  %3906 = vmatpush1.msra.mxu0 0.0
  %3907 = vmatprep.subr.mxu0 0.0
  %3908 = vmatpush1.msra.mxu0 0.0
  %3909 = vmatprep.subr.mxu0 0.0
  %3910 = vmatpush1.msra.mxu0 0.0
  %3911 = vmatprep.subr.mxu0 0.0
  %3912 = vmatpush1.msra.mxu0 0.0
  %3913 = vmatprep.subr.mxu0 0.0
  %3914 = vmatpush1.msra.mxu0 0.0
  %3915 = vmatprep.subr.mxu0 0.0
  %3916 = vmatpush1.msra.mxu0 0.0
  %3917 = vmatprep.subr.mxu0 0.0
  %3918 = vmatpush1.msra.mxu0 0.0
  %3919 = vmatprep.subr.mxu0 0.0
  %3920 = vmatpush1.msra.mxu0 0.0
  %3921 = vmatprep.mubr.f32.mxu0 0.0
  %3922 = vmatmul.mubr.f32.gmra.mrb[0].mxu0 %v3665
  %v3923 = vpop.f32.mrb[0].mxu0
  %v3924 = vadd.f32 0.0, %v3923
  %v3925 = vpop.f32.mrb[0].mxu0
  %3926 = vdwg.mxu0
  %v3927 = vadd.f32 %v3837, %v3924
  %s3928 = scalar_lea.vmem %s5, 384
  %v3929 = vld [vmem:[%s3928] sm:$0xff]
  %v3930 = vld [vmem:[%s3928 + $0x8] sm:$0xff]
  %v3931 = vld [vmem:[%s3928 + $0x10] sm:$0xff]
  %v3932 = vld [vmem:[%s3928 + $0x18] sm:$0xff]
  %v3933 = vld [vmem:[%s3928 + $0x20] sm:$0xff]
  %v3934 = vld [vmem:[%s3928 + $0x28] sm:$0xff]
  %v3935 = vld [vmem:[%s3928 + $0x30] sm:$0xff]
  %v3936 = vld [vmem:[%s3928 + $0x38] sm:$0xff]
  %v3937 = vld [vmem:[%s3928 + $0x40] sm:$0xff]
  %v3938 = vld [vmem:[%s3928 + $0x48] sm:$0xff]
  %v3939 = vld [vmem:[%s3928 + $0x50] sm:$0xff]
  %v3940 = vld [vmem:[%s3928 + $0x58] sm:$0xff]
  %v3941 = vld [vmem:[%s3928 + $0x60] sm:$0xff]
  %v3942 = vld [vmem:[%s3928 + $0x68] sm:$0xff]
  %v3943 = vld [vmem:[%s3928 + $0x70] sm:$0xff]
  %v3944 = vld [vmem:[%s3928 + $0x78] sm:$0xff]
  %3945 = vmatprep.subr.mxu0 0.0
  %3946 = vmatpush1.msra.mxu0 %v3929
  %3947 = vmatprep.subr.mxu0 0.0
  %3948 = vmatpush1.msra.mxu0 %v3930
  %3949 = vmatprep.subr.mxu0 0.0
  %3950 = vmatpush1.msra.mxu0 %v3931
  %3951 = vmatprep.subr.mxu0 0.0
  %3952 = vmatpush1.msra.mxu0 %v3932
  %3953 = vmatprep.subr.mxu0 0.0
  %3954 = vmatpush1.msra.mxu0 %v3933
  %3955 = vmatprep.subr.mxu0 0.0
  %3956 = vmatpush1.msra.mxu0 %v3934
  %3957 = vmatprep.subr.mxu0 0.0
  %3958 = vmatpush1.msra.mxu0 %v3935
  %3959 = vmatprep.subr.mxu0 0.0
  %3960 = vmatpush1.msra.mxu0 %v3936
  %3961 = vmatprep.subr.mxu0 0.0
  %3962 = vmatpush1.msra.mxu0 %v3937
  %3963 = vmatprep.subr.mxu0 0.0
  %3964 = vmatpush1.msra.mxu0 %v3938
  %3965 = vmatprep.subr.mxu0 0.0
  %3966 = vmatpush1.msra.mxu0 %v3939
  %3967 = vmatprep.subr.mxu0 0.0
  %3968 = vmatpush1.msra.mxu0 %v3940
  %3969 = vmatprep.subr.mxu0 0.0
  %3970 = vmatpush1.msra.mxu0 %v3941
  %3971 = vmatprep.subr.mxu0 0.0
  %3972 = vmatpush1.msra.mxu0 %v3942
  %3973 = vmatprep.subr.mxu0 0.0
  %3974 = vmatpush1.msra.mxu0 %v3943
  %3975 = vmatprep.subr.mxu0 0.0
  %3976 = vmatpush1.msra.mxu0 %v3944
  %3977 = vmatprep.subr.mxu0 0.0
  %3978 = vmatpush1.msra.mxu0 0.0
  %3979 = vmatprep.subr.mxu0 0.0
  %3980 = vmatpush1.msra.mxu0 0.0
  %3981 = vmatprep.subr.mxu0 0.0
  %3982 = vmatpush1.msra.mxu0 0.0
  %3983 = vmatprep.subr.mxu0 0.0
  %3984 = vmatpush1.msra.mxu0 0.0
  %3985 = vmatprep.subr.mxu0 0.0
  %3986 = vmatpush1.msra.mxu0 0.0
  %3987 = vmatprep.subr.mxu0 0.0
  %3988 = vmatpush1.msra.mxu0 0.0
  %3989 = vmatprep.subr.mxu0 0.0
  %3990 = vmatpush1.msra.mxu0 0.0
  %3991 = vmatprep.subr.mxu0 0.0
  %3992 = vmatpush1.msra.mxu0 0.0
  %3993 = vmatprep.subr.mxu0 0.0
  %3994 = vmatpush1.msra.mxu0 0.0
  %3995 = vmatprep.subr.mxu0 0.0
  %3996 = vmatpush1.msra.mxu0 0.0
  %3997 = vmatprep.subr.mxu0 0.0
  %3998 = vmatpush1.msra.mxu0 0.0
  %3999 = vmatprep.subr.mxu0 0.0
  %4000 = vmatpush1.msra.mxu0 0.0
  %4001 = vmatprep.subr.mxu0 0.0
  %4002 = vmatpush1.msra.mxu0 0.0
  %4003 = vmatprep.subr.mxu0 0.0
  %4004 = vmatpush1.msra.mxu0 0.0
  %4005 = vmatprep.subr.mxu0 0.0
  %4006 = vmatpush1.msra.mxu0 0.0
  %4007 = vmatprep.subr.mxu0 0.0
  %4008 = vmatpush1.msra.mxu0 0.0
  %4009 = vmatprep.mubr.f32.mxu0 0.0
  %4010 = vmatmul.mubr.f32.gmra.mrb[0].mxu0 %v3666
  %v4011 = vpop.f32.mrb[0].mxu0
  %v4012 = vadd.f32 0.0, %v4011
  %v4013 = vpop.f32.mrb[0].mxu0
  %4014 = vdwg.mxu0
  %v4015 = vadd.f32 %v3927, %v4012
  %v4016 = vld [vmem:[%s6] sm:$0x1]
  %v4018 = vlaneseq
  %v4019 = vshrl.u32 %v4018, 7
  %v4020 = vsub.s32 0, %v4019
  %v4021 = vrot.slane %v4016, %v4020
  %v4023 = vadd.f32 %v4015, %v4021
  %v4024 = vmax.f32 %v4023, 0.0
  %v4025 = vld [vmem:[%s7] sm:$0xff]
  %v4026 = vld [vmem:[%s7 + $0x8] sm:$0xff]
  %v4027 = vld [vmem:[%s7 + $0x10] sm:$0xff]
  %v4028 = vld [vmem:[%s7 + $0x18] sm:$0xff]
  %v4029 = vld [vmem:[%s7 + $0x20] sm:$0xff]
  %v4030 = vld [vmem:[%s7 + $0x28] sm:$0xff]
  %v4031 = vld [vmem:[%s7 + $0x30] sm:$0xff]
  %v4032 = vld [vmem:[%s7 + $0x38] sm:$0xff]
  %v4033 = vld [vmem:[%s7 + $0x40] sm:$0xff]
  %v4034 = vld [vmem:[%s7 + $0x48] sm:$0xff]
  %v4035 = vld [vmem:[%s7 + $0x50] sm:$0xff]
  %v4036 = vld [vmem:[%s7 + $0x58] sm:$0xff]
  %v4037 = vld [vmem:[%s7 + $0x60] sm:$0xff]
  %v4038 = vld [vmem:[%s7 + $0x68] sm:$0xff]
  %v4039 = vld [vmem:[%s7 + $0x70] sm:$0xff]
  %v4040 = vld [vmem:[%s7 + $0x78] sm:$0xff]
  %v4041 = vld [vmem:[%s8] sm:$0x1]
  %v4043 = vlaneseq
  %v4044 = vshrl.u32 %v4043, 7
  %v4045 = vsub.s32 0, %v4044
  %v4046 = vrot.slane %v4041, %v4045
  %4048 = vmatprep.subr.mxu0 0.0
  %4049 = vmatpush1.msra.mxu0 %v4025
  %4050 = vmatprep.subr.mxu0 0.0
  %4051 = vmatpush1.msra.mxu0 %v4026
  %4052 = vmatprep.subr.mxu0 0.0
  %4053 = vmatpush1.msra.mxu0 %v4027
  %4054 = vmatprep.subr.mxu0 0.0
  %4055 = vmatpush1.msra.mxu0 %v4028
  %4056 = vmatprep.subr.mxu0 0.0
  %4057 = vmatpush1.msra.mxu0 %v4029
  %4058 = vmatprep.subr.mxu0 0.0
  %4059 = vmatpush1.msra.mxu0 %v4030
  %4060 = vmatprep.subr.mxu0 0.0
  %4061 = vmatpush1.msra.mxu0 %v4031
  %4062 = vmatprep.subr.mxu0 0.0
  %4063 = vmatpush1.msra.mxu0 %v4032
  %4064 = vmatprep.subr.mxu0 0.0
  %4065 = vmatpush1.msra.mxu0 %v4033
  %4066 = vmatprep.subr.mxu0 0.0
  %4067 = vmatpush1.msra.mxu0 %v4034
  %4068 = vmatprep.subr.mxu0 0.0
  %4069 = vmatpush1.msra.mxu0 %v4035
  %4070 = vmatprep.subr.mxu0 0.0
  %4071 = vmatpush1.msra.mxu0 %v4036
  %4072 = vmatprep.subr.mxu0 0.0
  %4073 = vmatpush1.msra.mxu0 %v4037
  %4074 = vmatprep.subr.mxu0 0.0
  %4075 = vmatpush1.msra.mxu0 %v4038
  %4076 = vmatprep.subr.mxu0 0.0
  %4077 = vmatpush1.msra.mxu0 %v4039
  %4078 = vmatprep.subr.mxu0 0.0
  %4079 = vmatpush1.msra.mxu0 %v4040
  %4080 = vmatprep.subr.mxu0 0.0
  %4081 = vmatpush1.msra.mxu0 0.0
  %4082 = vmatprep.subr.mxu0 0.0
  %4083 = vmatpush1.msra.mxu0 0.0
  %4084 = vmatprep.subr.mxu0 0.0
  %4085 = vmatpush1.msra.mxu0 0.0
  %4086 = vmatprep.subr.mxu0 0.0
  %4087 = vmatpush1.msra.mxu0 0.0
  %4088 = vmatprep.subr.mxu0 0.0
  %4089 = vmatpush1.msra.mxu0 0.0
  %4090 = vmatprep.subr.mxu0 0.0
  %4091 = vmatpush1.msra.mxu0 0.0
  %4092 = vmatprep.subr.mxu0 0.0
  %4093 = vmatpush1.msra.mxu0 0.0
  %4094 = vmatprep.subr.mxu0 0.0
  %4095 = vmatpush1.msra.mxu0 0.0
  %4096 = vmatprep.subr.mxu0 0.0
  %4097 = vmatpush1.msra.mxu0 0.0
  %4098 = vmatprep.subr.mxu0 0.0
  %4099 = vmatpush1.msra.mxu0 0.0
  %4100 = vmatprep.subr.mxu0 0.0
  %4101 = vmatpush1.msra.mxu0 0.0
  %4102 = vmatprep.subr.mxu0 0.0
  %4103 = vmatpush1.msra.mxu0 0.0
  %4104 = vmatprep.subr.mxu0 0.0
  %4105 = vmatpush1.msra.mxu0 0.0
  %4106 = vmatprep.subr.mxu0 0.0
  %4107 = vmatpush1.msra.mxu0 0.0
  %4108 = vmatprep.subr.mxu0 0.0
  %4109 = vmatpush1.msra.mxu0 0.0
  %4110 = vmatprep.subr.mxu0 0.0
  %4111 = vmatpush1.msra.mxu0 0.0
  %4112 = vmatprep.mubr.f32.mxu0 0.0
  %4113 = vmatmul.mubr.f32.gmra.mrb[0].mxu0 %v4024
  %v4114 = vpop.f32.mrb[0].mxu0
  %v4115 = vadd.f32 %v4046, %v4114
  %v4116 = vpop.f32.mrb[0].mxu0
  %4117 = vdwg.mxu0
  %s4118 = smul.u32 0, 8
  %s4119 = scalar_lea.vmem %s9, %s4118
  %4120 = vst [vmem:[%s4119] sm:$0xff] %v4115
  %p4121 = scmp.eq.s32.totalorder 0, 0
  // Predicated region
  $region38: #{forward.1} parent=0 // pred_check
    %p4122 = pneg %p4121
  $region39: #{forward.1} parent=0 // pred_check_branch
    %4124 = sbr.rel (%p4122) target = $region41
  $region40: #{forward.1} parent=0 // pred_region
    %v4125 = vld [vmem:[%s9] sm:$0xff]
    %v4126 = vlaneseq
    %v4127 = vshrl.u32 %v4126, 7
    %vm4128 = vcmp.lt.s32.totalorder %v4127, 2
    %v4129 = vsel %vm4128, %v4125, -inf
    %v4130 = vrot.slane %v4129, 4
    %v4131 = vmax.f32 %v4129, %v4130
    %v4132 = vrot.slane %v4131, 2
    %v4133 = vmax.f32 %v4131, %v4132
    %v4134 = vrot.slane %v4133, 1
    %v4135 = vmax.f32 %v4133, %v4134
    %v4136 = vsub.f32 %v4125, %v4135
    %v4137 = vmul.f32 %v4136, 1.442695
    %v4138 = vpow.pop %v4137
    %v4139 = vsel %vm4128, %v4138, 0.0
    %v4140 = vrot.slane %v4139, 4
    %v4141 = vadd.f32 %v4139, %v4140
    %v4142 = vrot.slane %v4141, 2
    %v4143 = vadd.f32 %v4141, %v4142
    %v4144 = vrot.slane %v4143, 1
    %v4145 = vadd.f32 %v4143, %v4144
    %v4146 = vlog2.pop %v4145
    %v4147 = vmul.f32 %v4146, 0.6931472
    %v4148 = vadd.f32 %v4135, %v4147
    %v4149 = vsub.f32 %v4125, %v4148
    %4150 = vst [vmem:[%s9] sm:$0xff] %v4149
  $region41: #{forward.1} parent=0 // pred_fallthru
    _
  // Predicated region
  $region42: #{forward.1} parent=0 // pred_check
    _
  $region43: #{forward.1} parent=0 // pred_check_branch
    %4152 = sbr.rel (0) target = $region45
  $region44: #{forward.1} parent=0 // pred_region
    _
  $region45: #{forward.1} parent=0 // pred_fallthru
    _
  // Predicated region
  $region46: #{forward.1} parent=0 // pred_check
    _
  $region47: #{forward.1} parent=0 // pred_check_branch
    %4154 = sbr.rel (0) target = $region49
  $region48: #{forward.1} parent=0 // pred_region
    _
  $region49: #{forward.1} parent=0 // pred_fallthru
    _

</llo_original>
